<compile_context>
chip_gen: v7x
topology: tpu7x:2x2x1
jax: 0.10.0
libtpu: 0.0.40
codegen_flags: <defaults>
</compile_context>

<pallas_src>
import functools

import jax
import jax.numpy as jnp
from jax.experimental import pallas as pl
from jax.experimental.pallas import tpu as pltpu


def _round_up(n, m):
    return ((n + m - 1) // m) * m


# ----------------------------------------------------------------------------
# Fused kernel: statically unrolled chain of (bf16 matmul -> f32 bias+sigmoid)
# for `num_layers` encoder layers followed by `num_layers` decoder layers.
# ----------------------------------------------------------------------------
def _make_fused_kernel(num_layers):
    def kernel(*args):
        x_ref = args[0]
        p = args[1:1 + 4 * num_layers]          # (wt, b) pairs, enc then dec, in order
        enc_ref, dec_ref = args[1 + 4 * num_layers:]

        def layer(h, wt_ref, b_ref):
            # MXU: bf16 x bf16 -> f32 accumulate; epilogue in f32 on VPU/EUP.
            y = jnp.dot(h.astype(jnp.bfloat16), wt_ref[...],
                        preferred_element_type=jnp.float32)
            return jax.nn.sigmoid(y + b_ref[...])

        h = x_ref[...]                          # bf16 activation tile
        k = 0
        for _ in range(num_layers):             # encoder
            h = layer(h, p[k], p[k + 1])
            k += 2
        enc_ref[...] = h.astype(enc_ref.dtype)
        for _ in range(num_layers):             # decoder
            h = layer(h, p[k], p[k + 1])
            k += 2
        dec_ref[...] = h.astype(dec_ref.dtype)

    return kernel


# ----------------------------------------------------------------------------
# Parameter construction (PyTorch Linear semantics) and one-time packing into
# the kernel layout: pre-transposed, 128-padded, bf16 weights + f32 biases.
# ----------------------------------------------------------------------------
def init_aes_params(sizes, key):
    """Raw params in PyTorch layout.  For AE i:
         enc_w: (sizes[i+1], sizes[i]),  enc_b: (sizes[i+1],)
         dec_w: (sizes[i],   sizes[i+1]), dec_b: (sizes[i],)
       Init mimics torch Linear default: U(-1/sqrt(fan_in), 1/sqrt(fan_in)).
    """
    params = []
    for i in range(len(sizes) - 1):
        n_in, n_out = sizes[i], sizes[i + 1]
        key, k1, k2, k3, k4 = jax.random.split(key, 5)
        lim_e = 1.0 / jnp.sqrt(n_in)
        lim_d = 1.0 / jnp.sqrt(n_out)
        params.append(dict(
            enc_w=jax.random.uniform(k1, (n_out, n_in), jnp.float32, -lim_e, lim_e),
            enc_b=jax.random.uniform(k2, (n_out,), jnp.float32, -lim_e, lim_e),
            dec_w=jax.random.uniform(k3, (n_in, n_out), jnp.float32, -lim_d, lim_d),
            dec_b=jax.random.uniform(k4, (n_in,), jnp.float32, -lim_d, lim_d),
        ))
    return params


def pack_aes_params(raw_params, sizes):
    """One-time packing: W^T, zero-padded to (128-multiple, 128-multiple), bf16.

    INVARIANT (relied on by the kernel): all padded weight rows/cols and padded
    bias lanes are exactly zero.  Padded activation columns become sigmoid(0)=0.5
    after every layer and are neutralized only because the NEXT layer's padded
    weight rows are zero; final outputs are sliced to the true sizes.
    """
    L = len(raw_params)
    sizes_pad = [_round_up(s, 128) for s in sizes]
    enc, dec = [], []
    for i in range(L):
        din, dout = sizes[i], sizes[i + 1]
        dinp, doutp = sizes_pad[i], sizes_pad[i + 1]
        p = raw_params[i]
        # encoder: y = x @ enc_w.T + enc_b
        wt_e = jnp.zeros((dinp, doutp), jnp.bfloat16).at[:din, :dout].set(
            p["enc_w"].T.astype(jnp.bfloat16))
        b_e = jnp.zeros((1, doutp), jnp.float32).at[0, :dout].set(p["enc_b"])
        # decoder: y = h @ dec_w.T + dec_b
        wt_d = jnp.zeros((doutp, dinp), jnp.bfloat16).at[:dout, :din].set(
            p["dec_w"].T.astype(jnp.bfloat16))
        b_d = jnp.zeros((1, dinp), jnp.float32).at[0, :din].set(p["dec_b"])
        # Assert the zero-padding invariant (cheap, host-side, once).
        assert not bool(jnp.any(wt_e[din:, :])) and not bool(jnp.any(wt_e[:, dout:]))
        assert not bool(jnp.any(wt_d[dout:, :])) and not bool(jnp.any(wt_d[:, din:]))
        assert not bool(jnp.any(b_e[0, dout:])) and not bool(jnp.any(b_d[0, din:]))
        enc.append((wt_e, b_e))
        dec.append((wt_d, b_d))
    return {"enc": enc, "dec": dec}


# ----------------------------------------------------------------------------
# Forward pass: single fused pallas_call.  `depth` follows the PyTorch module:
# depth=None uses all AEs; depth=d uses AEs 0..d (inclusive) for enc and dec.
# ----------------------------------------------------------------------------
def aes_forward(packed, x, *, sizes, depth=None):
    L_total = len(packed["enc"])
    L = L_total if depth is None else depth + 1
    assert 1 <= L <= L_total
    sizes_pad = [_round_up(s, 128) for s in sizes]
    dims = sizes_pad[:L + 1]

    B, Din = x.shape
    assert Din == sizes[0]

    # --- batch tiling -------------------------------------------------------
    # Small batch: single tile rounded to 16 sublanes (bf16 packing).
    # Larger batches: 256/512-row tiles (fills the 256-wide v6e/v7x MXU,
    # amortizes per-grid-step overhead) while keeping >= 2 tiles whenever
    # B > 256 so the "parallel" grid axis can shard across v7x's 2 TensorCores.
    if B <= 256:
        TB = _round_up(B, 16)
    elif B <= 1024:
        TB = 256
    else:
        TB = 512
    B_pad = _round_up(B, TB)
    n_tiles = B_pad // TB

    # Pad batch + feature dims in bf16 (halves x DMA and pad-copy HBM traffic;
    # the kernel consumed the activation as bf16 anyway).
    x_pad = jnp.zeros((B_pad, dims[0]), jnp.bfloat16).at[:B, :Din].set(
        x.astype(jnp.bfloat16))

    # Constant-index (grid-invariant) blocks: single-buffered to save VMEM.
    const_mode = pl.Buffered(buffer_count=1)

    # Flatten params in application order (enc 0..L-1, then dec L-1..0).
    flat = [x_pad]
    in_specs = [pl.BlockSpec((TB, dims[0]), lambda i: (i, 0))]
    for i in range(L):
        wt, b = packed["enc"][i]
        flat += [wt, b]
        in_specs += [pl.BlockSpec(wt.shape, lambda i: (0, 0), pipeline_mode=const_mode),
                     pl.BlockSpec(b.shape, lambda i: (0, 0), pipeline_mode=const_mode)]
    for i in reversed(range(L)):
        wt, b = packed["dec"][i]
        flat += [wt, b]
        in_specs += [pl.BlockSpec(wt.shape, lambda i: (0, 0), pipeline_mode=const_mode),
                     pl.BlockSpec(b.shape, lambda i: (0, 0), pipeline_mode=const_mode)]

    enc_dim_pad, dec_dim_pad = dims[L], dims[0]
    out_shape = (jax.ShapeDtypeStruct((B_pad, enc_dim_pad), jnp.float32),
                 jax.ShapeDtypeStruct((B_pad, dec_dim_pad), jnp.float32))
    out_specs = (pl.BlockSpec((TB, enc_dim_pad), lambda i: (i, 0)),
                 pl.BlockSpec((TB, dec_dim_pad), lambda i: (i, 0)))

    # Advisory cost estimate for the XLA scheduler.
    per_row_flops = sum(2 * dims[i] * dims[i + 1] for i in range(L)) * 2
    per_row_trans = sum(dims[i + 1] + dims[i] for i in range(L))
    w_bytes = sum(dims[i] * dims[i + 1] for i in range(L)) * 2 * 2   # bf16, enc+dec
    b_bytes = sum(dims[i + 1] + dims[i] for i in range(L)) * 4
    io_bytes = B_pad * (dims[0] * 2 + dims[L] * 4 + dims[0] * 4)     # bf16 x, f32 outs
    cost = pl.CostEstimate(flops=per_row_flops * B_pad,
                           transcendentals=per_row_trans * B_pad,
                           bytes_accessed=w_bytes + b_bytes + io_bytes)

    enc_pad, dec_pad = pl.pallas_call(
        _make_fused_kernel(L),
        out_shape=out_shape,
        grid_spec=pltpu.PrefetchScalarGridSpec(
            num_scalar_prefetch=0,
            grid=(n_tiles,),
            in_specs=in_specs,
            out_specs=out_specs,
        ),
        compiler_params=pltpu.CompilerParams(
            dimension_semantics=("parallel",)),
        cost_estimate=cost,
    )(*flat)

    return enc_pad[:B, :sizes[L]], dec_pad[:B, :sizes[0]]


# ----------------------------------------------------------------------------
# Pure-JAX reference replicating the kernel math (bf16 weights/activations for
# the matmul, f32 accumulation, f32 bias + sigmoid).
# ----------------------------------------------------------------------------
def _ref_forward(raw_params, x, depth=None):
    L = len(raw_params) if depth is None else depth + 1

    def layer(h, w, b):
        wq = w.astype(jnp.bfloat16).astype(jnp.float32)
        hq = h.astype(jnp.bfloat16).astype(jnp.float32)
        y = jnp.dot(hq, wq.T, precision=jax.lax.Precision.HIGHEST)
        return jax.nn.sigmoid(y + b)

    h = x.astype(jnp.float32)
    for i in range(L):
        h = layer(h, raw_params[i]["enc_w"], raw_params[i]["enc_b"])
    enc = h
    for i in reversed(range(L)):
        h = layer(h, raw_params[i]["dec_w"], raw_params[i]["dec_b"])
    return enc, h


if __name__ == "__main__":
    M = 64
    N = 28 * 28
    SIZES = [N, 28 * 15, 28 * 10, 28 * 5, M]   # [784, 420, 280, 140, 64]

    key = jax.random.PRNGKey(0)
    key, kx, kxb = jax.random.split(key, 3)

    raw_params = init_aes_params(SIZES, key)
    packed = pack_aes_params(raw_params, SIZES)

    # ---- small batch, full depth (single tile path) ----
    batch = 2
    x = jax.random.normal(kx, (batch, N), jnp.float32)
    fwd = jax.jit(functools.partial(aes_forward, sizes=SIZES, depth=None))
    enc, dec = fwd(packed, x)
    jax.block_until_ready((enc, dec))

    enc_ref, dec_ref = _ref_forward(raw_params, x, depth=None)
    assert enc.shape == (batch, M) and dec.shape == (batch, N)
    assert jnp.allclose(enc, enc_ref, atol=2e-3, rtol=2e-3)
    assert jnp.allclose(dec, dec_ref, atol=2e-3, rtol=2e-3)

    # ---- depth path (layers 0..depth inclusive, matching the PyTorch module) ----
    fwd_d = jax.jit(functools.partial(aes_forward, sizes=SIZES, depth=2))
    enc_d, dec_d = fwd_d(packed, x)
    jax.block_until_ready((enc_d, dec_d))
    enc_dr, dec_dr = _ref_forward(raw_params, x, depth=2)
    assert enc_d.shape == (batch, SIZES[3]) and dec_d.shape == (batch, N)
    assert jnp.allclose(enc_d, enc_dr, atol=2e-3, rtol=2e-3)
    assert jnp.allclose(dec_d, dec_dr, atol=2e-3, rtol=2e-3)

    # ---- multi-tile path (B=384 -> two 256-row tiles, parallel grid) ----
    xb = jax.random.normal(kxb, (384, N), jnp.float32)
    enc_b, dec_b = fwd(packed, xb)
    jax.block_until_ready((enc_b, dec_b))
    enc_br, dec_br = _ref_forward(raw_params, xb, depth=None)
    assert enc_b.shape == (384, M) and dec_b.shape == (384, N)
    assert jnp.allclose(enc_b, enc_br, atol=5e-3, rtol=5e-3)
    assert jnp.allclose(dec_b, dec_br, atol=5e-3, rtol=5e-3)

    print("KERNEL_OK")
</pallas_src>

<mosaic_0001>
module attributes {stable_mosaic.version = 11 : i64} {
  func.func @kernel(%arg0: i32, %arg1: memref<16x896xbf16, #tpu.memory_space<vmem>>, %arg2: memref<896x512xbf16, #tpu.memory_space<vmem>>, %arg3: memref<1x512xf32, #tpu.memory_space<vmem>>, %arg4: memref<512x384xbf16, #tpu.memory_space<vmem>>, %arg5: memref<1x384xf32, #tpu.memory_space<vmem>>, %arg6: memref<384x256xbf16, #tpu.memory_space<vmem>>, %arg7: memref<1x256xf32, #tpu.memory_space<vmem>>, %arg8: memref<256x128xbf16, #tpu.memory_space<vmem>>, %arg9: memref<1x128xf32, #tpu.memory_space<vmem>>, %arg10: memref<128x256xbf16, #tpu.memory_space<vmem>>, %arg11: memref<1x256xf32, #tpu.memory_space<vmem>>, %arg12: memref<256x384xbf16, #tpu.memory_space<vmem>>, %arg13: memref<1x384xf32, #tpu.memory_space<vmem>>, %arg14: memref<384x512xbf16, #tpu.memory_space<vmem>>, %arg15: memref<1x512xf32, #tpu.memory_space<vmem>>, %arg16: memref<512x896xbf16, #tpu.memory_space<vmem>>, %arg17: memref<1x896xf32, #tpu.memory_space<vmem>>, %arg18: memref<16x128xf32, #tpu.memory_space<vmem>>, %arg19: memref<16x896xf32, #tpu.memory_space<vmem>>) attributes {dimension_semantics = [#tpu.dimension_semantics<parallel>], iteration_bounds = array<i64: 1>, scalar_prefetch = 0 : i64, scratch_operands = 0 : i64, tpu.core_type = #tpu.core_type<tc>, window_params = [{transform_indices = @transform_0, window_bounds = array<i64: 16, 896>}, {pipeline_mode = #tpu.pipeline_mode<synchronous>, transform_indices = @transform_1, window_bounds = array<i64: 896, 512>}, {pipeline_mode = #tpu.pipeline_mode<synchronous>, transform_indices = @transform_2, window_bounds = array<i64: 1, 512>}, {pipeline_mode = #tpu.pipeline_mode<synchronous>, transform_indices = @transform_3, window_bounds = array<i64: 512, 384>}, {pipeline_mode = #tpu.pipeline_mode<synchronous>, transform_indices = @transform_4, window_bounds = array<i64: 1, 384>}, {pipeline_mode = #tpu.pipeline_mode<synchronous>, transform_indices = @transform_5, window_bounds = array<i64: 384, 256>}, {pipeline_mode = #tpu.pipeline_mode<synchronous>, transform_indices = @transform_6, window_bounds = array<i64: 1, 256>}, {pipeline_mode = #tpu.pipeline_mode<synchronous>, transform_indices = @transform_7, window_bounds = array<i64: 256, 128>}, {pipeline_mode = #tpu.pipeline_mode<synchronous>, transform_indices = @transform_8, window_bounds = array<i64: 1, 128>}, {pipeline_mode = #tpu.pipeline_mode<synchronous>, transform_indices = @transform_9, window_bounds = array<i64: 128, 256>}, {pipeline_mode = #tpu.pipeline_mode<synchronous>, transform_indices = @transform_10, window_bounds = array<i64: 1, 256>}, {pipeline_mode = #tpu.pipeline_mode<synchronous>, transform_indices = @transform_11, window_bounds = array<i64: 256, 384>}, {pipeline_mode = #tpu.pipeline_mode<synchronous>, transform_indices = @transform_12, window_bounds = array<i64: 1, 384>}, {pipeline_mode = #tpu.pipeline_mode<synchronous>, transform_indices = @transform_13, window_bounds = array<i64: 384, 512>}, {pipeline_mode = #tpu.pipeline_mode<synchronous>, transform_indices = @transform_14, window_bounds = array<i64: 1, 512>}, {pipeline_mode = #tpu.pipeline_mode<synchronous>, transform_indices = @transform_15, window_bounds = array<i64: 512, 896>}, {pipeline_mode = #tpu.pipeline_mode<synchronous>, transform_indices = @transform_16, window_bounds = array<i64: 1, 896>}, {transform_indices = @transform_17, window_bounds = array<i64: 16, 128>}, {transform_indices = @transform_18, window_bounds = array<i64: 16, 896>}]} {
    %c0 = arith.constant 0 : index
    %c0_0 = arith.constant 0 : index
    %0 = vector.load %arg1[%c0, %c0_0] : memref<16x896xbf16, #tpu.memory_space<vmem>>, vector<16x896xbf16>
    %c0_1 = arith.constant 0 : index
    %c0_2 = arith.constant 0 : index
    %1 = vector.load %arg2[%c0_1, %c0_2] : memref<896x512xbf16, #tpu.memory_space<vmem>>, vector<896x512xbf16>
    %cst = arith.constant dense<0.000000e+00> : vector<16x512xf32>
    %2 = tpu.matmul %0, %1, %cst {dimension_numbers = #tpu.dot_dimension_numbers<[1], [0], [0], [1], [0, 0, 1, 1], [], []>} : vector<16x896xbf16>, vector<896x512xbf16>, vector<16x512xf32> -> vector<16x512xf32>
    %c0_3 = arith.constant 0 : index
    %c0_4 = arith.constant 0 : index
    %3 = vector.load %arg3[%c0_3, %c0_4] : memref<1x512xf32, #tpu.memory_space<vmem>>, vector<1x512xf32>
    %4 = vector.broadcast %3 : vector<1x512xf32> to vector<16x512xf32>
    %5 = arith.addf %2, %4 : vector<16x512xf32>
    %6 = arith.negf %5 : vector<16x512xf32>
    %7 = math.exp %6 : vector<16x512xf32>
    %cst_5 = arith.constant 1.000000e+00 : f32
    %8 = vector.broadcast %cst_5 : f32 to vector<16x512xf32>
    %9 = arith.addf %8, %7 : vector<16x512xf32>
    %10 = arith.divf %8, %9 : vector<16x512xf32>
    %11 = arith.truncf %10 : vector<16x512xf32> to vector<16x512xbf16>
    %c0_6 = arith.constant 0 : index
    %c0_7 = arith.constant 0 : index
    %12 = vector.load %arg4[%c0_6, %c0_7] : memref<512x384xbf16, #tpu.memory_space<vmem>>, vector<512x384xbf16>
    %cst_8 = arith.constant dense<0.000000e+00> : vector<16x384xf32>
    %13 = tpu.matmul %11, %12, %cst_8 {dimension_numbers = #tpu.dot_dimension_numbers<[1], [0], [0], [1], [0, 0, 1, 1], [], []>} : vector<16x512xbf16>, vector<512x384xbf16>, vector<16x384xf32> -> vector<16x384xf32>
    %c0_9 = arith.constant 0 : index
    %c0_10 = arith.constant 0 : index
    %14 = vector.load %arg5[%c0_9, %c0_10] : memref<1x384xf32, #tpu.memory_space<vmem>>, vector<1x384xf32>
    %15 = vector.broadcast %14 : vector<1x384xf32> to vector<16x384xf32>
    %16 = arith.addf %13, %15 : vector<16x384xf32>
    %17 = arith.negf %16 : vector<16x384xf32>
    %18 = math.exp %17 : vector<16x384xf32>
    %cst_11 = arith.constant 1.000000e+00 : f32
    %19 = vector.broadcast %cst_11 : f32 to vector<16x384xf32>
    %20 = arith.addf %19, %18 : vector<16x384xf32>
    %21 = arith.divf %19, %20 : vector<16x384xf32>
    %22 = arith.truncf %21 : vector<16x384xf32> to vector<16x384xbf16>
    %c0_12 = arith.constant 0 : index
    %c0_13 = arith.constant 0 : index
    %23 = vector.load %arg6[%c0_12, %c0_13] : memref<384x256xbf16, #tpu.memory_space<vmem>>, vector<384x256xbf16>
    %cst_14 = arith.constant dense<0.000000e+00> : vector<16x256xf32>
    %24 = tpu.matmul %22, %23, %cst_14 {dimension_numbers = #tpu.dot_dimension_numbers<[1], [0], [0], [1], [0, 0, 1, 1], [], []>} : vector<16x384xbf16>, vector<384x256xbf16>, vector<16x256xf32> -> vector<16x256xf32>
    %c0_15 = arith.constant 0 : index
    %c0_16 = arith.constant 0 : index
    %25 = vector.load %arg7[%c0_15, %c0_16] : memref<1x256xf32, #tpu.memory_space<vmem>>, vector<1x256xf32>
    %26 = vector.broadcast %25 : vector<1x256xf32> to vector<16x256xf32>
    %27 = arith.addf %24, %26 : vector<16x256xf32>
    %28 = arith.negf %27 : vector<16x256xf32>
    %29 = math.exp %28 : vector<16x256xf32>
    %cst_17 = arith.constant 1.000000e+00 : f32
    %30 = vector.broadcast %cst_17 : f32 to vector<16x256xf32>
    %31 = arith.addf %30, %29 : vector<16x256xf32>
    %32 = arith.divf %30, %31 : vector<16x256xf32>
    %33 = arith.truncf %32 : vector<16x256xf32> to vector<16x256xbf16>
    %c0_18 = arith.constant 0 : index
    %c0_19 = arith.constant 0 : index
    %34 = vector.load %arg8[%c0_18, %c0_19] : memref<256x128xbf16, #tpu.memory_space<vmem>>, vector<256x128xbf16>
    %cst_20 = arith.constant dense<0.000000e+00> : vector<16x128xf32>
    %35 = tpu.matmul %33, %34, %cst_20 {dimension_numbers = #tpu.dot_dimension_numbers<[1], [0], [0], [1], [0, 0, 1, 1], [], []>} : vector<16x256xbf16>, vector<256x128xbf16>, vector<16x128xf32> -> vector<16x128xf32>
    %c0_21 = arith.constant 0 : index
    %c0_22 = arith.constant 0 : index
    %36 = vector.load %arg9[%c0_21, %c0_22] : memref<1x128xf32, #tpu.memory_space<vmem>>, vector<1x128xf32>
    %37 = vector.broadcast %36 : vector<1x128xf32> to vector<16x128xf32>
    %38 = arith.addf %35, %37 : vector<16x128xf32>
    %39 = arith.negf %38 : vector<16x128xf32>
    %40 = math.exp %39 : vector<16x128xf32>
    %cst_23 = arith.constant 1.000000e+00 : f32
    %41 = vector.broadcast %cst_23 : f32 to vector<16x128xf32>
    %42 = arith.addf %41, %40 : vector<16x128xf32>
    %43 = arith.divf %41, %42 : vector<16x128xf32>
    %c0_24 = arith.constant 0 : index
    %c0_25 = arith.constant 0 : index
    %44 = vector.load %arg18[%c0_24, %c0_25] : memref<16x128xf32, #tpu.memory_space<vmem>>, vector<16x128xf32>
    tpu.vector_store %arg18[%c0_24, %c0_25], %43 {strides = array<i32>} : memref<16x128xf32, #tpu.memory_space<vmem>>, vector<16x128xf32>,
    %45 = arith.truncf %43 : vector<16x128xf32> to vector<16x128xbf16>
    %c0_26 = arith.constant 0 : index
    %c0_27 = arith.constant 0 : index
    %46 = vector.load %arg10[%c0_26, %c0_27] : memref<128x256xbf16, #tpu.memory_space<vmem>>, vector<128x256xbf16>
    %cst_28 = arith.constant dense<0.000000e+00> : vector<16x256xf32>
    %47 = tpu.matmul %45, %46, %cst_28 {dimension_numbers = #tpu.dot_dimension_numbers<[1], [0], [0], [1], [0, 0, 1, 1], [], []>} : vector<16x128xbf16>, vector<128x256xbf16>, vector<16x256xf32> -> vector<16x256xf32>
    %c0_29 = arith.constant 0 : index
    %c0_30 = arith.constant 0 : index
    %48 = vector.load %arg11[%c0_29, %c0_30] : memref<1x256xf32, #tpu.memory_space<vmem>>, vector<1x256xf32>
    %49 = vector.broadcast %48 : vector<1x256xf32> to vector<16x256xf32>
    %50 = arith.addf %47, %49 : vector<16x256xf32>
    %51 = arith.negf %50 : vector<16x256xf32>
    %52 = math.exp %51 : vector<16x256xf32>
    %cst_31 = arith.constant 1.000000e+00 : f32
    %53 = vector.broadcast %cst_31 : f32 to vector<16x256xf32>
    %54 = arith.addf %53, %52 : vector<16x256xf32>
    %55 = arith.divf %53, %54 : vector<16x256xf32>
    %56 = arith.truncf %55 : vector<16x256xf32> to vector<16x256xbf16>
    %c0_32 = arith.constant 0 : index
    %c0_33 = arith.constant 0 : index
    %57 = vector.load %arg12[%c0_32, %c0_33] : memref<256x384xbf16, #tpu.memory_space<vmem>>, vector<256x384xbf16>
    %cst_34 = arith.constant dense<0.000000e+00> : vector<16x384xf32>
    %58 = tpu.matmul %56, %57, %cst_34 {dimension_numbers = #tpu.dot_dimension_numbers<[1], [0], [0], [1], [0, 0, 1, 1], [], []>} : vector<16x256xbf16>, vector<256x384xbf16>, vector<16x384xf32> -> vector<16x384xf32>
    %c0_35 = arith.constant 0 : index
    %c0_36 = arith.constant 0 : index
    %59 = vector.load %arg13[%c0_35, %c0_36] : memref<1x384xf32, #tpu.memory_space<vmem>>, vector<1x384xf32>
    %60 = vector.broadcast %59 : vector<1x384xf32> to vector<16x384xf32>
    %61 = arith.addf %58, %60 : vector<16x384xf32>
    %62 = arith.negf %61 : vector<16x384xf32>
    %63 = math.exp %62 : vector<16x384xf32>
    %cst_37 = arith.constant 1.000000e+00 : f32
    %64 = vector.broadcast %cst_37 : f32 to vector<16x384xf32>
    %65 = arith.addf %64, %63 : vector<16x384xf32>
    %66 = arith.divf %64, %65 : vector<16x384xf32>
    %67 = arith.truncf %66 : vector<16x384xf32> to vector<16x384xbf16>
    %c0_38 = arith.constant 0 : index
    %c0_39 = arith.constant 0 : index
    %68 = vector.load %arg14[%c0_38, %c0_39] : memref<384x512xbf16, #tpu.memory_space<vmem>>, vector<384x512xbf16>
    %cst_40 = arith.constant dense<0.000000e+00> : vector<16x512xf32>
    %69 = tpu.matmul %67, %68, %cst_40 {dimension_numbers = #tpu.dot_dimension_numbers<[1], [0], [0], [1], [0, 0, 1, 1], [], []>} : vector<16x384xbf16>, vector<384x512xbf16>, vector<16x512xf32> -> vector<16x512xf32>
    %c0_41 = arith.constant 0 : index
    %c0_42 = arith.constant 0 : index
    %70 = vector.load %arg15[%c0_41, %c0_42] : memref<1x512xf32, #tpu.memory_space<vmem>>, vector<1x512xf32>
    %71 = vector.broadcast %70 : vector<1x512xf32> to vector<16x512xf32>
    %72 = arith.addf %69, %71 : vector<16x512xf32>
    %73 = arith.negf %72 : vector<16x512xf32>
    %74 = math.exp %73 : vector<16x512xf32>
    %cst_43 = arith.constant 1.000000e+00 : f32
    %75 = vector.broadcast %cst_43 : f32 to vector<16x512xf32>
    %76 = arith.addf %75, %74 : vector<16x512xf32>
    %77 = arith.divf %75, %76 : vector<16x512xf32>
    %78 = arith.truncf %77 : vector<16x512xf32> to vector<16x512xbf16>
    %c0_44 = arith.constant 0 : index
    %c0_45 = arith.constant 0 : index
    %79 = vector.load %arg16[%c0_44, %c0_45] : memref<512x896xbf16, #tpu.memory_space<vmem>>, vector<512x896xbf16>
    %cst_46 = arith.constant dense<0.000000e+00> : vector<16x896xf32>
    %80 = tpu.matmul %78, %79, %cst_46 {dimension_numbers = #tpu.dot_dimension_numbers<[1], [0], [0], [1], [0, 0, 1, 1], [], []>} : vector<16x512xbf16>, vector<512x896xbf16>, vector<16x896xf32> -> vector<16x896xf32>
    %c0_47 = arith.constant 0 : index
    %c0_48 = arith.constant 0 : index
    %81 = vector.load %arg17[%c0_47, %c0_48] : memref<1x896xf32, #tpu.memory_space<vmem>>, vector<1x896xf32>
    %82 = vector.broadcast %81 : vector<1x896xf32> to vector<16x896xf32>
    %83 = arith.addf %80, %82 : vector<16x896xf32>
    %84 = arith.negf %83 : vector<16x896xf32>
    %85 = math.exp %84 : vector<16x896xf32>
    %cst_49 = arith.constant 1.000000e+00 : f32
    %86 = vector.broadcast %cst_49 : f32 to vector<16x896xf32>
    %87 = arith.addf %86, %85 : vector<16x896xf32>
    %88 = arith.divf %86, %87 : vector<16x896xf32>
    %c0_50 = arith.constant 0 : index
    %c0_51 = arith.constant 0 : index
    %89 = vector.load %arg19[%c0_50, %c0_51] : memref<16x896xf32, #tpu.memory_space<vmem>>, vector<16x896xf32>
    tpu.vector_store %arg19[%c0_50, %c0_51], %88 {strides = array<i32>} : memref<16x896xf32, #tpu.memory_space<vmem>>, vector<16x896xf32>,
    return
  }
  func.func @transform_0(%arg0: i32) -> (i32, i32) {
    %c0_i32 = arith.constant 0 : i32
    %c0_i32_0 = arith.constant 0 : i32
    return %arg0, %c0_i32 : i32, i32
  }
  func.func @transform_1(%arg0: i32) -> (i32, i32) {
    %c0_i32 = arith.constant 0 : i32
    %c0_i32_0 = arith.constant 0 : i32
    %c0_i32_1 = arith.constant 0 : i32
    return %c0_i32, %c0_i32_0 : i32, i32
  }
  func.func @transform_2(%arg0: i32) -> (i32, i32) {
    %c0_i32 = arith.constant 0 : i32
    %c0_i32_0 = arith.constant 0 : i32
    %c0_i32_1 = arith.constant 0 : i32
    return %c0_i32, %c0_i32_0 : i32, i32
  }
  func.func @transform_3(%arg0: i32) -> (i32, i32) {
    %c0_i32 = arith.constant 0 : i32
    %c0_i32_0 = arith.constant 0 : i32
    %c0_i32_1 = arith.constant 0 : i32
    return %c0_i32, %c0_i32_0 : i32, i32
  }
  func.func @transform_4(%arg0: i32) -> (i32, i32) {
    %c0_i32 = arith.constant 0 : i32
    %c0_i32_0 = arith.constant 0 : i32
    %c0_i32_1 = arith.constant 0 : i32
    return %c0_i32, %c0_i32_0 : i32, i32
  }
  func.func @transform_5(%arg0: i32) -> (i32, i32) {
    %c0_i32 = arith.constant 0 : i32
    %c0_i32_0 = arith.constant 0 : i32
    %c0_i32_1 = arith.constant 0 : i32
    return %c0_i32, %c0_i32_0 : i32, i32
  }
  func.func @transform_6(%arg0: i32) -> (i32, i32) {
    %c0_i32 = arith.constant 0 : i32
    %c0_i32_0 = arith.constant 0 : i32
    %c0_i32_1 = arith.constant 0 : i32
    return %c0_i32, %c0_i32_0 : i32, i32
  }
  func.func @transform_7(%arg0: i32) -> (i32, i32) {
    %c0_i32 = arith.constant 0 : i32
    %c0_i32_0 = arith.constant 0 : i32
    %c0_i32_1 = arith.constant 0 : i32
    return %c0_i32, %c0_i32_0 : i32, i32
  }
  func.func @transform_8(%arg0: i32) -> (i32, i32) {
    %c0_i32 = arith.constant 0 : i32
    %c0_i32_0 = arith.constant 0 : i32
    %c0_i32_1 = arith.constant 0 : i32
    return %c0_i32, %c0_i32_0 : i32, i32
  }
  func.func @transform_9(%arg0: i32) -> (i32, i32) {
    %c0_i32 = arith.constant 0 : i32
    %c0_i32_0 = arith.constant 0 : i32
    %c0_i32_1 = arith.constant 0 : i32
    return %c0_i32, %c0_i32_0 : i32, i32
  }
  func.func @transform_10(%arg0: i32) -> (i32, i32) {
    %c0_i32 = arith.constant 0 : i32
    %c0_i32_0 = arith.constant 0 : i32
    %c0_i32_1 = arith.constant 0 : i32
    return %c0_i32, %c0_i32_0 : i32, i32
  }
  func.func @transform_11(%arg0: i32) -> (i32, i32) {
    %c0_i32 = arith.constant 0 : i32
    %c0_i32_0 = arith.constant 0 : i32
    %c0_i32_1 = arith.constant 0 : i32
    return %c0_i32, %c0_i32_0 : i32, i32
  }
  func.func @transform_12(%arg0: i32) -> (i32, i32) {
    %c0_i32 = arith.constant 0 : i32
    %c0_i32_0 = arith.constant 0 : i32
    %c0_i32_1 = arith.constant 0 : i32
    return %c0_i32, %c0_i32_0 : i32, i32
  }
  func.func @transform_13(%arg0: i32) -> (i32, i32) {
    %c0_i32 = arith.constant 0 : i32
    %c0_i32_0 = arith.constant 0 : i32
    %c0_i32_1 = arith.constant 0 : i32
    return %c0_i32, %c0_i32_0 : i32, i32
  }
  func.func @transform_14(%arg0: i32) -> (i32, i32) {
    %c0_i32 = arith.constant 0 : i32
    %c0_i32_0 = arith.constant 0 : i32
    %c0_i32_1 = arith.constant 0 : i32
    return %c0_i32, %c0_i32_0 : i32, i32
  }
  func.func @transform_15(%arg0: i32) -> (i32, i32) {
    %c0_i32 = arith.constant 0 : i32
    %c0_i32_0 = arith.constant 0 : i32
    %c0_i32_1 = arith.constant 0 : i32
    return %c0_i32, %c0_i32_0 : i32, i32
  }
  func.func @transform_16(%arg0: i32) -> (i32, i32) {
    %c0_i32 = arith.constant 0 : i32
    %c0_i32_0 = arith.constant 0 : i32
    %c0_i32_1 = arith.constant 0 : i32
    return %c0_i32, %c0_i32_0 : i32, i32
  }
  func.func @transform_17(%arg0: i32) -> (i32, i32) {
    %c0_i32 = arith.constant 0 : i32
    %c0_i32_0 = arith.constant 0 : i32
    return %arg0, %c0_i32 : i32, i32
  }
  func.func @transform_18(%arg0: i32) -> (i32, i32) {
    %c0_i32 = arith.constant 0 : i32
    %c0_i32_0 = arith.constant 0 : i32
    return %arg0, %c0_i32 : i32, i32
  }
}

</mosaic_0001>

<llo_original>
// kernel: aes_forward.1
$region0: #{aes_forward.1}
  #allocation0 [shape = 'u32[]', space=smem, size = 0x4, offset = 0x4, fixed_abs, tag = 'smem constant byte address 0x4 - core index']
  #allocation1 [shape = 'u32[144,128]{1,0:T(1,128)}', space=vmem, size = 0x12000, scoped, tag = 'internal scratch']
  %s0 = inlined_call_operand.vmem [shape: bf16[16,896], index: 0, kind: input, shape index: {}]
  %s1 = inlined_call_operand.hbm [shape: bf16[896,512], index: 1, kind: input, shape index: {}]
  %s2 = inlined_call_operand.hbm [shape: f32[1,512], index: 2, kind: input, shape index: {}]
  %s3 = inlined_call_operand.hbm [shape: bf16[512,384], index: 3, kind: input, shape index: {}]
  %s4 = inlined_call_operand.vmem [shape: f32[1,384], index: 4, kind: input, shape index: {}]
  %s5 = inlined_call_operand.hbm [shape: bf16[384,256], index: 5, kind: input, shape index: {}]
  %s6 = inlined_call_operand.hbm [shape: f32[1,256], index: 6, kind: input, shape index: {}]
  %s7 = inlined_call_operand.vmem [shape: bf16[256,128], index: 7, kind: input, shape index: {}]
  %s8 = inlined_call_operand.hbm [shape: f32[1,128], index: 8, kind: input, shape index: {}]
  %s9 = inlined_call_operand.hbm [shape: bf16[128,256], index: 9, kind: input, shape index: {}]
  %s10 = inlined_call_operand.hbm [shape: f32[1,256], index: 10, kind: input, shape index: {}]
  %s11 = inlined_call_operand.hbm [shape: bf16[256,384], index: 11, kind: input, shape index: {}]
  %s12 = inlined_call_operand.hbm [shape: f32[1,384], index: 12, kind: input, shape index: {}]
  %s13 = inlined_call_operand.hbm [shape: bf16[384,512], index: 13, kind: input, shape index: {}]
  %s14 = inlined_call_operand.hbm [shape: f32[1,512], index: 14, kind: input, shape index: {}]
  %s15 = inlined_call_operand.hbm [shape: bf16[512,896], index: 15, kind: input, shape index: {}]
  %s16 = inlined_call_operand.hbm [shape: f32[1,896], index: 16, kind: input, shape index: {}]
  %s17 = inlined_call_operand.vmem [shape: f32[16,128], index: 17, kind: output, shape index: {0}]
  %s18 = inlined_call_operand.vmem [shape: f32[16,896], index: 18, kind: output, shape index: {1}]
  %19 = xla_tuple %s17, %s18
  %s20 = sld [smem:[#allocation0]]
  $region142: #{aes_forward.1} parent=0
    _
  %s22 = ssub.s32 1, %s20
  %s23 = scalar_select 0, %s22, %s20
  $region1: #{aes_forward.1} parent=0
    #allocation2 [shape = 'u8[917504]{0}', space=vmem, size = 0xe0000, scoped, tag = 'input window, operand 1, single buffered']
    #allocation3 [shape = 's32[1]{0}', space=sflag, size = 0x4, scoped, tag = 'scoped memory for aes_forward.1']
    #allocation4 [shape = 'u8[2048]{0}', space=vmem, size = 0x800, scoped, tag = 'input window, operand 2, single buffered']
    #allocation5 [shape = 's32[1]{0}', space=sflag, size = 0x4, scoped, tag = 'scoped memory for aes_forward.1']
    #allocation6 [shape = 'u8[393216]{0}', space=vmem, size = 0x60000, scoped, tag = 'input window, operand 3, single buffered']
    #allocation7 [shape = 'u8[196608]{0}', space=vmem, size = 0x30000, scoped, tag = 'input window, operand 5, single buffered']
    #allocation8 [shape = 's32[1]{0}', space=sflag, size = 0x4, scoped, tag = 'scoped memory for aes_forward.1']
    #allocation9 [shape = 'u8[1024]{0}', space=vmem, size = 0x400, scoped, tag = 'input window, operand 6, single buffered']
    #allocation10 [shape = 'u8[512]{0}', space=vmem, size = 0x400, scoped, tag = 'input window, operand 8, single buffered']
    #allocation11 [shape = 's32[1]{0}', space=sflag, size = 0x4, scoped, tag = 'scoped memory for aes_forward.1']
    #allocation12 [shape = 'u8[65536]{0}', space=vmem, size = 0x10000, scoped, tag = 'input window, operand 9, single buffered']
    #allocation13 [shape = 'u8[1024]{0}', space=vmem, size = 0x400, scoped, tag = 'input window, operand 10, single buffered']
    #allocation14 [shape = 's32[1]{0}', space=sflag, size = 0x4, scoped, tag = 'scoped memory for aes_forward.1']
    #allocation15 [shape = 'u8[196608]{0}', space=vmem, size = 0x30000, scoped, tag = 'input window, operand 11, single buffered']
    #allocation16 [shape = 'u8[1536]{0}', space=vmem, size = 0x800, scoped, tag = 'input window, operand 12, single buffered']
    #allocation17 [shape = 's32[1]{0}', space=sflag, size = 0x4, scoped, tag = 'scoped memory for aes_forward.1']
    #allocation18 [shape = 'u8[393216]{0}', space=vmem, size = 0x60000, scoped, tag = 'input window, operand 13, single buffered']
    #allocation19 [shape = 'u8[2048]{0}', space=vmem, size = 0x800, scoped, tag = 'input window, operand 14, single buffered']
    #allocation20 [shape = 's32[1]{0}', space=sflag, size = 0x4, scoped, tag = 'scoped memory for aes_forward.1']
    #allocation21 [shape = 'u8[917504]{0}', space=vmem, size = 0xe0000, scoped, tag = 'input window, operand 15, single buffered']
    #allocation22 [shape = 'u8[3584]{0}', space=vmem, size = 0x1000, scoped, tag = 'input window, operand 16, single buffered']
    #allocation23 [shape = 's32[1]{0}', space=sflag, size = 0x4, scoped, tag = 'scoped memory for aes_forward.1']
    %24 = vsyncpa [#allocation3], 0
    %25 = vsyncpa [#allocation5], 0
    %26 = vsyncpa [#allocation8], 0
    %27 = vsyncpa [#allocation11], 0
    %28 = vsyncpa [#allocation14], 0
    %29 = vsyncpa [#allocation17], 0
    %30 = vsyncpa [#allocation20], 0
    %31 = vsyncpa [#allocation23], 0
    // Predicated region
    $region2: #{aes_forward.1} parent=1 // pred_check
      _
    $region3: #{aes_forward.1} parent=1 // pred_check_branch
      %33 = sbr.rel (0) target = $region5
    $region4: #{aes_forward.1} parent=1 // pred_region
      _
    $region5: #{aes_forward.1} parent=1 // pred_fallthru
      _
    // Predicated region
    $region6: #{aes_forward.1} parent=1 // pred_check
      _
    $region7: #{aes_forward.1} parent=1 // pred_check_branch
      %35 = sbr.rel (0) target = $region9
    $region8: #{aes_forward.1} parent=1 // pred_region
      %s37 = ssub.s32 28672, 28672
      %38 = vsyncadd [#allocation3], %s37
      %s39 = sshll.u32 [#allocation2], 4
      %s40 = int_to_ptr.vmem [resolvable:$true] %s39
      %45 = dma.hbm_to_vmem [thread:$0]  %s1, 28672, %s40, [#allocation3], 256, 256, 16
    $region9: #{aes_forward.1} parent=1 // pred_fallthru
      _
    // Predicated region
    $region10: #{aes_forward.1} parent=1 // pred_check
      _
    $region11: #{aes_forward.1} parent=1 // pred_check_branch
      %47 = sbr.rel (0) target = $region13
    $region12: #{aes_forward.1} parent=1 // pred_region
      %s49 = ssub.s32 64, 64
      %50 = vsyncadd [#allocation5], %s49
      %s52 = sshll.u32 [#allocation4], 4
      %s53 = int_to_ptr.vmem [resolvable:$true] %s52
      %55 = dma.hbm_to_vmem [thread:$0]  %s2, 64, %s53, [#allocation5]
    $region13: #{aes_forward.1} parent=1 // pred_fallthru
      _
    // Predicated region
    $region14: #{aes_forward.1} parent=1 // pred_check
      _
    $region15: #{aes_forward.1} parent=1 // pred_check_branch
      %57 = sbr.rel (0) target = $region17
    $region16: #{aes_forward.1} parent=1 // pred_region
      %s59 = ssub.s32 12288, 12288
      %60 = vsyncadd [#allocation5], %s59
      %s61 = sshll.u32 [#allocation6], 4
      %s62 = int_to_ptr.vmem [resolvable:$true] %s61
      %67 = dma.hbm_to_vmem [thread:$0]  %s3, 12288, %s62, [#allocation5], 192, 192, 12
    $region17: #{aes_forward.1} parent=1 // pred_fallthru
      _
    // Predicated region
    $region18: #{aes_forward.1} parent=1 // pred_check
      _
    $region19: #{aes_forward.1} parent=1 // pred_check_branch
      %69 = sbr.rel (0) target = $region21
    $region20: #{aes_forward.1} parent=1 // pred_region
      _
    $region21: #{aes_forward.1} parent=1 // pred_fallthru
      _
    // Predicated region
    $region22: #{aes_forward.1} parent=1 // pred_check
      _
    $region23: #{aes_forward.1} parent=1 // pred_check_branch
      %71 = sbr.rel (0) target = $region25
    $region24: #{aes_forward.1} parent=1 // pred_region
      %s73 = ssub.s32 6144, 6144
      %74 = vsyncadd [#allocation8], %s73
      %s75 = sshll.u32 [#allocation7], 4
      %s76 = int_to_ptr.vmem [resolvable:$true] %s75
      %81 = dma.hbm_to_vmem [thread:$0]  %s5, 6144, %s76, [#allocation8], 128, 128, 8
    $region25: #{aes_forward.1} parent=1 // pred_fallthru
      _
    // Predicated region
    $region26: #{aes_forward.1} parent=1 // pred_check
      _
    $region27: #{aes_forward.1} parent=1 // pred_check_branch
      %83 = sbr.rel (0) target = $region29
    $region28: #{aes_forward.1} parent=1 // pred_region
      %s85 = ssub.s32 32, 32
      %86 = vsyncadd [#allocation8], %s85
      %s88 = sshll.u32 [#allocation9], 4
      %s89 = int_to_ptr.vmem [resolvable:$true] %s88
      %91 = dma.hbm_to_vmem [thread:$0]  %s6, 32, %s89, [#allocation8]
    $region29: #{aes_forward.1} parent=1 // pred_fallthru
      _
    // Predicated region
    $region30: #{aes_forward.1} parent=1 // pred_check
      _
    $region31: #{aes_forward.1} parent=1 // pred_check_branch
      %93 = sbr.rel (0) target = $region33
    $region32: #{aes_forward.1} parent=1 // pred_region
      _
    $region33: #{aes_forward.1} parent=1 // pred_fallthru
      _
    // Predicated region
    $region34: #{aes_forward.1} parent=1 // pred_check
      _
    $region35: #{aes_forward.1} parent=1 // pred_check_branch
      %95 = sbr.rel (0) target = $region37
    $region36: #{aes_forward.1} parent=1 // pred_region
      %s97 = ssub.s32 16, 16
      %98 = vsyncadd [#allocation11], %s97
      %s100 = sshll.u32 [#allocation10], 4
      %s101 = int_to_ptr.vmem [resolvable:$true] %s100
      %103 = dma.hbm_to_vmem [thread:$0]  %s8, 16, %s101, [#allocation11]
    $region37: #{aes_forward.1} parent=1 // pred_fallthru
      _
    // Predicated region
    $region38: #{aes_forward.1} parent=1 // pred_check
      _
    $region39: #{aes_forward.1} parent=1 // pred_check_branch
      %105 = sbr.rel (0) target = $region41
    $region40: #{aes_forward.1} parent=1 // pred_region
      %s107 = ssub.s32 2048, 2048
      %108 = vsyncadd [#allocation11], %s107
      %s109 = sshll.u32 [#allocation12], 4
      %s110 = int_to_ptr.vmem [resolvable:$true] %s109
      %115 = dma.hbm_to_vmem [thread:$0]  %s9, 2048, %s110, [#allocation11], 128, 128, 8
    $region41: #{aes_forward.1} parent=1 // pred_fallthru
      _
    // Predicated region
    $region42: #{aes_forward.1} parent=1 // pred_check
      _
    $region43: #{aes_forward.1} parent=1 // pred_check_branch
      %117 = sbr.rel (0) target = $region45
    $region44: #{aes_forward.1} parent=1 // pred_region
      %s119 = ssub.s32 32, 32
      %120 = vsyncadd [#allocation14], %s119
      %s122 = sshll.u32 [#allocation13], 4
      %s123 = int_to_ptr.vmem [resolvable:$true] %s122
      %125 = dma.hbm_to_vmem [thread:$0]  %s10, 32, %s123, [#allocation14]
    $region45: #{aes_forward.1} parent=1 // pred_fallthru
      _
    // Predicated region
    $region46: #{aes_forward.1} parent=1 // pred_check
      _
    $region47: #{aes_forward.1} parent=1 // pred_check_branch
      %127 = sbr.rel (0) target = $region49
    $region48: #{aes_forward.1} parent=1 // pred_region
      %s129 = ssub.s32 6144, 6144
      %130 = vsyncadd [#allocation14], %s129
      %s131 = sshll.u32 [#allocation15], 4
      %s132 = int_to_ptr.vmem [resolvable:$true] %s131
      %137 = dma.hbm_to_vmem [thread:$0]  %s11, 6144, %s132, [#allocation14], 192, 192, 12
    $region49: #{aes_forward.1} parent=1 // pred_fallthru
      _
    // Predicated region
    $region50: #{aes_forward.1} parent=1 // pred_check
      _
    $region51: #{aes_forward.1} parent=1 // pred_check_branch
      %139 = sbr.rel (0) target = $region53
    $region52: #{aes_forward.1} parent=1 // pred_region
      %s141 = ssub.s32 48, 48
      %142 = vsyncadd [#allocation17], %s141
      %s144 = sshll.u32 [#allocation16], 4
      %s145 = int_to_ptr.vmem [resolvable:$true] %s144
      %147 = dma.hbm_to_vmem [thread:$0]  %s12, 48, %s145, [#allocation17]
    $region53: #{aes_forward.1} parent=1 // pred_fallthru
      _
    // Predicated region
    $region54: #{aes_forward.1} parent=1 // pred_check
      _
    $region55: #{aes_forward.1} parent=1 // pred_check_branch
      %149 = sbr.rel (0) target = $region57
    $region56: #{aes_forward.1} parent=1 // pred_region
      %s151 = ssub.s32 12288, 12288
      %152 = vsyncadd [#allocation17], %s151
      %s153 = sshll.u32 [#allocation18], 4
      %s154 = int_to_ptr.vmem [resolvable:$true] %s153
      %159 = dma.hbm_to_vmem [thread:$0]  %s13, 12288, %s154, [#allocation17], 256, 256, 16
    $region57: #{aes_forward.1} parent=1 // pred_fallthru
      _
    // Predicated region
    $region58: #{aes_forward.1} parent=1 // pred_check
      _
    $region59: #{aes_forward.1} parent=1 // pred_check_branch
      %161 = sbr.rel (0) target = $region61
    $region60: #{aes_forward.1} parent=1 // pred_region
      %s163 = ssub.s32 64, 64
      %164 = vsyncadd [#allocation20], %s163
      %s166 = sshll.u32 [#allocation19], 4
      %s167 = int_to_ptr.vmem [resolvable:$true] %s166
      %169 = dma.hbm_to_vmem [thread:$0]  %s14, 64, %s167, [#allocation20]
    $region61: #{aes_forward.1} parent=1 // pred_fallthru
      _
    // Predicated region
    $region62: #{aes_forward.1} parent=1 // pred_check
      _
    $region63: #{aes_forward.1} parent=1 // pred_check_branch
      %171 = sbr.rel (0) target = $region65
    $region64: #{aes_forward.1} parent=1 // pred_region
      %s173 = ssub.s32 28672, 28672
      %174 = vsyncadd [#allocation20], %s173
      %s175 = sshll.u32 [#allocation21], 4
      %s176 = int_to_ptr.vmem [resolvable:$true] %s175
      %181 = dma.hbm_to_vmem [thread:$0]  %s15, 28672, %s176, [#allocation20], 448, 448, 28
    $region65: #{aes_forward.1} parent=1 // pred_fallthru
      _
    // Predicated region
    $region66: #{aes_forward.1} parent=1 // pred_check
      _
    $region67: #{aes_forward.1} parent=1 // pred_check_branch
      %183 = sbr.rel (0) target = $region69
    $region68: #{aes_forward.1} parent=1 // pred_region
      %s185 = ssub.s32 112, 112
      %186 = vsyncadd [#allocation23], %s185
      %s188 = sshll.u32 [#allocation22], 4
      %s189 = int_to_ptr.vmem [resolvable:$true] %s188
      %191 = dma.hbm_to_vmem [thread:$0]  %s16, 112, %s189, [#allocation23]
    $region69: #{aes_forward.1} parent=1 // pred_fallthru
      _
    // Predicated region
    $region70: #{aes_forward.1} parent=1 // pred_check
      _
    $region71: #{aes_forward.1} parent=1 // pred_check_branch
      %193 = sbr.rel (0) target = $region73
    $region72: #{aes_forward.1} parent=1 // pred_region
      %194 = dma.done [#allocation3], 28672
    $region73: #{aes_forward.1} parent=1 // pred_fallthru
      _
    // Predicated region
    $region74: #{aes_forward.1} parent=1 // pred_check
      _
    $region75: #{aes_forward.1} parent=1 // pred_check_branch
      %196 = sbr.rel (0) target = $region77
    $region76: #{aes_forward.1} parent=1 // pred_region
      %197 = dma.done [#allocation5], 64
    $region77: #{aes_forward.1} parent=1 // pred_fallthru
      _
    // Predicated region
    $region78: #{aes_forward.1} parent=1 // pred_check
      _
    $region79: #{aes_forward.1} parent=1 // pred_check_branch
      %199 = sbr.rel (0) target = $region81
    $region80: #{aes_forward.1} parent=1 // pred_region
      %200 = dma.done [#allocation5], 12288
    $region81: #{aes_forward.1} parent=1 // pred_fallthru
      _
    // Predicated region
    $region82: #{aes_forward.1} parent=1 // pred_check
      _
    $region83: #{aes_forward.1} parent=1 // pred_check_branch
      %202 = sbr.rel (0) target = $region85
    $region84: #{aes_forward.1} parent=1 // pred_region
      %203 = dma.done [#allocation8], 6144
    $region85: #{aes_forward.1} parent=1 // pred_fallthru
      _
    // Predicated region
    $region86: #{aes_forward.1} parent=1 // pred_check
      _
    $region87: #{aes_forward.1} parent=1 // pred_check_branch
      %205 = sbr.rel (0) target = $region89
    $region88: #{aes_forward.1} parent=1 // pred_region
      %206 = dma.done [#allocation8], 32
    $region89: #{aes_forward.1} parent=1 // pred_fallthru
      _
    // Predicated region
    $region90: #{aes_forward.1} parent=1 // pred_check
      _
    $region91: #{aes_forward.1} parent=1 // pred_check_branch
      %208 = sbr.rel (0) target = $region93
    $region92: #{aes_forward.1} parent=1 // pred_region
      %209 = dma.done [#allocation11], 16
    $region93: #{aes_forward.1} parent=1 // pred_fallthru
      _
    // Predicated region
    $region94: #{aes_forward.1} parent=1 // pred_check
      _
    $region95: #{aes_forward.1} parent=1 // pred_check_branch
      %211 = sbr.rel (0) target = $region97
    $region96: #{aes_forward.1} parent=1 // pred_region
      %212 = dma.done [#allocation11], 2048
    $region97: #{aes_forward.1} parent=1 // pred_fallthru
      _
    // Predicated region
    $region98: #{aes_forward.1} parent=1 // pred_check
      _
    $region99: #{aes_forward.1} parent=1 // pred_check_branch
      %214 = sbr.rel (0) target = $region101
    $region100: #{aes_forward.1} parent=1 // pred_region
      %215 = dma.done [#allocation14], 32
    $region101: #{aes_forward.1} parent=1 // pred_fallthru
      _
    // Predicated region
    $region102: #{aes_forward.1} parent=1 // pred_check
      _
    $region103: #{aes_forward.1} parent=1 // pred_check_branch
      %217 = sbr.rel (0) target = $region105
    $region104: #{aes_forward.1} parent=1 // pred_region
      %218 = dma.done [#allocation14], 6144
    $region105: #{aes_forward.1} parent=1 // pred_fallthru
      _
    // Predicated region
    $region106: #{aes_forward.1} parent=1 // pred_check
      _
    $region107: #{aes_forward.1} parent=1 // pred_check_branch
      %220 = sbr.rel (0) target = $region109
    $region108: #{aes_forward.1} parent=1 // pred_region
      %221 = dma.done [#allocation17], 48
    $region109: #{aes_forward.1} parent=1 // pred_fallthru
      _
    // Predicated region
    $region110: #{aes_forward.1} parent=1 // pred_check
      _
    $region111: #{aes_forward.1} parent=1 // pred_check_branch
      %223 = sbr.rel (0) target = $region113
    $region112: #{aes_forward.1} parent=1 // pred_region
      %224 = dma.done [#allocation17], 12288
    $region113: #{aes_forward.1} parent=1 // pred_fallthru
      _
    // Predicated region
    $region114: #{aes_forward.1} parent=1 // pred_check
      _
    $region115: #{aes_forward.1} parent=1 // pred_check_branch
      %226 = sbr.rel (0) target = $region117
    $region116: #{aes_forward.1} parent=1 // pred_region
      %227 = dma.done [#allocation20], 64
    $region117: #{aes_forward.1} parent=1 // pred_fallthru
      _
    // Predicated region
    $region118: #{aes_forward.1} parent=1 // pred_check
      _
    $region119: #{aes_forward.1} parent=1 // pred_check_branch
      %229 = sbr.rel (0) target = $region121
    $region120: #{aes_forward.1} parent=1 // pred_region
      %230 = dma.done [#allocation20], 28672
    $region121: #{aes_forward.1} parent=1 // pred_fallthru
      _
    // Predicated region
    $region122: #{aes_forward.1} parent=1 // pred_check
      _
    $region123: #{aes_forward.1} parent=1 // pred_check_branch
      %232 = sbr.rel (0) target = $region125
    $region124: #{aes_forward.1} parent=1 // pred_region
      %233 = dma.done [#allocation23], 112
    $region125: #{aes_forward.1} parent=1 // pred_fallthru
      _
    %v235 = vld [vmem:[%s0] sm:$0xff]
    %v236 = vld [vmem:[%s0 + $0x8] sm:$0xff]
    %v237 = vld [vmem:[%s0 + $0x10] sm:$0xff]
    %v238 = vld [vmem:[%s0 + $0x18] sm:$0xf]
    %v239 = vld [vmem:[%s0 + $0x1c] sm:$0xff]
    %v240 = vld [vmem:[%s0 + $0x24] sm:$0xff]
    %v241 = vld [vmem:[%s0 + $0x2c] sm:$0xff]
    %v242 = vld [vmem:[%s0 + $0x34] sm:$0xf]
    %v243 = vld [vmem:[#allocation2] sm:$0xff]
    %v244 = vld [vmem:[#allocation2 + $0x8] sm:$0xff]
    %v245 = vld [vmem:[#allocation2 + $0x10] sm:$0xff]
    %v246 = vld [vmem:[#allocation2 + $0x18] sm:$0xff]
    %v247 = vld [vmem:[#allocation2 + $0x20] sm:$0xff]
    %v248 = vld [vmem:[#allocation2 + $0x28] sm:$0xff]
    %v249 = vld [vmem:[#allocation2 + $0x30] sm:$0xff]
    %v250 = vld [vmem:[#allocation2 + $0x38] sm:$0xff]
    %v251 = vld [vmem:[#allocation2 + $0x40] sm:$0xff]
    %v252 = vld [vmem:[#allocation2 + $0x48] sm:$0xff]
    %v253 = vld [vmem:[#allocation2 + $0x50] sm:$0xff]
    %v254 = vld [vmem:[#allocation2 + $0x58] sm:$0xff]
    %v255 = vld [vmem:[#allocation2 + $0x60] sm:$0xff]
    %v256 = vld [vmem:[#allocation2 + $0x68] sm:$0xff]
    %v257 = vld [vmem:[#allocation2 + $0x70] sm:$0xff]
    %v258 = vld [vmem:[#allocation2 + $0x78] sm:$0xff]
    %v259 = vld [vmem:[#allocation2 + $0x80] sm:$0xff]
    %v260 = vld [vmem:[#allocation2 + $0x88] sm:$0xff]
    %v261 = vld [vmem:[#allocation2 + $0x90] sm:$0xff]
    %v262 = vld [vmem:[#allocation2 + $0x98] sm:$0xff]
    %v263 = vld [vmem:[#allocation2 + $0xa0] sm:$0xff]
    %v264 = vld [vmem:[#allocation2 + $0xa8] sm:$0xff]
    %v265 = vld [vmem:[#allocation2 + $0xb0] sm:$0xff]
    %v266 = vld [vmem:[#allocation2 + $0xb8] sm:$0xff]
    %v267 = vld [vmem:[#allocation2 + $0xc0] sm:$0xff]
    %v268 = vld [vmem:[#allocation2 + $0xc8] sm:$0xff]
    %v269 = vld [vmem:[#allocation2 + $0xd0] sm:$0xff]
    %v270 = vld [vmem:[#allocation2 + $0xd8] sm:$0xff]
    %v271 = vld [vmem:[#allocation2 + $0xe0] sm:$0xff]
    %v272 = vld [vmem:[#allocation2 + $0xe8] sm:$0xff]
    %v273 = vld [vmem:[#allocation2 + $0xf0] sm:$0xff]
    %v274 = vld [vmem:[#allocation2 + $0xf8] sm:$0xff]
    %v275 = vld [vmem:[#allocation2 + $0x100] sm:$0xff]
    %v276 = vld [vmem:[#allocation2 + $0x108] sm:$0xff]
    %v277 = vld [vmem:[#allocation2 + $0x110] sm:$0xff]
    %v278 = vld [vmem:[#allocation2 + $0x118] sm:$0xff]
    %v279 = vld [vmem:[#allocation2 + $0x120] sm:$0xff]
    %v280 = vld [vmem:[#allocation2 + $0x128] sm:$0xff]
    %v281 = vld [vmem:[#allocation2 + $0x130] sm:$0xff]
    %v282 = vld [vmem:[#allocation2 + $0x138] sm:$0xff]
    %v283 = vld [vmem:[#allocation2 + $0x140] sm:$0xff]
    %v284 = vld [vmem:[#allocation2 + $0x148] sm:$0xff]
    %v285 = vld [vmem:[#allocation2 + $0x150] sm:$0xff]
    %v286 = vld [vmem:[#allocation2 + $0x158] sm:$0xff]
    %v287 = vld [vmem:[#allocation2 + $0x160] sm:$0xff]
    %v288 = vld [vmem:[#allocation2 + $0x168] sm:$0xff]
    %v289 = vld [vmem:[#allocation2 + $0x170] sm:$0xff]
    %v290 = vld [vmem:[#allocation2 + $0x178] sm:$0xff]
    %v291 = vld [vmem:[#allocation2 + $0x180] sm:$0xff]
    %v292 = vld [vmem:[#allocation2 + $0x188] sm:$0xff]
    %v293 = vld [vmem:[#allocation2 + $0x190] sm:$0xff]
    %v294 = vld [vmem:[#allocation2 + $0x198] sm:$0xff]
    %v295 = vld [vmem:[#allocation2 + $0x1a0] sm:$0xff]
    %v296 = vld [vmem:[#allocation2 + $0x1a8] sm:$0xff]
    %v297 = vld [vmem:[#allocation2 + $0x1b0] sm:$0xff]
    %v298 = vld [vmem:[#allocation2 + $0x1b8] sm:$0xff]
    %v299 = vld [vmem:[#allocation2 + $0x1c0] sm:$0xff]
    %v300 = vld [vmem:[#allocation2 + $0x1c8] sm:$0xff]
    %v301 = vld [vmem:[#allocation2 + $0x1d0] sm:$0xff]
    %v302 = vld [vmem:[#allocation2 + $0x1d8] sm:$0xff]
    %v303 = vld [vmem:[#allocation2 + $0x1e0] sm:$0xff]
    %v304 = vld [vmem:[#allocation2 + $0x1e8] sm:$0xff]
    %v305 = vld [vmem:[#allocation2 + $0x1f0] sm:$0xff]
    %v306 = vld [vmem:[#allocation2 + $0x1f8] sm:$0xff]
    %v307 = vld [vmem:[#allocation2 + $0x200] sm:$0xff]
    %v308 = vld [vmem:[#allocation2 + $0x208] sm:$0xff]
    %v309 = vld [vmem:[#allocation2 + $0x210] sm:$0xff]
    %v310 = vld [vmem:[#allocation2 + $0x218] sm:$0xff]
    %v311 = vld [vmem:[#allocation2 + $0x220] sm:$0xff]
    %v312 = vld [vmem:[#allocation2 + $0x228] sm:$0xff]
    %v313 = vld [vmem:[#allocation2 + $0x230] sm:$0xff]
    %v314 = vld [vmem:[#allocation2 + $0x238] sm:$0xff]
    %v315 = vld [vmem:[#allocation2 + $0x240] sm:$0xff]
    %v316 = vld [vmem:[#allocation2 + $0x248] sm:$0xff]
    %v317 = vld [vmem:[#allocation2 + $0x250] sm:$0xff]
    %v318 = vld [vmem:[#allocation2 + $0x258] sm:$0xff]
    %v319 = vld [vmem:[#allocation2 + $0x260] sm:$0xff]
    %v320 = vld [vmem:[#allocation2 + $0x268] sm:$0xff]
    %v321 = vld [vmem:[#allocation2 + $0x270] sm:$0xff]
    %v322 = vld [vmem:[#allocation2 + $0x278] sm:$0xff]
    %v323 = vld [vmem:[#allocation2 + $0x280] sm:$0xff]
    %v324 = vld [vmem:[#allocation2 + $0x288] sm:$0xff]
    %v325 = vld [vmem:[#allocation2 + $0x290] sm:$0xff]
    %v326 = vld [vmem:[#allocation2 + $0x298] sm:$0xff]
    %v327 = vld [vmem:[#allocation2 + $0x2a0] sm:$0xff]
    %v328 = vld [vmem:[#allocation2 + $0x2a8] sm:$0xff]
    %v329 = vld [vmem:[#allocation2 + $0x2b0] sm:$0xff]
    %v330 = vld [vmem:[#allocation2 + $0x2b8] sm:$0xff]
    %v331 = vld [vmem:[#allocation2 + $0x2c0] sm:$0xff]
    %v332 = vld [vmem:[#allocation2 + $0x2c8] sm:$0xff]
    %v333 = vld [vmem:[#allocation2 + $0x2d0] sm:$0xff]
    %v334 = vld [vmem:[#allocation2 + $0x2d8] sm:$0xff]
    %v335 = vld [vmem:[#allocation2 + $0x2e0] sm:$0xff]
    %v336 = vld [vmem:[#allocation2 + $0x2e8] sm:$0xff]
    %v337 = vld [vmem:[#allocation2 + $0x2f0] sm:$0xff]
    %v338 = vld [vmem:[#allocation2 + $0x2f8] sm:$0xff]
    %v339 = vld [vmem:[#allocation2 + $0x300] sm:$0xff]
    %v340 = vld [vmem:[#allocation2 + $0x308] sm:$0xff]
    %v341 = vld [vmem:[#allocation2 + $0x310] sm:$0xff]
    %v342 = vld [vmem:[#allocation2 + $0x318] sm:$0xff]
    %v343 = vld [vmem:[#allocation2 + $0x320] sm:$0xff]
    %v344 = vld [vmem:[#allocation2 + $0x328] sm:$0xff]
    %v345 = vld [vmem:[#allocation2 + $0x330] sm:$0xff]
    %v346 = vld [vmem:[#allocation2 + $0x338] sm:$0xff]
    %v347 = vld [vmem:[#allocation2 + $0x340] sm:$0xff]
    %v348 = vld [vmem:[#allocation2 + $0x348] sm:$0xff]
    %v349 = vld [vmem:[#allocation2 + $0x350] sm:$0xff]
    %v350 = vld [vmem:[#allocation2 + $0x358] sm:$0xff]
    %v351 = vld [vmem:[#allocation2 + $0x360] sm:$0xff]
    %v352 = vld [vmem:[#allocation2 + $0x368] sm:$0xff]
    %v353 = vld [vmem:[#allocation2 + $0x370] sm:$0xff]
    %v354 = vld [vmem:[#allocation2 + $0x378] sm:$0xff]
    %v355 = vld [vmem:[#allocation2 + $0x380] sm:$0xff]
    %v356 = vld [vmem:[#allocation2 + $0x388] sm:$0xff]
    %v357 = vld [vmem:[#allocation2 + $0x390] sm:$0xff]
    %v358 = vld [vmem:[#allocation2 + $0x398] sm:$0xff]
    %v359 = vld [vmem:[#allocation2 + $0x3a0] sm:$0xff]
    %v360 = vld [vmem:[#allocation2 + $0x3a8] sm:$0xff]
    %v361 = vld [vmem:[#allocation2 + $0x3b0] sm:$0xff]
    %v362 = vld [vmem:[#allocation2 + $0x3b8] sm:$0xff]
    %v363 = vld [vmem:[#allocation2 + $0x3c0] sm:$0xff]
    %v364 = vld [vmem:[#allocation2 + $0x3c8] sm:$0xff]
    %v365 = vld [vmem:[#allocation2 + $0x3d0] sm:$0xff]
    %v366 = vld [vmem:[#allocation2 + $0x3d8] sm:$0xff]
    %v367 = vld [vmem:[#allocation2 + $0x3e0] sm:$0xff]
    %v368 = vld [vmem:[#allocation2 + $0x3e8] sm:$0xff]
    %v369 = vld [vmem:[#allocation2 + $0x3f0] sm:$0xff]
    %v370 = vld [vmem:[#allocation2 + $0x3f8] sm:$0xff]
    %v371 = vld [vmem:[#allocation2 + $0x400] sm:$0xff]
    %v372 = vld [vmem:[#allocation2 + $0x408] sm:$0xff]
    %v373 = vld [vmem:[#allocation2 + $0x410] sm:$0xff]
    %v374 = vld [vmem:[#allocation2 + $0x418] sm:$0xff]
    %v375 = vld [vmem:[#allocation2 + $0x420] sm:$0xff]
    %v376 = vld [vmem:[#allocation2 + $0x428] sm:$0xff]
    %v377 = vld [vmem:[#allocation2 + $0x430] sm:$0xff]
    %v378 = vld [vmem:[#allocation2 + $0x438] sm:$0xff]
    %v379 = vld [vmem:[#allocation2 + $0x440] sm:$0xff]
    %v380 = vld [vmem:[#allocation2 + $0x448] sm:$0xff]
    %v381 = vld [vmem:[#allocation2 + $0x450] sm:$0xff]
    %v382 = vld [vmem:[#allocation2 + $0x458] sm:$0xff]
    %v383 = vld [vmem:[#allocation2 + $0x460] sm:$0xff]
    %v384 = vld [vmem:[#allocation2 + $0x468] sm:$0xff]
    %v385 = vld [vmem:[#allocation2 + $0x470] sm:$0xff]
    %v386 = vld [vmem:[#allocation2 + $0x478] sm:$0xff]
    %v387 = vld [vmem:[#allocation2 + $0x480] sm:$0xff]
    %v388 = vld [vmem:[#allocation2 + $0x488] sm:$0xff]
    %v389 = vld [vmem:[#allocation2 + $0x490] sm:$0xff]
    %v390 = vld [vmem:[#allocation2 + $0x498] sm:$0xff]
    %v391 = vld [vmem:[#allocation2 + $0x4a0] sm:$0xff]
    %v392 = vld [vmem:[#allocation2 + $0x4a8] sm:$0xff]
    %v393 = vld [vmem:[#allocation2 + $0x4b0] sm:$0xff]
    %v394 = vld [vmem:[#allocation2 + $0x4b8] sm:$0xff]
    %v395 = vld [vmem:[#allocation2 + $0x4c0] sm:$0xff]
    %v396 = vld [vmem:[#allocation2 + $0x4c8] sm:$0xff]
    %v397 = vld [vmem:[#allocation2 + $0x4d0] sm:$0xff]
    %v398 = vld [vmem:[#allocation2 + $0x4d8] sm:$0xff]
    %v399 = vld [vmem:[#allocation2 + $0x4e0] sm:$0xff]
    %v400 = vld [vmem:[#allocation2 + $0x4e8] sm:$0xff]
    %v401 = vld [vmem:[#allocation2 + $0x4f0] sm:$0xff]
    %v402 = vld [vmem:[#allocation2 + $0x4f8] sm:$0xff]
    %v403 = vld [vmem:[#allocation2 + $0x500] sm:$0xff]
    %v404 = vld [vmem:[#allocation2 + $0x508] sm:$0xff]
    %v405 = vld [vmem:[#allocation2 + $0x510] sm:$0xff]
    %v406 = vld [vmem:[#allocation2 + $0x518] sm:$0xff]
    %v407 = vld [vmem:[#allocation2 + $0x520] sm:$0xff]
    %v408 = vld [vmem:[#allocation2 + $0x528] sm:$0xff]
    %v409 = vld [vmem:[#allocation2 + $0x530] sm:$0xff]
    %v410 = vld [vmem:[#allocation2 + $0x538] sm:$0xff]
    %v411 = vld [vmem:[#allocation2 + $0x540] sm:$0xff]
    %v412 = vld [vmem:[#allocation2 + $0x548] sm:$0xff]
    %v413 = vld [vmem:[#allocation2 + $0x550] sm:$0xff]
    %v414 = vld [vmem:[#allocation2 + $0x558] sm:$0xff]
    %v415 = vld [vmem:[#allocation2 + $0x560] sm:$0xff]
    %v416 = vld [vmem:[#allocation2 + $0x568] sm:$0xff]
    %v417 = vld [vmem:[#allocation2 + $0x570] sm:$0xff]
    %v418 = vld [vmem:[#allocation2 + $0x578] sm:$0xff]
    %v419 = vld [vmem:[#allocation2 + $0x580] sm:$0xff]
    %v420 = vld [vmem:[#allocation2 + $0x588] sm:$0xff]
    %v421 = vld [vmem:[#allocation2 + $0x590] sm:$0xff]
    %v422 = vld [vmem:[#allocation2 + $0x598] sm:$0xff]
    %v423 = vld [vmem:[#allocation2 + $0x5a0] sm:$0xff]
    %v424 = vld [vmem:[#allocation2 + $0x5a8] sm:$0xff]
    %v425 = vld [vmem:[#allocation2 + $0x5b0] sm:$0xff]
    %v426 = vld [vmem:[#allocation2 + $0x5b8] sm:$0xff]
    %v427 = vld [vmem:[#allocation2 + $0x5c0] sm:$0xff]
    %v428 = vld [vmem:[#allocation2 + $0x5c8] sm:$0xff]
    %v429 = vld [vmem:[#allocation2 + $0x5d0] sm:$0xff]
    %v430 = vld [vmem:[#allocation2 + $0x5d8] sm:$0xff]
    %v431 = vld [vmem:[#allocation2 + $0x5e0] sm:$0xff]
    %v432 = vld [vmem:[#allocation2 + $0x5e8] sm:$0xff]
    %v433 = vld [vmem:[#allocation2 + $0x5f0] sm:$0xff]
    %v434 = vld [vmem:[#allocation2 + $0x5f8] sm:$0xff]
    %v435 = vld [vmem:[#allocation2 + $0x600] sm:$0xff]
    %v436 = vld [vmem:[#allocation2 + $0x608] sm:$0xff]
    %v437 = vld [vmem:[#allocation2 + $0x610] sm:$0xff]
    %v438 = vld [vmem:[#allocation2 + $0x618] sm:$0xff]
    %v439 = vld [vmem:[#allocation2 + $0x620] sm:$0xff]
    %v440 = vld [vmem:[#allocation2 + $0x628] sm:$0xff]
    %v441 = vld [vmem:[#allocation2 + $0x630] sm:$0xff]
    %v442 = vld [vmem:[#allocation2 + $0x638] sm:$0xff]
    %v443 = vld [vmem:[#allocation2 + $0x640] sm:$0xff]
    %v444 = vld [vmem:[#allocation2 + $0x648] sm:$0xff]
    %v445 = vld [vmem:[#allocation2 + $0x650] sm:$0xff]
    %v446 = vld [vmem:[#allocation2 + $0x658] sm:$0xff]
    %v447 = vld [vmem:[#allocation2 + $0x660] sm:$0xff]
    %v448 = vld [vmem:[#allocation2 + $0x668] sm:$0xff]
    %v449 = vld [vmem:[#allocation2 + $0x670] sm:$0xff]
    %v450 = vld [vmem:[#allocation2 + $0x678] sm:$0xff]
    %v451 = vld [vmem:[#allocation2 + $0x680] sm:$0xff]
    %v452 = vld [vmem:[#allocation2 + $0x688] sm:$0xff]
    %v453 = vld [vmem:[#allocation2 + $0x690] sm:$0xff]
    %v454 = vld [vmem:[#allocation2 + $0x698] sm:$0xff]
    %v455 = vld [vmem:[#allocation2 + $0x6a0] sm:$0xff]
    %v456 = vld [vmem:[#allocation2 + $0x6a8] sm:$0xff]
    %v457 = vld [vmem:[#allocation2 + $0x6b0] sm:$0xff]
    %v458 = vld [vmem:[#allocation2 + $0x6b8] sm:$0xff]
    %v459 = vld [vmem:[#allocation2 + $0x6c0] sm:$0xff]
    %v460 = vld [vmem:[#allocation2 + $0x6c8] sm:$0xff]
    %v461 = vld [vmem:[#allocation2 + $0x6d0] sm:$0xff]
    %v462 = vld [vmem:[#allocation2 + $0x6d8] sm:$0xff]
    %v463 = vld [vmem:[#allocation2 + $0x6e0] sm:$0xff]
    %v464 = vld [vmem:[#allocation2 + $0x6e8] sm:$0xff]
    %v465 = vld [vmem:[#allocation2 + $0x6f0] sm:$0xff]
    %v466 = vld [vmem:[#allocation2 + $0x6f8] sm:$0xff]
    %v467 = vld [vmem:[#allocation4] sm:$0xf]
    %v469 = vlaneseq
    %v470 = vshrl.u32 %v469, 7
    %v471 = vsub.s32 0, %v470
    %v472 = vrot.slane %v467, %v471
    %v473 = vlaneseq
    %v474 = vshrl.u32 %v473, 7
    %v475 = vsub.s32 1, %v474
    %v476 = vrot.slane %v467, %v475
    %v477 = vlaneseq
    %v478 = vshrl.u32 %v477, 7
    %v479 = vsub.s32 2, %v478
    %v480 = vrot.slane %v467, %v479
    %v481 = vlaneseq
    %v482 = vshrl.u32 %v481, 7
    %v483 = vsub.s32 3, %v482
    %v484 = vrot.slane %v467, %v483
    %v497 = vunpack.c.l.b16 %v235
    %v498 = vunpack.c.h.b16 %v235
    %v499 = vunpack.c.l.b16 %v236
    %v500 = vunpack.c.h.b16 %v236
    %v501 = vunpack.c.l.b16 %v237
    %v502 = vunpack.c.h.b16 %v237
    %v503 = vunpack.c.l.b16 %v238
    %v504 = vunpack.c.l.b16 %v239
    %v505 = vunpack.c.h.b16 %v239
    %v506 = vunpack.c.l.b16 %v240
    %v507 = vunpack.c.h.b16 %v240
    %v508 = vunpack.c.l.b16 %v241
    %v509 = vunpack.c.h.b16 %v241
    %v510 = vunpack.c.l.b16 %v242
    %v511 = vpack.c.b16 %v504, %v497
    %v512 = vpack.c.b16 %v505, %v498
    %v513 = vpack.c.b16 %v506, %v499
    %v514 = vpack.c.b16 %v507, %v500
    %v515 = vpack.c.b16 %v508, %v501
    %v516 = vpack.c.b16 %v509, %v502
    %v517 = vpack.c.b16 %v510, %v503
    %v749 = vunpack.c.l.b16 %v243
    %v750 = vunpack.c.h.b16 %v243
    %v751 = vunpack.c.l.b16 %v244
    %v752 = vunpack.c.h.b16 %v244
    %v753 = vunpack.c.l.b16 %v245
    %v754 = vunpack.c.h.b16 %v245
    %v755 = vunpack.c.l.b16 %v246
    %v756 = vunpack.c.h.b16 %v246
    %v757 = vunpack.c.l.b16 %v247
    %v758 = vunpack.c.h.b16 %v247
    %v759 = vunpack.c.l.b16 %v248
    %v760 = vunpack.c.h.b16 %v248
    %v761 = vunpack.c.l.b16 %v249
    %v762 = vunpack.c.h.b16 %v249
    %v763 = vunpack.c.l.b16 %v250
    %v764 = vunpack.c.h.b16 %v250
    %v765 = vunpack.c.l.b16 %v251
    %v766 = vunpack.c.h.b16 %v251
    %v767 = vunpack.c.l.b16 %v252
    %v768 = vunpack.c.h.b16 %v252
    %v769 = vunpack.c.l.b16 %v253
    %v770 = vunpack.c.h.b16 %v253
    %v771 = vunpack.c.l.b16 %v254
    %v772 = vunpack.c.h.b16 %v254
    %v773 = vunpack.c.l.b16 %v255
    %v774 = vunpack.c.h.b16 %v255
    %v775 = vunpack.c.l.b16 %v256
    %v776 = vunpack.c.h.b16 %v256
    %v777 = vunpack.c.l.b16 %v257
    %v778 = vunpack.c.h.b16 %v257
    %v779 = vunpack.c.l.b16 %v258
    %v780 = vunpack.c.h.b16 %v258
    %v781 = vunpack.c.l.b16 %v259
    %v782 = vunpack.c.h.b16 %v259
    %v783 = vunpack.c.l.b16 %v260
    %v784 = vunpack.c.h.b16 %v260
    %v785 = vunpack.c.l.b16 %v261
    %v786 = vunpack.c.h.b16 %v261
    %v787 = vunpack.c.l.b16 %v262
    %v788 = vunpack.c.h.b16 %v262
    %v789 = vunpack.c.l.b16 %v263
    %v790 = vunpack.c.h.b16 %v263
    %v791 = vunpack.c.l.b16 %v264
    %v792 = vunpack.c.h.b16 %v264
    %v793 = vunpack.c.l.b16 %v265
    %v794 = vunpack.c.h.b16 %v265
    %v795 = vunpack.c.l.b16 %v266
    %v796 = vunpack.c.h.b16 %v266
    %v797 = vunpack.c.l.b16 %v267
    %v798 = vunpack.c.h.b16 %v267
    %v799 = vunpack.c.l.b16 %v268
    %v800 = vunpack.c.h.b16 %v268
    %v801 = vunpack.c.l.b16 %v269
    %v802 = vunpack.c.h.b16 %v269
    %v803 = vunpack.c.l.b16 %v270
    %v804 = vunpack.c.h.b16 %v270
    %v805 = vunpack.c.l.b16 %v271
    %v806 = vunpack.c.h.b16 %v271
    %v807 = vunpack.c.l.b16 %v272
    %v808 = vunpack.c.h.b16 %v272
    %v809 = vunpack.c.l.b16 %v273
    %v810 = vunpack.c.h.b16 %v273
    %v811 = vunpack.c.l.b16 %v274
    %v812 = vunpack.c.h.b16 %v274
    %v813 = vunpack.c.l.b16 %v275
    %v814 = vunpack.c.h.b16 %v275
    %v815 = vunpack.c.l.b16 %v276
    %v816 = vunpack.c.h.b16 %v276
    %v817 = vunpack.c.l.b16 %v277
    %v818 = vunpack.c.h.b16 %v277
    %v819 = vunpack.c.l.b16 %v278
    %v820 = vunpack.c.h.b16 %v278
    %v821 = vunpack.c.l.b16 %v279
    %v822 = vunpack.c.h.b16 %v279
    %v823 = vunpack.c.l.b16 %v280
    %v824 = vunpack.c.h.b16 %v280
    %v825 = vunpack.c.l.b16 %v281
    %v826 = vunpack.c.h.b16 %v281
    %v827 = vunpack.c.l.b16 %v282
    %v828 = vunpack.c.h.b16 %v282
    %v829 = vunpack.c.l.b16 %v283
    %v830 = vunpack.c.h.b16 %v283
    %v831 = vunpack.c.l.b16 %v284
    %v832 = vunpack.c.h.b16 %v284
    %v833 = vunpack.c.l.b16 %v285
    %v834 = vunpack.c.h.b16 %v285
    %v835 = vunpack.c.l.b16 %v286
    %v836 = vunpack.c.h.b16 %v286
    %v837 = vunpack.c.l.b16 %v287
    %v838 = vunpack.c.h.b16 %v287
    %v839 = vunpack.c.l.b16 %v288
    %v840 = vunpack.c.h.b16 %v288
    %v841 = vunpack.c.l.b16 %v289
    %v842 = vunpack.c.h.b16 %v289
    %v843 = vunpack.c.l.b16 %v290
    %v844 = vunpack.c.h.b16 %v290
    %v845 = vunpack.c.l.b16 %v291
    %v846 = vunpack.c.h.b16 %v291
    %v847 = vunpack.c.l.b16 %v292
    %v848 = vunpack.c.h.b16 %v292
    %v849 = vunpack.c.l.b16 %v293
    %v850 = vunpack.c.h.b16 %v293
    %v851 = vunpack.c.l.b16 %v294
    %v852 = vunpack.c.h.b16 %v294
    %v853 = vunpack.c.l.b16 %v295
    %v854 = vunpack.c.h.b16 %v295
    %v855 = vunpack.c.l.b16 %v296
    %v856 = vunpack.c.h.b16 %v296
    %v857 = vunpack.c.l.b16 %v297
    %v858 = vunpack.c.h.b16 %v297
    %v859 = vunpack.c.l.b16 %v298
    %v860 = vunpack.c.h.b16 %v298
    %v861 = vunpack.c.l.b16 %v299
    %v862 = vunpack.c.h.b16 %v299
    %v863 = vunpack.c.l.b16 %v300
    %v864 = vunpack.c.h.b16 %v300
    %v865 = vunpack.c.l.b16 %v301
    %v866 = vunpack.c.h.b16 %v301
    %v867 = vunpack.c.l.b16 %v302
    %v868 = vunpack.c.h.b16 %v302
    %v869 = vunpack.c.l.b16 %v303
    %v870 = vunpack.c.h.b16 %v303
    %v871 = vunpack.c.l.b16 %v304
    %v872 = vunpack.c.h.b16 %v304
    %v873 = vunpack.c.l.b16 %v305
    %v874 = vunpack.c.h.b16 %v305
    %v875 = vunpack.c.l.b16 %v306
    %v876 = vunpack.c.h.b16 %v306
    %v877 = vunpack.c.l.b16 %v307
    %v878 = vunpack.c.h.b16 %v307
    %v879 = vunpack.c.l.b16 %v308
    %v880 = vunpack.c.h.b16 %v308
    %v881 = vunpack.c.l.b16 %v309
    %v882 = vunpack.c.h.b16 %v309
    %v883 = vunpack.c.l.b16 %v310
    %v884 = vunpack.c.h.b16 %v310
    %v885 = vunpack.c.l.b16 %v311
    %v886 = vunpack.c.h.b16 %v311
    %v887 = vunpack.c.l.b16 %v312
    %v888 = vunpack.c.h.b16 %v312
    %v889 = vunpack.c.l.b16 %v313
    %v890 = vunpack.c.h.b16 %v313
    %v891 = vunpack.c.l.b16 %v314
    %v892 = vunpack.c.h.b16 %v314
    %v893 = vunpack.c.l.b16 %v315
    %v894 = vunpack.c.h.b16 %v315
    %v895 = vunpack.c.l.b16 %v316
    %v896 = vunpack.c.h.b16 %v316
    %v897 = vunpack.c.l.b16 %v317
    %v898 = vunpack.c.h.b16 %v317
    %v899 = vunpack.c.l.b16 %v318
    %v900 = vunpack.c.h.b16 %v318
    %v901 = vunpack.c.l.b16 %v319
    %v902 = vunpack.c.h.b16 %v319
    %v903 = vunpack.c.l.b16 %v320
    %v904 = vunpack.c.h.b16 %v320
    %v905 = vunpack.c.l.b16 %v321
    %v906 = vunpack.c.h.b16 %v321
    %v907 = vunpack.c.l.b16 %v322
    %v908 = vunpack.c.h.b16 %v322
    %v909 = vunpack.c.l.b16 %v323
    %v910 = vunpack.c.h.b16 %v323
    %v911 = vunpack.c.l.b16 %v324
    %v912 = vunpack.c.h.b16 %v324
    %v913 = vunpack.c.l.b16 %v325
    %v914 = vunpack.c.h.b16 %v325
    %v915 = vunpack.c.l.b16 %v326
    %v916 = vunpack.c.h.b16 %v326
    %v917 = vunpack.c.l.b16 %v327
    %v918 = vunpack.c.h.b16 %v327
    %v919 = vunpack.c.l.b16 %v328
    %v920 = vunpack.c.h.b16 %v328
    %v921 = vunpack.c.l.b16 %v329
    %v922 = vunpack.c.h.b16 %v329
    %v923 = vunpack.c.l.b16 %v330
    %v924 = vunpack.c.h.b16 %v330
    %v925 = vunpack.c.l.b16 %v331
    %v926 = vunpack.c.h.b16 %v331
    %v927 = vunpack.c.l.b16 %v332
    %v928 = vunpack.c.h.b16 %v332
    %v929 = vunpack.c.l.b16 %v333
    %v930 = vunpack.c.h.b16 %v333
    %v931 = vunpack.c.l.b16 %v334
    %v932 = vunpack.c.h.b16 %v334
    %v933 = vunpack.c.l.b16 %v335
    %v934 = vunpack.c.h.b16 %v335
    %v935 = vunpack.c.l.b16 %v336
    %v936 = vunpack.c.h.b16 %v336
    %v937 = vunpack.c.l.b16 %v337
    %v938 = vunpack.c.h.b16 %v337
    %v939 = vunpack.c.l.b16 %v338
    %v940 = vunpack.c.h.b16 %v338
    %v941 = vunpack.c.l.b16 %v339
    %v942 = vunpack.c.h.b16 %v339
    %v943 = vunpack.c.l.b16 %v340
    %v944 = vunpack.c.h.b16 %v340
    %v945 = vunpack.c.l.b16 %v341
    %v946 = vunpack.c.h.b16 %v341
    %v947 = vunpack.c.l.b16 %v342
    %v948 = vunpack.c.h.b16 %v342
    %v949 = vunpack.c.l.b16 %v343
    %v950 = vunpack.c.h.b16 %v343
    %v951 = vunpack.c.l.b16 %v344
    %v952 = vunpack.c.h.b16 %v344
    %v953 = vunpack.c.l.b16 %v345
    %v954 = vunpack.c.h.b16 %v345
    %v955 = vunpack.c.l.b16 %v346
    %v956 = vunpack.c.h.b16 %v346
    %v957 = vunpack.c.l.b16 %v347
    %v958 = vunpack.c.h.b16 %v347
    %v959 = vunpack.c.l.b16 %v348
    %v960 = vunpack.c.h.b16 %v348
    %v961 = vunpack.c.l.b16 %v349
    %v962 = vunpack.c.h.b16 %v349
    %v963 = vunpack.c.l.b16 %v350
    %v964 = vunpack.c.h.b16 %v350
    %v965 = vunpack.c.l.b16 %v351
    %v966 = vunpack.c.h.b16 %v351
    %v967 = vunpack.c.l.b16 %v352
    %v968 = vunpack.c.h.b16 %v352
    %v969 = vunpack.c.l.b16 %v353
    %v970 = vunpack.c.h.b16 %v353
    %v971 = vunpack.c.l.b16 %v354
    %v972 = vunpack.c.h.b16 %v354
    %v973 = vunpack.c.l.b16 %v355
    %v974 = vunpack.c.h.b16 %v355
    %v975 = vunpack.c.l.b16 %v356
    %v976 = vunpack.c.h.b16 %v356
    %v977 = vunpack.c.l.b16 %v357
    %v978 = vunpack.c.h.b16 %v357
    %v979 = vunpack.c.l.b16 %v358
    %v980 = vunpack.c.h.b16 %v358
    %v981 = vunpack.c.l.b16 %v359
    %v982 = vunpack.c.h.b16 %v359
    %v983 = vunpack.c.l.b16 %v360
    %v984 = vunpack.c.h.b16 %v360
    %v985 = vunpack.c.l.b16 %v361
    %v986 = vunpack.c.h.b16 %v361
    %v987 = vunpack.c.l.b16 %v362
    %v988 = vunpack.c.h.b16 %v362
    %v989 = vunpack.c.l.b16 %v363
    %v990 = vunpack.c.h.b16 %v363
    %v991 = vunpack.c.l.b16 %v364
    %v992 = vunpack.c.h.b16 %v364
    %v993 = vunpack.c.l.b16 %v365
    %v994 = vunpack.c.h.b16 %v365
    %v995 = vunpack.c.l.b16 %v366
    %v996 = vunpack.c.h.b16 %v366
    %v997 = vunpack.c.l.b16 %v367
    %v998 = vunpack.c.h.b16 %v367
    %v999 = vunpack.c.l.b16 %v368
    %v1000 = vunpack.c.h.b16 %v368
    %v1001 = vunpack.c.l.b16 %v369
    %v1002 = vunpack.c.h.b16 %v369
    %v1003 = vunpack.c.l.b16 %v370
    %v1004 = vunpack.c.h.b16 %v370
    %v1005 = vunpack.c.l.b16 %v371
    %v1006 = vunpack.c.h.b16 %v371
    %v1007 = vunpack.c.l.b16 %v372
    %v1008 = vunpack.c.h.b16 %v372
    %v1009 = vunpack.c.l.b16 %v373
    %v1010 = vunpack.c.h.b16 %v373
    %v1011 = vunpack.c.l.b16 %v374
    %v1012 = vunpack.c.h.b16 %v374
    %v1013 = vunpack.c.l.b16 %v375
    %v1014 = vunpack.c.h.b16 %v375
    %v1015 = vunpack.c.l.b16 %v376
    %v1016 = vunpack.c.h.b16 %v376
    %v1017 = vunpack.c.l.b16 %v377
    %v1018 = vunpack.c.h.b16 %v377
    %v1019 = vunpack.c.l.b16 %v378
    %v1020 = vunpack.c.h.b16 %v378
    %v1021 = vunpack.c.l.b16 %v379
    %v1022 = vunpack.c.h.b16 %v379
    %v1023 = vunpack.c.l.b16 %v380
    %v1024 = vunpack.c.h.b16 %v380
    %v1025 = vunpack.c.l.b16 %v381
    %v1026 = vunpack.c.h.b16 %v381
    %v1027 = vunpack.c.l.b16 %v382
    %v1028 = vunpack.c.h.b16 %v382
    %v1029 = vunpack.c.l.b16 %v383
    %v1030 = vunpack.c.h.b16 %v383
    %v1031 = vunpack.c.l.b16 %v384
    %v1032 = vunpack.c.h.b16 %v384
    %v1033 = vunpack.c.l.b16 %v385
    %v1034 = vunpack.c.h.b16 %v385
    %v1035 = vunpack.c.l.b16 %v386
    %v1036 = vunpack.c.h.b16 %v386
    %v1037 = vunpack.c.l.b16 %v387
    %v1038 = vunpack.c.h.b16 %v387
    %v1039 = vunpack.c.l.b16 %v388
    %v1040 = vunpack.c.h.b16 %v388
    %v1041 = vunpack.c.l.b16 %v389
    %v1042 = vunpack.c.h.b16 %v389
    %v1043 = vunpack.c.l.b16 %v390
    %v1044 = vunpack.c.h.b16 %v390
    %v1045 = vunpack.c.l.b16 %v391
    %v1046 = vunpack.c.h.b16 %v391
    %v1047 = vunpack.c.l.b16 %v392
    %v1048 = vunpack.c.h.b16 %v392
    %v1049 = vunpack.c.l.b16 %v393
    %v1050 = vunpack.c.h.b16 %v393
    %v1051 = vunpack.c.l.b16 %v394
    %v1052 = vunpack.c.h.b16 %v394
    %v1053 = vunpack.c.l.b16 %v395
    %v1054 = vunpack.c.h.b16 %v395
    %v1055 = vunpack.c.l.b16 %v396
    %v1056 = vunpack.c.h.b16 %v396
    %v1057 = vunpack.c.l.b16 %v397
    %v1058 = vunpack.c.h.b16 %v397
    %v1059 = vunpack.c.l.b16 %v398
    %v1060 = vunpack.c.h.b16 %v398
    %v1061 = vunpack.c.l.b16 %v399
    %v1062 = vunpack.c.h.b16 %v399
    %v1063 = vunpack.c.l.b16 %v400
    %v1064 = vunpack.c.h.b16 %v400
    %v1065 = vunpack.c.l.b16 %v401
    %v1066 = vunpack.c.h.b16 %v401
    %v1067 = vunpack.c.l.b16 %v402
    %v1068 = vunpack.c.h.b16 %v402
    %v1069 = vunpack.c.l.b16 %v403
    %v1070 = vunpack.c.h.b16 %v403
    %v1071 = vunpack.c.l.b16 %v404
    %v1072 = vunpack.c.h.b16 %v404
    %v1073 = vunpack.c.l.b16 %v405
    %v1074 = vunpack.c.h.b16 %v405
    %v1075 = vunpack.c.l.b16 %v406
    %v1076 = vunpack.c.h.b16 %v406
    %v1077 = vunpack.c.l.b16 %v407
    %v1078 = vunpack.c.h.b16 %v407
    %v1079 = vunpack.c.l.b16 %v408
    %v1080 = vunpack.c.h.b16 %v408
    %v1081 = vunpack.c.l.b16 %v409
    %v1082 = vunpack.c.h.b16 %v409
    %v1083 = vunpack.c.l.b16 %v410
    %v1084 = vunpack.c.h.b16 %v410
    %v1085 = vunpack.c.l.b16 %v411
    %v1086 = vunpack.c.h.b16 %v411
    %v1087 = vunpack.c.l.b16 %v412
    %v1088 = vunpack.c.h.b16 %v412
    %v1089 = vunpack.c.l.b16 %v413
    %v1090 = vunpack.c.h.b16 %v413
    %v1091 = vunpack.c.l.b16 %v414
    %v1092 = vunpack.c.h.b16 %v414
    %v1093 = vunpack.c.l.b16 %v415
    %v1094 = vunpack.c.h.b16 %v415
    %v1095 = vunpack.c.l.b16 %v416
    %v1096 = vunpack.c.h.b16 %v416
    %v1097 = vunpack.c.l.b16 %v417
    %v1098 = vunpack.c.h.b16 %v417
    %v1099 = vunpack.c.l.b16 %v418
    %v1100 = vunpack.c.h.b16 %v418
    %v1101 = vunpack.c.l.b16 %v419
    %v1102 = vunpack.c.h.b16 %v419
    %v1103 = vunpack.c.l.b16 %v420
    %v1104 = vunpack.c.h.b16 %v420
    %v1105 = vunpack.c.l.b16 %v421
    %v1106 = vunpack.c.h.b16 %v421
    %v1107 = vunpack.c.l.b16 %v422
    %v1108 = vunpack.c.h.b16 %v422
    %v1109 = vunpack.c.l.b16 %v423
    %v1110 = vunpack.c.h.b16 %v423
    %v1111 = vunpack.c.l.b16 %v424
    %v1112 = vunpack.c.h.b16 %v424
    %v1113 = vunpack.c.l.b16 %v425
    %v1114 = vunpack.c.h.b16 %v425
    %v1115 = vunpack.c.l.b16 %v426
    %v1116 = vunpack.c.h.b16 %v426
    %v1117 = vunpack.c.l.b16 %v427
    %v1118 = vunpack.c.h.b16 %v427
    %v1119 = vunpack.c.l.b16 %v428
    %v1120 = vunpack.c.h.b16 %v428
    %v1121 = vunpack.c.l.b16 %v429
    %v1122 = vunpack.c.h.b16 %v429
    %v1123 = vunpack.c.l.b16 %v430
    %v1124 = vunpack.c.h.b16 %v430
    %v1125 = vunpack.c.l.b16 %v431
    %v1126 = vunpack.c.h.b16 %v431
    %v1127 = vunpack.c.l.b16 %v432
    %v1128 = vunpack.c.h.b16 %v432
    %v1129 = vunpack.c.l.b16 %v433
    %v1130 = vunpack.c.h.b16 %v433
    %v1131 = vunpack.c.l.b16 %v434
    %v1132 = vunpack.c.h.b16 %v434
    %v1133 = vunpack.c.l.b16 %v435
    %v1134 = vunpack.c.h.b16 %v435
    %v1135 = vunpack.c.l.b16 %v436
    %v1136 = vunpack.c.h.b16 %v436
    %v1137 = vunpack.c.l.b16 %v437
    %v1138 = vunpack.c.h.b16 %v437
    %v1139 = vunpack.c.l.b16 %v438
    %v1140 = vunpack.c.h.b16 %v438
    %v1141 = vunpack.c.l.b16 %v439
    %v1142 = vunpack.c.h.b16 %v439
    %v1143 = vunpack.c.l.b16 %v440
    %v1144 = vunpack.c.h.b16 %v440
    %v1145 = vunpack.c.l.b16 %v441
    %v1146 = vunpack.c.h.b16 %v441
    %v1147 = vunpack.c.l.b16 %v442
    %v1148 = vunpack.c.h.b16 %v442
    %v1149 = vunpack.c.l.b16 %v443
    %v1150 = vunpack.c.h.b16 %v443
    %v1151 = vunpack.c.l.b16 %v444
    %v1152 = vunpack.c.h.b16 %v444
    %v1153 = vunpack.c.l.b16 %v445
    %v1154 = vunpack.c.h.b16 %v445
    %v1155 = vunpack.c.l.b16 %v446
    %v1156 = vunpack.c.h.b16 %v446
    %v1157 = vunpack.c.l.b16 %v447
    %v1158 = vunpack.c.h.b16 %v447
    %v1159 = vunpack.c.l.b16 %v448
    %v1160 = vunpack.c.h.b16 %v448
    %v1161 = vunpack.c.l.b16 %v449
    %v1162 = vunpack.c.h.b16 %v449
    %v1163 = vunpack.c.l.b16 %v450
    %v1164 = vunpack.c.h.b16 %v450
    %v1165 = vunpack.c.l.b16 %v451
    %v1166 = vunpack.c.h.b16 %v451
    %v1167 = vunpack.c.l.b16 %v452
    %v1168 = vunpack.c.h.b16 %v452
    %v1169 = vunpack.c.l.b16 %v453
    %v1170 = vunpack.c.h.b16 %v453
    %v1171 = vunpack.c.l.b16 %v454
    %v1172 = vunpack.c.h.b16 %v454
    %v1173 = vunpack.c.l.b16 %v455
    %v1174 = vunpack.c.h.b16 %v455
    %v1175 = vunpack.c.l.b16 %v456
    %v1176 = vunpack.c.h.b16 %v456
    %v1177 = vunpack.c.l.b16 %v457
    %v1178 = vunpack.c.h.b16 %v457
    %v1179 = vunpack.c.l.b16 %v458
    %v1180 = vunpack.c.h.b16 %v458
    %v1181 = vunpack.c.l.b16 %v459
    %v1182 = vunpack.c.h.b16 %v459
    %v1183 = vunpack.c.l.b16 %v460
    %v1184 = vunpack.c.h.b16 %v460
    %v1185 = vunpack.c.l.b16 %v461
    %v1186 = vunpack.c.h.b16 %v461
    %v1187 = vunpack.c.l.b16 %v462
    %v1188 = vunpack.c.h.b16 %v462
    %v1189 = vunpack.c.l.b16 %v463
    %v1190 = vunpack.c.h.b16 %v463
    %v1191 = vunpack.c.l.b16 %v464
    %v1192 = vunpack.c.h.b16 %v464
    %v1193 = vunpack.c.l.b16 %v465
    %v1194 = vunpack.c.h.b16 %v465
    %v1195 = vunpack.c.l.b16 %v466
    %v1196 = vunpack.c.h.b16 %v466
    %v1197 = vpack.c.b16 %v753, %v749
    %v1198 = vpack.c.b16 %v754, %v750
    %v1199 = vpack.c.b16 %v755, %v751
    %v1200 = vpack.c.b16 %v756, %v752
    %v1201 = vpack.c.b16 %v761, %v757
    %v1202 = vpack.c.b16 %v762, %v758
    %v1203 = vpack.c.b16 %v763, %v759
    %v1204 = vpack.c.b16 %v764, %v760
    %v1205 = vpack.c.b16 %v769, %v765
    %v1206 = vpack.c.b16 %v770, %v766
    %v1207 = vpack.c.b16 %v771, %v767
    %v1208 = vpack.c.b16 %v772, %v768
    %v1209 = vpack.c.b16 %v777, %v773
    %v1210 = vpack.c.b16 %v778, %v774
    %v1211 = vpack.c.b16 %v779, %v775
    %v1212 = vpack.c.b16 %v780, %v776
    %v1213 = vpack.c.b16 %v785, %v781
    %v1214 = vpack.c.b16 %v786, %v782
    %v1215 = vpack.c.b16 %v787, %v783
    %v1216 = vpack.c.b16 %v788, %v784
    %v1217 = vpack.c.b16 %v793, %v789
    %v1218 = vpack.c.b16 %v794, %v790
    %v1219 = vpack.c.b16 %v795, %v791
    %v1220 = vpack.c.b16 %v796, %v792
    %v1221 = vpack.c.b16 %v801, %v797
    %v1222 = vpack.c.b16 %v802, %v798
    %v1223 = vpack.c.b16 %v803, %v799
    %v1224 = vpack.c.b16 %v804, %v800
    %v1225 = vpack.c.b16 %v809, %v805
    %v1226 = vpack.c.b16 %v810, %v806
    %v1227 = vpack.c.b16 %v811, %v807
    %v1228 = vpack.c.b16 %v812, %v808
    %v1229 = vpack.c.b16 %v817, %v813
    %v1230 = vpack.c.b16 %v818, %v814
    %v1231 = vpack.c.b16 %v819, %v815
    %v1232 = vpack.c.b16 %v820, %v816
    %v1233 = vpack.c.b16 %v825, %v821
    %v1234 = vpack.c.b16 %v826, %v822
    %v1235 = vpack.c.b16 %v827, %v823
    %v1236 = vpack.c.b16 %v828, %v824
    %v1237 = vpack.c.b16 %v833, %v829
    %v1238 = vpack.c.b16 %v834, %v830
    %v1239 = vpack.c.b16 %v835, %v831
    %v1240 = vpack.c.b16 %v836, %v832
    %v1241 = vpack.c.b16 %v841, %v837
    %v1242 = vpack.c.b16 %v842, %v838
    %v1243 = vpack.c.b16 %v843, %v839
    %v1244 = vpack.c.b16 %v844, %v840
    %v1245 = vpack.c.b16 %v849, %v845
    %v1246 = vpack.c.b16 %v850, %v846
    %v1247 = vpack.c.b16 %v851, %v847
    %v1248 = vpack.c.b16 %v852, %v848
    %v1249 = vpack.c.b16 %v857, %v853
    %v1250 = vpack.c.b16 %v858, %v854
    %v1251 = vpack.c.b16 %v859, %v855
    %v1252 = vpack.c.b16 %v860, %v856
    %v1253 = vpack.c.b16 %v865, %v861
    %v1254 = vpack.c.b16 %v866, %v862
    %v1255 = vpack.c.b16 %v867, %v863
    %v1256 = vpack.c.b16 %v868, %v864
    %v1257 = vpack.c.b16 %v873, %v869
    %v1258 = vpack.c.b16 %v874, %v870
    %v1259 = vpack.c.b16 %v875, %v871
    %v1260 = vpack.c.b16 %v876, %v872
    %v1261 = vpack.c.b16 %v881, %v877
    %v1262 = vpack.c.b16 %v882, %v878
    %v1263 = vpack.c.b16 %v883, %v879
    %v1264 = vpack.c.b16 %v884, %v880
    %v1265 = vpack.c.b16 %v889, %v885
    %v1266 = vpack.c.b16 %v890, %v886
    %v1267 = vpack.c.b16 %v891, %v887
    %v1268 = vpack.c.b16 %v892, %v888
    %v1269 = vpack.c.b16 %v897, %v893
    %v1270 = vpack.c.b16 %v898, %v894
    %v1271 = vpack.c.b16 %v899, %v895
    %v1272 = vpack.c.b16 %v900, %v896
    %v1273 = vpack.c.b16 %v905, %v901
    %v1274 = vpack.c.b16 %v906, %v902
    %v1275 = vpack.c.b16 %v907, %v903
    %v1276 = vpack.c.b16 %v908, %v904
    %v1277 = vpack.c.b16 %v913, %v909
    %v1278 = vpack.c.b16 %v914, %v910
    %v1279 = vpack.c.b16 %v915, %v911
    %v1280 = vpack.c.b16 %v916, %v912
    %v1281 = vpack.c.b16 %v921, %v917
    %v1282 = vpack.c.b16 %v922, %v918
    %v1283 = vpack.c.b16 %v923, %v919
    %v1284 = vpack.c.b16 %v924, %v920
    %v1285 = vpack.c.b16 %v929, %v925
    %v1286 = vpack.c.b16 %v930, %v926
    %v1287 = vpack.c.b16 %v931, %v927
    %v1288 = vpack.c.b16 %v932, %v928
    %v1289 = vpack.c.b16 %v937, %v933
    %v1290 = vpack.c.b16 %v938, %v934
    %v1291 = vpack.c.b16 %v939, %v935
    %v1292 = vpack.c.b16 %v940, %v936
    %v1293 = vpack.c.b16 %v945, %v941
    %v1294 = vpack.c.b16 %v946, %v942
    %v1295 = vpack.c.b16 %v947, %v943
    %v1296 = vpack.c.b16 %v948, %v944
    %v1297 = vpack.c.b16 %v953, %v949
    %v1298 = vpack.c.b16 %v954, %v950
    %v1299 = vpack.c.b16 %v955, %v951
    %v1300 = vpack.c.b16 %v956, %v952
    %v1301 = vpack.c.b16 %v961, %v957
    %v1302 = vpack.c.b16 %v962, %v958
    %v1303 = vpack.c.b16 %v963, %v959
    %v1304 = vpack.c.b16 %v964, %v960
    %v1305 = vpack.c.b16 %v969, %v965
    %v1306 = vpack.c.b16 %v970, %v966
    %v1307 = vpack.c.b16 %v971, %v967
    %v1308 = vpack.c.b16 %v972, %v968
    %v1309 = vpack.c.b16 %v977, %v973
    %v1310 = vpack.c.b16 %v978, %v974
    %v1311 = vpack.c.b16 %v979, %v975
    %v1312 = vpack.c.b16 %v980, %v976
    %v1313 = vpack.c.b16 %v985, %v981
    %v1314 = vpack.c.b16 %v986, %v982
    %v1315 = vpack.c.b16 %v987, %v983
    %v1316 = vpack.c.b16 %v988, %v984
    %v1317 = vpack.c.b16 %v993, %v989
    %v1318 = vpack.c.b16 %v994, %v990
    %v1319 = vpack.c.b16 %v995, %v991
    %v1320 = vpack.c.b16 %v996, %v992
    %v1321 = vpack.c.b16 %v1001, %v997
    %v1322 = vpack.c.b16 %v1002, %v998
    %v1323 = vpack.c.b16 %v1003, %v999
    %v1324 = vpack.c.b16 %v1004, %v1000
    %v1325 = vpack.c.b16 %v1009, %v1005
    %v1326 = vpack.c.b16 %v1010, %v1006
    %v1327 = vpack.c.b16 %v1011, %v1007
    %v1328 = vpack.c.b16 %v1012, %v1008
    %v1329 = vpack.c.b16 %v1017, %v1013
    %v1330 = vpack.c.b16 %v1018, %v1014
    %v1331 = vpack.c.b16 %v1019, %v1015
    %v1332 = vpack.c.b16 %v1020, %v1016
    %v1333 = vpack.c.b16 %v1025, %v1021
    %v1334 = vpack.c.b16 %v1026, %v1022
    %v1335 = vpack.c.b16 %v1027, %v1023
    %v1336 = vpack.c.b16 %v1028, %v1024
    %v1337 = vpack.c.b16 %v1033, %v1029
    %v1338 = vpack.c.b16 %v1034, %v1030
    %v1339 = vpack.c.b16 %v1035, %v1031
    %v1340 = vpack.c.b16 %v1036, %v1032
    %v1341 = vpack.c.b16 %v1041, %v1037
    %v1342 = vpack.c.b16 %v1042, %v1038
    %v1343 = vpack.c.b16 %v1043, %v1039
    %v1344 = vpack.c.b16 %v1044, %v1040
    %v1345 = vpack.c.b16 %v1049, %v1045
    %v1346 = vpack.c.b16 %v1050, %v1046
    %v1347 = vpack.c.b16 %v1051, %v1047
    %v1348 = vpack.c.b16 %v1052, %v1048
    %v1349 = vpack.c.b16 %v1057, %v1053
    %v1350 = vpack.c.b16 %v1058, %v1054
    %v1351 = vpack.c.b16 %v1059, %v1055
    %v1352 = vpack.c.b16 %v1060, %v1056
    %v1353 = vpack.c.b16 %v1065, %v1061
    %v1354 = vpack.c.b16 %v1066, %v1062
    %v1355 = vpack.c.b16 %v1067, %v1063
    %v1356 = vpack.c.b16 %v1068, %v1064
    %v1357 = vpack.c.b16 %v1073, %v1069
    %v1358 = vpack.c.b16 %v1074, %v1070
    %v1359 = vpack.c.b16 %v1075, %v1071
    %v1360 = vpack.c.b16 %v1076, %v1072
    %v1361 = vpack.c.b16 %v1081, %v1077
    %v1362 = vpack.c.b16 %v1082, %v1078
    %v1363 = vpack.c.b16 %v1083, %v1079
    %v1364 = vpack.c.b16 %v1084, %v1080
    %v1365 = vpack.c.b16 %v1089, %v1085
    %v1366 = vpack.c.b16 %v1090, %v1086
    %v1367 = vpack.c.b16 %v1091, %v1087
    %v1368 = vpack.c.b16 %v1092, %v1088
    %v1369 = vpack.c.b16 %v1097, %v1093
    %v1370 = vpack.c.b16 %v1098, %v1094
    %v1371 = vpack.c.b16 %v1099, %v1095
    %v1372 = vpack.c.b16 %v1100, %v1096
    %v1373 = vpack.c.b16 %v1105, %v1101
    %v1374 = vpack.c.b16 %v1106, %v1102
    %v1375 = vpack.c.b16 %v1107, %v1103
    %v1376 = vpack.c.b16 %v1108, %v1104
    %v1377 = vpack.c.b16 %v1113, %v1109
    %v1378 = vpack.c.b16 %v1114, %v1110
    %v1379 = vpack.c.b16 %v1115, %v1111
    %v1380 = vpack.c.b16 %v1116, %v1112
    %v1381 = vpack.c.b16 %v1121, %v1117
    %v1382 = vpack.c.b16 %v1122, %v1118
    %v1383 = vpack.c.b16 %v1123, %v1119
    %v1384 = vpack.c.b16 %v1124, %v1120
    %v1385 = vpack.c.b16 %v1129, %v1125
    %v1386 = vpack.c.b16 %v1130, %v1126
    %v1387 = vpack.c.b16 %v1131, %v1127
    %v1388 = vpack.c.b16 %v1132, %v1128
    %v1389 = vpack.c.b16 %v1137, %v1133
    %v1390 = vpack.c.b16 %v1138, %v1134
    %v1391 = vpack.c.b16 %v1139, %v1135
    %v1392 = vpack.c.b16 %v1140, %v1136
    %v1393 = vpack.c.b16 %v1145, %v1141
    %v1394 = vpack.c.b16 %v1146, %v1142
    %v1395 = vpack.c.b16 %v1147, %v1143
    %v1396 = vpack.c.b16 %v1148, %v1144
    %v1397 = vpack.c.b16 %v1153, %v1149
    %v1398 = vpack.c.b16 %v1154, %v1150
    %v1399 = vpack.c.b16 %v1155, %v1151
    %v1400 = vpack.c.b16 %v1156, %v1152
    %v1401 = vpack.c.b16 %v1161, %v1157
    %v1402 = vpack.c.b16 %v1162, %v1158
    %v1403 = vpack.c.b16 %v1163, %v1159
    %v1404 = vpack.c.b16 %v1164, %v1160
    %v1405 = vpack.c.b16 %v1169, %v1165
    %v1406 = vpack.c.b16 %v1170, %v1166
    %v1407 = vpack.c.b16 %v1171, %v1167
    %v1408 = vpack.c.b16 %v1172, %v1168
    %v1409 = vpack.c.b16 %v1177, %v1173
    %v1410 = vpack.c.b16 %v1178, %v1174
    %v1411 = vpack.c.b16 %v1179, %v1175
    %v1412 = vpack.c.b16 %v1180, %v1176
    %v1413 = vpack.c.b16 %v1185, %v1181
    %v1414 = vpack.c.b16 %v1186, %v1182
    %v1415 = vpack.c.b16 %v1187, %v1183
    %v1416 = vpack.c.b16 %v1188, %v1184
    %v1417 = vpack.c.b16 %v1193, %v1189
    %v1418 = vpack.c.b16 %v1194, %v1190
    %v1419 = vpack.c.b16 %v1195, %v1191
    %v1420 = vpack.c.b16 %v1196, %v1192
    %1645 = vmatprep.subr.bf16.mxu0 %v1198
    %1646 = vmatpush1.bf16.msra.mxu0 %v1197
    %1647 = vmatprep.subr.bf16.mxu0 %v1202
    %1648 = vmatpush1.bf16.msra.mxu0 %v1201
    %1649 = vmatprep.subr.bf16.mxu0 %v1206
    %1650 = vmatpush1.bf16.msra.mxu0 %v1205
    %1651 = vmatprep.subr.bf16.mxu0 %v1210
    %1652 = vmatpush1.bf16.msra.mxu0 %v1209
    %1653 = vmatprep.subr.bf16.mxu0 %v1214
    %1654 = vmatpush1.bf16.msra.mxu0 %v1213
    %1655 = vmatprep.subr.bf16.mxu0 %v1218
    %1656 = vmatpush1.bf16.msra.mxu0 %v1217
    %1657 = vmatprep.subr.bf16.mxu0 %v1222
    %1658 = vmatpush1.bf16.msra.mxu0 %v1221
    %1659 = vmatprep.subr.bf16.mxu0 %v1226
    %1660 = vmatpush1.bf16.msra.mxu0 %v1225
    %1661 = vmatprep.subr.bf16.mxu0 %v1230
    %1662 = vmatpush1.bf16.msra.mxu0 %v1229
    %1663 = vmatprep.subr.bf16.mxu0 %v1234
    %1664 = vmatpush1.bf16.msra.mxu0 %v1233
    %1665 = vmatprep.subr.bf16.mxu0 %v1238
    %1666 = vmatpush1.bf16.msra.mxu0 %v1237
    %1667 = vmatprep.subr.bf16.mxu0 %v1242
    %1668 = vmatpush1.bf16.msra.mxu0 %v1241
    %1669 = vmatprep.subr.bf16.mxu0 %v1246
    %1670 = vmatpush1.bf16.msra.mxu0 %v1245
    %1671 = vmatprep.subr.bf16.mxu0 %v1250
    %1672 = vmatpush1.bf16.msra.mxu0 %v1249
    %1673 = vmatprep.subr.bf16.mxu0 %v1254
    %1674 = vmatpush1.bf16.msra.mxu0 %v1253
    %1675 = vmatprep.subr.bf16.mxu0 %v1258
    %1676 = vmatpush1.bf16.msra.mxu0 %v1257
    %1677 = vmatprep.mubr.bf16.mxu0 %v512
    %1678 = vmatmul.mubr.bf16.gmra.mrb[0].mxu0 %v511
    %v1679 = vpop.f32.mrb[0].mxu0
    %v1680 = vadd.f32 %v472, %v1679
    %v1681 = vpop.f32.mrb[0].mxu0
    %v1682 = vadd.f32 %v476, %v1681
    %v1683 = vpop.f32.mrb[0].mxu0
    %v1684 = vadd.f32 %v472, %v1683
    %v1685 = vpop.f32.mrb[0].mxu0
    %v1686 = vadd.f32 %v476, %v1685
    %1687 = vdwg.mxu0
    %1688 = vmatprep.subr.bf16.mxu0 %v1262
    %1689 = vmatpush1.bf16.msra.mxu0 %v1261
    %1690 = vmatprep.subr.bf16.mxu0 %v1266
    %1691 = vmatpush1.bf16.msra.mxu0 %v1265
    %1692 = vmatprep.subr.bf16.mxu0 %v1270
    %1693 = vmatpush1.bf16.msra.mxu0 %v1269
    %1694 = vmatprep.subr.bf16.mxu0 %v1274
    %1695 = vmatpush1.bf16.msra.mxu0 %v1273
    %1696 = vmatprep.subr.bf16.mxu0 %v1278
    %1697 = vmatpush1.bf16.msra.mxu0 %v1277
    %1698 = vmatprep.subr.bf16.mxu0 %v1282
    %1699 = vmatpush1.bf16.msra.mxu0 %v1281
    %1700 = vmatprep.subr.bf16.mxu0 %v1286
    %1701 = vmatpush1.bf16.msra.mxu0 %v1285
    %1702 = vmatprep.subr.bf16.mxu0 %v1290
    %1703 = vmatpush1.bf16.msra.mxu0 %v1289
    %1704 = vmatprep.subr.bf16.mxu0 %v1294
    %1705 = vmatpush1.bf16.msra.mxu0 %v1293
    %1706 = vmatprep.subr.bf16.mxu0 %v1298
    %1707 = vmatpush1.bf16.msra.mxu0 %v1297
    %1708 = vmatprep.subr.bf16.mxu0 %v1302
    %1709 = vmatpush1.bf16.msra.mxu0 %v1301
    %1710 = vmatprep.subr.bf16.mxu0 %v1306
    %1711 = vmatpush1.bf16.msra.mxu0 %v1305
    %1712 = vmatprep.subr.bf16.mxu0 %v1310
    %1713 = vmatpush1.bf16.msra.mxu0 %v1309
    %1714 = vmatprep.subr.bf16.mxu0 %v1314
    %1715 = vmatpush1.bf16.msra.mxu0 %v1313
    %1716 = vmatprep.subr.bf16.mxu0 %v1318
    %1717 = vmatpush1.bf16.msra.mxu0 %v1317
    %1718 = vmatprep.subr.bf16.mxu0 %v1322
    %1719 = vmatpush1.bf16.msra.mxu0 %v1321
    %1720 = vmatprep.mubr.bf16.mxu0 %v514
    %1721 = vmatmul.mubr.bf16.gmra.mrb[0].mxu0 %v513
    %v1722 = vpop.f32.mrb[0].mxu0
    %v1723 = vadd.f32 %v1680, %v1722
    %v1724 = vpop.f32.mrb[0].mxu0
    %v1725 = vadd.f32 %v1682, %v1724
    %v1726 = vpop.f32.mrb[0].mxu0
    %v1727 = vadd.f32 %v1684, %v1726
    %v1728 = vpop.f32.mrb[0].mxu0
    %v1729 = vadd.f32 %v1686, %v1728
    %1730 = vdwg.mxu0
    %1731 = vmatprep.subr.bf16.mxu0 %v1326
    %1732 = vmatpush1.bf16.msra.mxu0 %v1325
    %1733 = vmatprep.subr.bf16.mxu0 %v1330
    %1734 = vmatpush1.bf16.msra.mxu0 %v1329
    %1735 = vmatprep.subr.bf16.mxu0 %v1334
    %1736 = vmatpush1.bf16.msra.mxu0 %v1333
    %1737 = vmatprep.subr.bf16.mxu0 %v1338
    %1738 = vmatpush1.bf16.msra.mxu0 %v1337
    %1739 = vmatprep.subr.bf16.mxu0 %v1342
    %1740 = vmatpush1.bf16.msra.mxu0 %v1341
    %1741 = vmatprep.subr.bf16.mxu0 %v1346
    %1742 = vmatpush1.bf16.msra.mxu0 %v1345
    %1743 = vmatprep.subr.bf16.mxu0 %v1350
    %1744 = vmatpush1.bf16.msra.mxu0 %v1349
    %1745 = vmatprep.subr.bf16.mxu0 %v1354
    %1746 = vmatpush1.bf16.msra.mxu0 %v1353
    %1747 = vmatprep.subr.bf16.mxu0 %v1358
    %1748 = vmatpush1.bf16.msra.mxu0 %v1357
    %1749 = vmatprep.subr.bf16.mxu0 %v1362
    %1750 = vmatpush1.bf16.msra.mxu0 %v1361
    %1751 = vmatprep.subr.bf16.mxu0 %v1366
    %1752 = vmatpush1.bf16.msra.mxu0 %v1365
    %1753 = vmatprep.subr.bf16.mxu0 %v1370
    %1754 = vmatpush1.bf16.msra.mxu0 %v1369
    %1755 = vmatprep.subr.bf16.mxu0 %v1374
    %1756 = vmatpush1.bf16.msra.mxu0 %v1373
    %1757 = vmatprep.subr.bf16.mxu0 %v1378
    %1758 = vmatpush1.bf16.msra.mxu0 %v1377
    %1759 = vmatprep.subr.bf16.mxu0 %v1382
    %1760 = vmatpush1.bf16.msra.mxu0 %v1381
    %1761 = vmatprep.subr.bf16.mxu0 %v1386
    %1762 = vmatpush1.bf16.msra.mxu0 %v1385
    %1763 = vmatprep.mubr.bf16.mxu0 %v516
    %1764 = vmatmul.mubr.bf16.gmra.mrb[0].mxu0 %v515
    %v1765 = vpop.f32.mrb[0].mxu0
    %v1766 = vadd.f32 %v1723, %v1765
    %v1767 = vpop.f32.mrb[0].mxu0
    %v1768 = vadd.f32 %v1725, %v1767
    %v1769 = vpop.f32.mrb[0].mxu0
    %v1770 = vadd.f32 %v1727, %v1769
    %v1771 = vpop.f32.mrb[0].mxu0
    %v1772 = vadd.f32 %v1729, %v1771
    %1773 = vdwg.mxu0
    %1774 = vmatprep.subr.bf16.mxu0 %v1390
    %1775 = vmatpush1.bf16.msra.mxu0 %v1389
    %1776 = vmatprep.subr.bf16.mxu0 %v1394
    %1777 = vmatpush1.bf16.msra.mxu0 %v1393
    %1778 = vmatprep.subr.bf16.mxu0 %v1398
    %1779 = vmatpush1.bf16.msra.mxu0 %v1397
    %1780 = vmatprep.subr.bf16.mxu0 %v1402
    %1781 = vmatpush1.bf16.msra.mxu0 %v1401
    %1782 = vmatprep.subr.bf16.mxu0 %v1406
    %1783 = vmatpush1.bf16.msra.mxu0 %v1405
    %1784 = vmatprep.subr.bf16.mxu0 %v1410
    %1785 = vmatpush1.bf16.msra.mxu0 %v1409
    %1786 = vmatprep.subr.bf16.mxu0 %v1414
    %1787 = vmatpush1.bf16.msra.mxu0 %v1413
    %1788 = vmatprep.subr.bf16.mxu0 %v1418
    %1789 = vmatpush1.bf16.msra.mxu0 %v1417
    %1790 = vmatprep.subr.bf16.mxu0 0
    %1791 = vmatpush1.bf16.msra.mxu0 0
    %1792 = vmatprep.subr.bf16.mxu0 0
    %1793 = vmatpush1.bf16.msra.mxu0 0
    %1794 = vmatprep.subr.bf16.mxu0 0
    %1795 = vmatpush1.bf16.msra.mxu0 0
    %1796 = vmatprep.subr.bf16.mxu0 0
    %1797 = vmatpush1.bf16.msra.mxu0 0
    %1798 = vmatprep.subr.bf16.mxu0 0
    %1799 = vmatpush1.bf16.msra.mxu0 0
    %1800 = vmatprep.subr.bf16.mxu0 0
    %1801 = vmatpush1.bf16.msra.mxu0 0
    %1802 = vmatprep.subr.bf16.mxu0 0
    %1803 = vmatpush1.bf16.msra.mxu0 0
    %1804 = vmatprep.subr.bf16.mxu0 0
    %1805 = vmatpush1.bf16.msra.mxu0 0
    %1806 = vmatprep.mubr.bf16.mxu0 0
    %1807 = vmatmul.mubr.bf16.gmra.mrb[0].mxu0 %v517
    %v1808 = vpop.f32.mrb[0].mxu0
    %v1809 = vadd.f32 %v1766, %v1808
    %v1810 = vpop.f32.mrb[0].mxu0
    %v1811 = vadd.f32 %v1768, %v1810
    %v1812 = vpop.f32.mrb[0].mxu0
    %v1813 = vadd.f32 %v1770, %v1812
    %v1814 = vpop.f32.mrb[0].mxu0
    %v1815 = vadd.f32 %v1772, %v1814
    %1816 = vdwg.mxu0
    %1817 = vmatprep.subr.bf16.mxu0 %v1200
    %1818 = vmatpush1.bf16.msra.mxu0 %v1199
    %1819 = vmatprep.subr.bf16.mxu0 %v1204
    %1820 = vmatpush1.bf16.msra.mxu0 %v1203
    %1821 = vmatprep.subr.bf16.mxu0 %v1208
    %1822 = vmatpush1.bf16.msra.mxu0 %v1207
    %1823 = vmatprep.subr.bf16.mxu0 %v1212
    %1824 = vmatpush1.bf16.msra.mxu0 %v1211
    %1825 = vmatprep.subr.bf16.mxu0 %v1216
    %1826 = vmatpush1.bf16.msra.mxu0 %v1215
    %1827 = vmatprep.subr.bf16.mxu0 %v1220
    %1828 = vmatpush1.bf16.msra.mxu0 %v1219
    %1829 = vmatprep.subr.bf16.mxu0 %v1224
    %1830 = vmatpush1.bf16.msra.mxu0 %v1223
    %1831 = vmatprep.subr.bf16.mxu0 %v1228
    %1832 = vmatpush1.bf16.msra.mxu0 %v1227
    %1833 = vmatprep.subr.bf16.mxu0 %v1232
    %1834 = vmatpush1.bf16.msra.mxu0 %v1231
    %1835 = vmatprep.subr.bf16.mxu0 %v1236
    %1836 = vmatpush1.bf16.msra.mxu0 %v1235
    %1837 = vmatprep.subr.bf16.mxu0 %v1240
    %1838 = vmatpush1.bf16.msra.mxu0 %v1239
    %1839 = vmatprep.subr.bf16.mxu0 %v1244
    %1840 = vmatpush1.bf16.msra.mxu0 %v1243
    %1841 = vmatprep.subr.bf16.mxu0 %v1248
    %1842 = vmatpush1.bf16.msra.mxu0 %v1247
    %1843 = vmatprep.subr.bf16.mxu0 %v1252
    %1844 = vmatpush1.bf16.msra.mxu0 %v1251
    %1845 = vmatprep.subr.bf16.mxu0 %v1256
    %1846 = vmatpush1.bf16.msra.mxu0 %v1255
    %1847 = vmatprep.subr.bf16.mxu0 %v1260
    %1848 = vmatpush1.bf16.msra.mxu0 %v1259
    %1849 = vmatprep.mubr.bf16.mxu0 %v512
    %1850 = vmatmul.mubr.bf16.gmra.mrb[0].mxu0 %v511
    %v1851 = vpop.f32.mrb[0].mxu0
    %v1852 = vadd.f32 %v480, %v1851
    %v1853 = vpop.f32.mrb[0].mxu0
    %v1854 = vadd.f32 %v484, %v1853
    %v1855 = vpop.f32.mrb[0].mxu0
    %v1856 = vadd.f32 %v480, %v1855
    %v1857 = vpop.f32.mrb[0].mxu0
    %v1858 = vadd.f32 %v484, %v1857
    %1859 = vdwg.mxu0
    %1860 = vmatprep.subr.bf16.mxu0 %v1264
    %1861 = vmatpush1.bf16.msra.mxu0 %v1263
    %1862 = vmatprep.subr.bf16.mxu0 %v1268
    %1863 = vmatpush1.bf16.msra.mxu0 %v1267
    %1864 = vmatprep.subr.bf16.mxu0 %v1272
    %1865 = vmatpush1.bf16.msra.mxu0 %v1271
    %1866 = vmatprep.subr.bf16.mxu0 %v1276
    %1867 = vmatpush1.bf16.msra.mxu0 %v1275
    %1868 = vmatprep.subr.bf16.mxu0 %v1280
    %1869 = vmatpush1.bf16.msra.mxu0 %v1279
    %1870 = vmatprep.subr.bf16.mxu0 %v1284
    %1871 = vmatpush1.bf16.msra.mxu0 %v1283
    %1872 = vmatprep.subr.bf16.mxu0 %v1288
    %1873 = vmatpush1.bf16.msra.mxu0 %v1287
    %1874 = vmatprep.subr.bf16.mxu0 %v1292
    %1875 = vmatpush1.bf16.msra.mxu0 %v1291
    %1876 = vmatprep.subr.bf16.mxu0 %v1296
    %1877 = vmatpush1.bf16.msra.mxu0 %v1295
    %1878 = vmatprep.subr.bf16.mxu0 %v1300
    %1879 = vmatpush1.bf16.msra.mxu0 %v1299
    %1880 = vmatprep.subr.bf16.mxu0 %v1304
    %1881 = vmatpush1.bf16.msra.mxu0 %v1303
    %1882 = vmatprep.subr.bf16.mxu0 %v1308
    %1883 = vmatpush1.bf16.msra.mxu0 %v1307
    %1884 = vmatprep.subr.bf16.mxu0 %v1312
    %1885 = vmatpush1.bf16.msra.mxu0 %v1311
    %1886 = vmatprep.subr.bf16.mxu0 %v1316
    %1887 = vmatpush1.bf16.msra.mxu0 %v1315
    %1888 = vmatprep.subr.bf16.mxu0 %v1320
    %1889 = vmatpush1.bf16.msra.mxu0 %v1319
    %1890 = vmatprep.subr.bf16.mxu0 %v1324
    %1891 = vmatpush1.bf16.msra.mxu0 %v1323
    %1892 = vmatprep.mubr.bf16.mxu0 %v514
    %1893 = vmatmul.mubr.bf16.gmra.mrb[0].mxu0 %v513
    %v1894 = vpop.f32.mrb[0].mxu0
    %v1895 = vadd.f32 %v1852, %v1894
    %v1896 = vpop.f32.mrb[0].mxu0
    %v1897 = vadd.f32 %v1854, %v1896
    %v1898 = vpop.f32.mrb[0].mxu0
    %v1899 = vadd.f32 %v1856, %v1898
    %v1900 = vpop.f32.mrb[0].mxu0
    %v1901 = vadd.f32 %v1858, %v1900
    %1902 = vdwg.mxu0
    %1903 = vmatprep.subr.bf16.mxu0 %v1328
    %1904 = vmatpush1.bf16.msra.mxu0 %v1327
    %1905 = vmatprep.subr.bf16.mxu0 %v1332
    %1906 = vmatpush1.bf16.msra.mxu0 %v1331
    %1907 = vmatprep.subr.bf16.mxu0 %v1336
    %1908 = vmatpush1.bf16.msra.mxu0 %v1335
    %1909 = vmatprep.subr.bf16.mxu0 %v1340
    %1910 = vmatpush1.bf16.msra.mxu0 %v1339
    %1911 = vmatprep.subr.bf16.mxu0 %v1344
    %1912 = vmatpush1.bf16.msra.mxu0 %v1343
    %1913 = vmatprep.subr.bf16.mxu0 %v1348
    %1914 = vmatpush1.bf16.msra.mxu0 %v1347
    %1915 = vmatprep.subr.bf16.mxu0 %v1352
    %1916 = vmatpush1.bf16.msra.mxu0 %v1351
    %1917 = vmatprep.subr.bf16.mxu0 %v1356
    %1918 = vmatpush1.bf16.msra.mxu0 %v1355
    %1919 = vmatprep.subr.bf16.mxu0 %v1360
    %1920 = vmatpush1.bf16.msra.mxu0 %v1359
    %1921 = vmatprep.subr.bf16.mxu0 %v1364
    %1922 = vmatpush1.bf16.msra.mxu0 %v1363
    %1923 = vmatprep.subr.bf16.mxu0 %v1368
    %1924 = vmatpush1.bf16.msra.mxu0 %v1367
    %1925 = vmatprep.subr.bf16.mxu0 %v1372
    %1926 = vmatpush1.bf16.msra.mxu0 %v1371
    %1927 = vmatprep.subr.bf16.mxu0 %v1376
    %1928 = vmatpush1.bf16.msra.mxu0 %v1375
    %1929 = vmatprep.subr.bf16.mxu0 %v1380
    %1930 = vmatpush1.bf16.msra.mxu0 %v1379
    %1931 = vmatprep.subr.bf16.mxu0 %v1384
    %1932 = vmatpush1.bf16.msra.mxu0 %v1383
    %1933 = vmatprep.subr.bf16.mxu0 %v1388
    %1934 = vmatpush1.bf16.msra.mxu0 %v1387
    %1935 = vmatprep.mubr.bf16.mxu0 %v516
    %1936 = vmatmul.mubr.bf16.gmra.mrb[0].mxu0 %v515
    %v1937 = vpop.f32.mrb[0].mxu0
    %v1938 = vadd.f32 %v1895, %v1937
    %v1939 = vpop.f32.mrb[0].mxu0
    %v1940 = vadd.f32 %v1897, %v1939
    %v1941 = vpop.f32.mrb[0].mxu0
    %v1942 = vadd.f32 %v1899, %v1941
    %v1943 = vpop.f32.mrb[0].mxu0
    %v1944 = vadd.f32 %v1901, %v1943
    %1945 = vdwg.mxu0
    %1946 = vmatprep.subr.bf16.mxu0 %v1392
    %1947 = vmatpush1.bf16.msra.mxu0 %v1391
    %1948 = vmatprep.subr.bf16.mxu0 %v1396
    %1949 = vmatpush1.bf16.msra.mxu0 %v1395
    %1950 = vmatprep.subr.bf16.mxu0 %v1400
    %1951 = vmatpush1.bf16.msra.mxu0 %v1399
    %1952 = vmatprep.subr.bf16.mxu0 %v1404
    %1953 = vmatpush1.bf16.msra.mxu0 %v1403
    %1954 = vmatprep.subr.bf16.mxu0 %v1408
    %1955 = vmatpush1.bf16.msra.mxu0 %v1407
    %1956 = vmatprep.subr.bf16.mxu0 %v1412
    %1957 = vmatpush1.bf16.msra.mxu0 %v1411
    %1958 = vmatprep.subr.bf16.mxu0 %v1416
    %1959 = vmatpush1.bf16.msra.mxu0 %v1415
    %1960 = vmatprep.subr.bf16.mxu0 %v1420
    %1961 = vmatpush1.bf16.msra.mxu0 %v1419
    %1962 = vmatprep.subr.bf16.mxu0 0
    %1963 = vmatpush1.bf16.msra.mxu0 0
    %1964 = vmatprep.subr.bf16.mxu0 0
    %1965 = vmatpush1.bf16.msra.mxu0 0
    %1966 = vmatprep.subr.bf16.mxu0 0
    %1967 = vmatpush1.bf16.msra.mxu0 0
    %1968 = vmatprep.subr.bf16.mxu0 0
    %1969 = vmatpush1.bf16.msra.mxu0 0
    %1970 = vmatprep.subr.bf16.mxu0 0
    %1971 = vmatpush1.bf16.msra.mxu0 0
    %1972 = vmatprep.subr.bf16.mxu0 0
    %1973 = vmatpush1.bf16.msra.mxu0 0
    %1974 = vmatprep.subr.bf16.mxu0 0
    %1975 = vmatpush1.bf16.msra.mxu0 0
    %1976 = vmatprep.subr.bf16.mxu0 0
    %1977 = vmatpush1.bf16.msra.mxu0 0
    %1978 = vmatprep.mubr.bf16.mxu0 0
    %1979 = vmatmul.mubr.bf16.gmra.mrb[0].mxu0 %v517
    %v1980 = vpop.f32.mrb[0].mxu0
    %v1981 = vadd.f32 %v1938, %v1980
    %v1982 = vpop.f32.mrb[0].mxu0
    %v1983 = vadd.f32 %v1940, %v1982
    %v1984 = vpop.f32.mrb[0].mxu0
    %v1985 = vadd.f32 %v1942, %v1984
    %v1986 = vpop.f32.mrb[0].mxu0
    %v1987 = vadd.f32 %v1944, %v1986
    %1988 = vdwg.mxu0
    %v1989 = vxor.u32 %v1809, 2147483648
    %v1990 = vxor.u32 %v1811, 2147483648
    %v1991 = vxor.u32 %v1981, 2147483648
    %v1992 = vxor.u32 %v1983, 2147483648
    %v1993 = vxor.u32 %v1813, 2147483648
    %v1994 = vxor.u32 %v1815, 2147483648
    %v1995 = vxor.u32 %v1985, 2147483648
    %v1996 = vxor.u32 %v1987, 2147483648
    %v1997 = vmul.f32 %v1989, 1.442695
    %v1998 = vpow.pop %v1997
    %v1999 = vmul.f32 %v1990, 1.442695
    %v2000 = vpow.pop %v1999
    %v2001 = vmul.f32 %v1991, 1.442695
    %v2002 = vpow.pop %v2001
    %v2003 = vmul.f32 %v1992, 1.442695
    %v2004 = vpow.pop %v2003
    %v2005 = vmul.f32 %v1993, 1.442695
    %v2006 = vpow.pop %v2005
    %v2007 = vmul.f32 %v1994, 1.442695
    %v2008 = vpow.pop %v2007
    %v2009 = vmul.f32 %v1995, 1.442695
    %v2010 = vpow.pop %v2009
    %v2011 = vmul.f32 %v1996, 1.442695
    %v2012 = vpow.pop %v2011
    %v2013 = vadd.f32 %v1998, 1.0
    %v2014 = vadd.f32 %v2000, 1.0
    %v2015 = vadd.f32 %v2002, 1.0
    %v2016 = vadd.f32 %v2004, 1.0
    %v2017 = vadd.f32 %v2006, 1.0
    %v2018 = vadd.f32 %v2008, 1.0
    %v2019 = vadd.f32 %v2010, 1.0
    %v2020 = vadd.f32 %v2012, 1.0
    %v2021 = vrcp.pop %v2013
    %v2022 = vmul.f32 1.0, %v2021
    %v2023 = vrcp.pop %v2014
    %v2024 = vmul.f32 1.0, %v2023
    %v2025 = vrcp.pop %v2015
    %v2026 = vmul.f32 1.0, %v2025
    %v2027 = vrcp.pop %v2016
    %v2028 = vmul.f32 1.0, %v2027
    %v2029 = vrcp.pop %v2017
    %v2030 = vmul.f32 1.0, %v2029
    %v2031 = vrcp.pop %v2018
    %v2032 = vmul.f32 1.0, %v2031
    %v2033 = vrcp.pop %v2019
    %v2034 = vmul.f32 1.0, %v2033
    %v2035 = vrcp.pop %v2020
    %v2036 = vmul.f32 1.0, %v2035
    %v2037 = vpack.c.bf16 %v2030, %v2022
    %v2038 = vpack.c.bf16 %v2032, %v2024
    %v2039 = vpack.c.bf16 %v2034, %v2026
    %v2040 = vpack.c.bf16 %v2036, %v2028
    %v2041 = vld [vmem:[#allocation6] sm:$0xff]
    %v2042 = vld [vmem:[#allocation6 + $0x8] sm:$0xf]
    %v2043 = vld [vmem:[#allocation6 + $0xc] sm:$0xff]
    %v2044 = vld [vmem:[#allocation6 + $0x14] sm:$0xf]
    %v2045 = vld [vmem:[#allocation6 + $0x18] sm:$0xff]
    %v2046 = vld [vmem:[#allocation6 + $0x20] sm:$0xf]
    %v2047 = vld [vmem:[#allocation6 + $0x24] sm:$0xff]
    %v2048 = vld [vmem:[#allocation6 + $0x2c] sm:$0xf]
    %v2049 = vld [vmem:[#allocation6 + $0x30] sm:$0xff]
    %v2050 = vld [vmem:[#allocation6 + $0x38] sm:$0xf]
    %v2051 = vld [vmem:[#allocation6 + $0x3c] sm:$0xff]
    %v2052 = vld [vmem:[#allocation6 + $0x44] sm:$0xf]
    %v2053 = vld [vmem:[#allocation6 + $0x48] sm:$0xff]
    %v2054 = vld [vmem:[#allocation6 + $0x50] sm:$0xf]
    %v2055 = vld [vmem:[#allocation6 + $0x54] sm:$0xff]
    %v2056 = vld [vmem:[#allocation6 + $0x5c] sm:$0xf]
    %v2057 = vld [vmem:[#allocation6 + $0x60] sm:$0xff]
    %v2058 = vld [vmem:[#allocation6 + $0x68] sm:$0xf]
    %v2059 = vld [vmem:[#allocation6 + $0x6c] sm:$0xff]
    %v2060 = vld [vmem:[#allocation6 + $0x74] sm:$0xf]
    %v2061 = vld [vmem:[#allocation6 + $0x78] sm:$0xff]
    %v2062 = vld [vmem:[#allocation6 + $0x80] sm:$0xf]
    %v2063 = vld [vmem:[#allocation6 + $0x84] sm:$0xff]
    %v2064 = vld [vmem:[#allocation6 + $0x8c] sm:$0xf]
    %v2065 = vld [vmem:[#allocation6 + $0x90] sm:$0xff]
    %v2066 = vld [vmem:[#allocation6 + $0x98] sm:$0xf]
    %v2067 = vld [vmem:[#allocation6 + $0x9c] sm:$0xff]
    %v2068 = vld [vmem:[#allocation6 + $0xa4] sm:$0xf]
    %v2069 = vld [vmem:[#allocation6 + $0xa8] sm:$0xff]
    %v2070 = vld [vmem:[#allocation6 + $0xb0] sm:$0xf]
    %v2071 = vld [vmem:[#allocation6 + $0xb4] sm:$0xff]
    %v2072 = vld [vmem:[#allocation6 + $0xbc] sm:$0xf]
    %v2073 = vld [vmem:[#allocation6 + $0xc0] sm:$0xff]
    %v2074 = vld [vmem:[#allocation6 + $0xc8] sm:$0xf]
    %v2075 = vld [vmem:[#allocation6 + $0xcc] sm:$0xff]
    %v2076 = vld [vmem:[#allocation6 + $0xd4] sm:$0xf]
    %v2077 = vld [vmem:[#allocation6 + $0xd8] sm:$0xff]
    %v2078 = vld [vmem:[#allocation6 + $0xe0] sm:$0xf]
    %v2079 = vld [vmem:[#allocation6 + $0xe4] sm:$0xff]
    %v2080 = vld [vmem:[#allocation6 + $0xec] sm:$0xf]
    %v2081 = vld [vmem:[#allocation6 + $0xf0] sm:$0xff]
    %v2082 = vld [vmem:[#allocation6 + $0xf8] sm:$0xf]
    %v2083 = vld [vmem:[#allocation6 + $0xfc] sm:$0xff]
    %v2084 = vld [vmem:[#allocation6 + $0x104] sm:$0xf]
    %v2085 = vld [vmem:[#allocation6 + $0x108] sm:$0xff]
    %v2086 = vld [vmem:[#allocation6 + $0x110] sm:$0xf]
    %v2087 = vld [vmem:[#allocation6 + $0x114] sm:$0xff]
    %v2088 = vld [vmem:[#allocation6 + $0x11c] sm:$0xf]
    %v2089 = vld [vmem:[#allocation6 + $0x120] sm:$0xff]
    %v2090 = vld [vmem:[#allocation6 + $0x128] sm:$0xf]
    %v2091 = vld [vmem:[#allocation6 + $0x12c] sm:$0xff]
    %v2092 = vld [vmem:[#allocation6 + $0x134] sm:$0xf]
    %v2093 = vld [vmem:[#allocation6 + $0x138] sm:$0xff]
    %v2094 = vld [vmem:[#allocation6 + $0x140] sm:$0xf]
    %v2095 = vld [vmem:[#allocation6 + $0x144] sm:$0xff]
    %v2096 = vld [vmem:[#allocation6 + $0x14c] sm:$0xf]
    %v2097 = vld [vmem:[#allocation6 + $0x150] sm:$0xff]
    %v2098 = vld [vmem:[#allocation6 + $0x158] sm:$0xf]
    %v2099 = vld [vmem:[#allocation6 + $0x15c] sm:$0xff]
    %v2100 = vld [vmem:[#allocation6 + $0x164] sm:$0xf]
    %v2101 = vld [vmem:[#allocation6 + $0x168] sm:$0xff]
    %v2102 = vld [vmem:[#allocation6 + $0x170] sm:$0xf]
    %v2103 = vld [vmem:[#allocation6 + $0x174] sm:$0xff]
    %v2104 = vld [vmem:[#allocation6 + $0x17c] sm:$0xf]
    %v2105 = vld [vmem:[#allocation6 + $0x180] sm:$0xff]
    %v2106 = vld [vmem:[#allocation6 + $0x188] sm:$0xf]
    %v2107 = vld [vmem:[#allocation6 + $0x18c] sm:$0xff]
    %v2108 = vld [vmem:[#allocation6 + $0x194] sm:$0xf]
    %v2109 = vld [vmem:[#allocation6 + $0x198] sm:$0xff]
    %v2110 = vld [vmem:[#allocation6 + $0x1a0] sm:$0xf]
    %v2111 = vld [vmem:[#allocation6 + $0x1a4] sm:$0xff]
    %v2112 = vld [vmem:[#allocation6 + $0x1ac] sm:$0xf]
    %v2113 = vld [vmem:[#allocation6 + $0x1b0] sm:$0xff]
    %v2114 = vld [vmem:[#allocation6 + $0x1b8] sm:$0xf]
    %v2115 = vld [vmem:[#allocation6 + $0x1bc] sm:$0xff]
    %v2116 = vld [vmem:[#allocation6 + $0x1c4] sm:$0xf]
    %v2117 = vld [vmem:[#allocation6 + $0x1c8] sm:$0xff]
    %v2118 = vld [vmem:[#allocation6 + $0x1d0] sm:$0xf]
    %v2119 = vld [vmem:[#allocation6 + $0x1d4] sm:$0xff]
    %v2120 = vld [vmem:[#allocation6 + $0x1dc] sm:$0xf]
    %v2121 = vld [vmem:[#allocation6 + $0x1e0] sm:$0xff]
    %v2122 = vld [vmem:[#allocation6 + $0x1e8] sm:$0xf]
    %v2123 = vld [vmem:[#allocation6 + $0x1ec] sm:$0xff]
    %v2124 = vld [vmem:[#allocation6 + $0x1f4] sm:$0xf]
    %v2125 = vld [vmem:[#allocation6 + $0x1f8] sm:$0xff]
    %v2126 = vld [vmem:[#allocation6 + $0x200] sm:$0xf]
    %v2127 = vld [vmem:[#allocation6 + $0x204] sm:$0xff]
    %v2128 = vld [vmem:[#allocation6 + $0x20c] sm:$0xf]
    %v2129 = vld [vmem:[#allocation6 + $0x210] sm:$0xff]
    %v2130 = vld [vmem:[#allocation6 + $0x218] sm:$0xf]
    %v2131 = vld [vmem:[#allocation6 + $0x21c] sm:$0xff]
    %v2132 = vld [vmem:[#allocation6 + $0x224] sm:$0xf]
    %v2133 = vld [vmem:[#allocation6 + $0x228] sm:$0xff]
    %v2134 = vld [vmem:[#allocation6 + $0x230] sm:$0xf]
    %v2135 = vld [vmem:[#allocation6 + $0x234] sm:$0xff]
    %v2136 = vld [vmem:[#allocation6 + $0x23c] sm:$0xf]
    %v2137 = vld [vmem:[#allocation6 + $0x240] sm:$0xff]
    %v2138 = vld [vmem:[#allocation6 + $0x248] sm:$0xf]
    %v2139 = vld [vmem:[#allocation6 + $0x24c] sm:$0xff]
    %v2140 = vld [vmem:[#allocation6 + $0x254] sm:$0xf]
    %v2141 = vld [vmem:[#allocation6 + $0x258] sm:$0xff]
    %v2142 = vld [vmem:[#allocation6 + $0x260] sm:$0xf]
    %v2143 = vld [vmem:[#allocation6 + $0x264] sm:$0xff]
    %v2144 = vld [vmem:[#allocation6 + $0x26c] sm:$0xf]
    %v2145 = vld [vmem:[#allocation6 + $0x270] sm:$0xff]
    %v2146 = vld [vmem:[#allocation6 + $0x278] sm:$0xf]
    %v2147 = vld [vmem:[#allocation6 + $0x27c] sm:$0xff]
    %v2148 = vld [vmem:[#allocation6 + $0x284] sm:$0xf]
    %v2149 = vld [vmem:[#allocation6 + $0x288] sm:$0xff]
    %v2150 = vld [vmem:[#allocation6 + $0x290] sm:$0xf]
    %v2151 = vld [vmem:[#allocation6 + $0x294] sm:$0xff]
    %v2152 = vld [vmem:[#allocation6 + $0x29c] sm:$0xf]
    %v2153 = vld [vmem:[#allocation6 + $0x2a0] sm:$0xff]
    %v2154 = vld [vmem:[#allocation6 + $0x2a8] sm:$0xf]
    %v2155 = vld [vmem:[#allocation6 + $0x2ac] sm:$0xff]
    %v2156 = vld [vmem:[#allocation6 + $0x2b4] sm:$0xf]
    %v2157 = vld [vmem:[#allocation6 + $0x2b8] sm:$0xff]
    %v2158 = vld [vmem:[#allocation6 + $0x2c0] sm:$0xf]
    %v2159 = vld [vmem:[#allocation6 + $0x2c4] sm:$0xff]
    %v2160 = vld [vmem:[#allocation6 + $0x2cc] sm:$0xf]
    %v2161 = vld [vmem:[#allocation6 + $0x2d0] sm:$0xff]
    %v2162 = vld [vmem:[#allocation6 + $0x2d8] sm:$0xf]
    %v2163 = vld [vmem:[#allocation6 + $0x2dc] sm:$0xff]
    %v2164 = vld [vmem:[#allocation6 + $0x2e4] sm:$0xf]
    %v2165 = vld [vmem:[#allocation6 + $0x2e8] sm:$0xff]
    %v2166 = vld [vmem:[#allocation6 + $0x2f0] sm:$0xf]
    %v2167 = vld [vmem:[#allocation6 + $0x2f4] sm:$0xff]
    %v2168 = vld [vmem:[#allocation6 + $0x2fc] sm:$0xf]
    %v2169 = vld [vmem:[%s4] sm:$0x7]
    %v2171 = vlaneseq
    %v2172 = vshrl.u32 %v2171, 7
    %v2173 = vsub.s32 0, %v2172
    %v2174 = vrot.slane %v2169, %v2173
    %v2175 = vlaneseq
    %v2176 = vshrl.u32 %v2175, 7
    %v2177 = vsub.s32 1, %v2176
    %v2178 = vrot.slane %v2169, %v2177
    %v2179 = vlaneseq
    %v2180 = vshrl.u32 %v2179, 7
    %v2181 = vsub.s32 2, %v2180
    %v2182 = vrot.slane %v2169, %v2181
    %v2314 = vunpack.c.l.b16 %v2041
    %v2315 = vunpack.c.h.b16 %v2041
    %v2316 = vunpack.c.l.b16 %v2042
    %v2317 = vunpack.c.l.b16 %v2043
    %v2318 = vunpack.c.h.b16 %v2043
    %v2319 = vunpack.c.l.b16 %v2044
    %v2320 = vunpack.c.l.b16 %v2045
    %v2321 = vunpack.c.h.b16 %v2045
    %v2322 = vunpack.c.l.b16 %v2046
    %v2323 = vunpack.c.l.b16 %v2047
    %v2324 = vunpack.c.h.b16 %v2047
    %v2325 = vunpack.c.l.b16 %v2048
    %v2326 = vunpack.c.l.b16 %v2049
    %v2327 = vunpack.c.h.b16 %v2049
    %v2328 = vunpack.c.l.b16 %v2050
    %v2329 = vunpack.c.l.b16 %v2051
    %v2330 = vunpack.c.h.b16 %v2051
    %v2331 = vunpack.c.l.b16 %v2052
    %v2332 = vunpack.c.l.b16 %v2053
    %v2333 = vunpack.c.h.b16 %v2053
    %v2334 = vunpack.c.l.b16 %v2054
    %v2335 = vunpack.c.l.b16 %v2055
    %v2336 = vunpack.c.h.b16 %v2055
    %v2337 = vunpack.c.l.b16 %v2056
    %v2338 = vunpack.c.l.b16 %v2057
    %v2339 = vunpack.c.h.b16 %v2057
    %v2340 = vunpack.c.l.b16 %v2058
    %v2341 = vunpack.c.l.b16 %v2059
    %v2342 = vunpack.c.h.b16 %v2059
    %v2343 = vunpack.c.l.b16 %v2060
    %v2344 = vunpack.c.l.b16 %v2061
    %v2345 = vunpack.c.h.b16 %v2061
    %v2346 = vunpack.c.l.b16 %v2062
    %v2347 = vunpack.c.l.b16 %v2063
    %v2348 = vunpack.c.h.b16 %v2063
    %v2349 = vunpack.c.l.b16 %v2064
    %v2350 = vunpack.c.l.b16 %v2065
    %v2351 = vunpack.c.h.b16 %v2065
    %v2352 = vunpack.c.l.b16 %v2066
    %v2353 = vunpack.c.l.b16 %v2067
    %v2354 = vunpack.c.h.b16 %v2067
    %v2355 = vunpack.c.l.b16 %v2068
    %v2356 = vunpack.c.l.b16 %v2069
    %v2357 = vunpack.c.h.b16 %v2069
    %v2358 = vunpack.c.l.b16 %v2070
    %v2359 = vunpack.c.l.b16 %v2071
    %v2360 = vunpack.c.h.b16 %v2071
    %v2361 = vunpack.c.l.b16 %v2072
    %v2362 = vunpack.c.l.b16 %v2073
    %v2363 = vunpack.c.h.b16 %v2073
    %v2364 = vunpack.c.l.b16 %v2074
    %v2365 = vunpack.c.l.b16 %v2075
    %v2366 = vunpack.c.h.b16 %v2075
    %v2367 = vunpack.c.l.b16 %v2076
    %v2368 = vunpack.c.l.b16 %v2077
    %v2369 = vunpack.c.h.b16 %v2077
    %v2370 = vunpack.c.l.b16 %v2078
    %v2371 = vunpack.c.l.b16 %v2079
    %v2372 = vunpack.c.h.b16 %v2079
    %v2373 = vunpack.c.l.b16 %v2080
    %v2374 = vunpack.c.l.b16 %v2081
    %v2375 = vunpack.c.h.b16 %v2081
    %v2376 = vunpack.c.l.b16 %v2082
    %v2377 = vunpack.c.l.b16 %v2083
    %v2378 = vunpack.c.h.b16 %v2083
    %v2379 = vunpack.c.l.b16 %v2084
    %v2380 = vunpack.c.l.b16 %v2085
    %v2381 = vunpack.c.h.b16 %v2085
    %v2382 = vunpack.c.l.b16 %v2086
    %v2383 = vunpack.c.l.b16 %v2087
    %v2384 = vunpack.c.h.b16 %v2087
    %v2385 = vunpack.c.l.b16 %v2088
    %v2386 = vunpack.c.l.b16 %v2089
    %v2387 = vunpack.c.h.b16 %v2089
    %v2388 = vunpack.c.l.b16 %v2090
    %v2389 = vunpack.c.l.b16 %v2091
    %v2390 = vunpack.c.h.b16 %v2091
    %v2391 = vunpack.c.l.b16 %v2092
    %v2392 = vunpack.c.l.b16 %v2093
    %v2393 = vunpack.c.h.b16 %v2093
    %v2394 = vunpack.c.l.b16 %v2094
    %v2395 = vunpack.c.l.b16 %v2095
    %v2396 = vunpack.c.h.b16 %v2095
    %v2397 = vunpack.c.l.b16 %v2096
    %v2398 = vunpack.c.l.b16 %v2097
    %v2399 = vunpack.c.h.b16 %v2097
    %v2400 = vunpack.c.l.b16 %v2098
    %v2401 = vunpack.c.l.b16 %v2099
    %v2402 = vunpack.c.h.b16 %v2099
    %v2403 = vunpack.c.l.b16 %v2100
    %v2404 = vunpack.c.l.b16 %v2101
    %v2405 = vunpack.c.h.b16 %v2101
    %v2406 = vunpack.c.l.b16 %v2102
    %v2407 = vunpack.c.l.b16 %v2103
    %v2408 = vunpack.c.h.b16 %v2103
    %v2409 = vunpack.c.l.b16 %v2104
    %v2410 = vunpack.c.l.b16 %v2105
    %v2411 = vunpack.c.h.b16 %v2105
    %v2412 = vunpack.c.l.b16 %v2106
    %v2413 = vunpack.c.l.b16 %v2107
    %v2414 = vunpack.c.h.b16 %v2107
    %v2415 = vunpack.c.l.b16 %v2108
    %v2416 = vunpack.c.l.b16 %v2109
    %v2417 = vunpack.c.h.b16 %v2109
    %v2418 = vunpack.c.l.b16 %v2110
    %v2419 = vunpack.c.l.b16 %v2111
    %v2420 = vunpack.c.h.b16 %v2111
    %v2421 = vunpack.c.l.b16 %v2112
    %v2422 = vunpack.c.l.b16 %v2113
    %v2423 = vunpack.c.h.b16 %v2113
    %v2424 = vunpack.c.l.b16 %v2114
    %v2425 = vunpack.c.l.b16 %v2115
    %v2426 = vunpack.c.h.b16 %v2115
    %v2427 = vunpack.c.l.b16 %v2116
    %v2428 = vunpack.c.l.b16 %v2117
    %v2429 = vunpack.c.h.b16 %v2117
    %v2430 = vunpack.c.l.b16 %v2118
    %v2431 = vunpack.c.l.b16 %v2119
    %v2432 = vunpack.c.h.b16 %v2119
    %v2433 = vunpack.c.l.b16 %v2120
    %v2434 = vunpack.c.l.b16 %v2121
    %v2435 = vunpack.c.h.b16 %v2121
    %v2436 = vunpack.c.l.b16 %v2122
    %v2437 = vunpack.c.l.b16 %v2123
    %v2438 = vunpack.c.h.b16 %v2123
    %v2439 = vunpack.c.l.b16 %v2124
    %v2440 = vunpack.c.l.b16 %v2125
    %v2441 = vunpack.c.h.b16 %v2125
    %v2442 = vunpack.c.l.b16 %v2126
    %v2443 = vunpack.c.l.b16 %v2127
    %v2444 = vunpack.c.h.b16 %v2127
    %v2445 = vunpack.c.l.b16 %v2128
    %v2446 = vunpack.c.l.b16 %v2129
    %v2447 = vunpack.c.h.b16 %v2129
    %v2448 = vunpack.c.l.b16 %v2130
    %v2449 = vunpack.c.l.b16 %v2131
    %v2450 = vunpack.c.h.b16 %v2131
    %v2451 = vunpack.c.l.b16 %v2132
    %v2452 = vunpack.c.l.b16 %v2133
    %v2453 = vunpack.c.h.b16 %v2133
    %v2454 = vunpack.c.l.b16 %v2134
    %v2455 = vunpack.c.l.b16 %v2135
    %v2456 = vunpack.c.h.b16 %v2135
    %v2457 = vunpack.c.l.b16 %v2136
    %v2458 = vunpack.c.l.b16 %v2137
    %v2459 = vunpack.c.h.b16 %v2137
    %v2460 = vunpack.c.l.b16 %v2138
    %v2461 = vunpack.c.l.b16 %v2139
    %v2462 = vunpack.c.h.b16 %v2139
    %v2463 = vunpack.c.l.b16 %v2140
    %v2464 = vunpack.c.l.b16 %v2141
    %v2465 = vunpack.c.h.b16 %v2141
    %v2466 = vunpack.c.l.b16 %v2142
    %v2467 = vunpack.c.l.b16 %v2143
    %v2468 = vunpack.c.h.b16 %v2143
    %v2469 = vunpack.c.l.b16 %v2144
    %v2470 = vunpack.c.l.b16 %v2145
    %v2471 = vunpack.c.h.b16 %v2145
    %v2472 = vunpack.c.l.b16 %v2146
    %v2473 = vunpack.c.l.b16 %v2147
    %v2474 = vunpack.c.h.b16 %v2147
    %v2475 = vunpack.c.l.b16 %v2148
    %v2476 = vunpack.c.l.b16 %v2149
    %v2477 = vunpack.c.h.b16 %v2149
    %v2478 = vunpack.c.l.b16 %v2150
    %v2479 = vunpack.c.l.b16 %v2151
    %v2480 = vunpack.c.h.b16 %v2151
    %v2481 = vunpack.c.l.b16 %v2152
    %v2482 = vunpack.c.l.b16 %v2153
    %v2483 = vunpack.c.h.b16 %v2153
    %v2484 = vunpack.c.l.b16 %v2154
    %v2485 = vunpack.c.l.b16 %v2155
    %v2486 = vunpack.c.h.b16 %v2155
    %v2487 = vunpack.c.l.b16 %v2156
    %v2488 = vunpack.c.l.b16 %v2157
    %v2489 = vunpack.c.h.b16 %v2157
    %v2490 = vunpack.c.l.b16 %v2158
    %v2491 = vunpack.c.l.b16 %v2159
    %v2492 = vunpack.c.h.b16 %v2159
    %v2493 = vunpack.c.l.b16 %v2160
    %v2494 = vunpack.c.l.b16 %v2161
    %v2495 = vunpack.c.h.b16 %v2161
    %v2496 = vunpack.c.l.b16 %v2162
    %v2497 = vunpack.c.l.b16 %v2163
    %v2498 = vunpack.c.h.b16 %v2163
    %v2499 = vunpack.c.l.b16 %v2164
    %v2500 = vunpack.c.l.b16 %v2165
    %v2501 = vunpack.c.h.b16 %v2165
    %v2502 = vunpack.c.l.b16 %v2166
    %v2503 = vunpack.c.l.b16 %v2167
    %v2504 = vunpack.c.h.b16 %v2167
    %v2505 = vunpack.c.l.b16 %v2168
    %v2506 = vpack.c.b16 %v2317, %v2314
    %v2507 = vpack.c.b16 %v2318, %v2315
    %v2508 = vpack.c.b16 %v2319, %v2316
    %v2509 = vpack.c.b16 %v2323, %v2320
    %v2510 = vpack.c.b16 %v2324, %v2321
    %v2511 = vpack.c.b16 %v2325, %v2322
    %v2512 = vpack.c.b16 %v2329, %v2326
    %v2513 = vpack.c.b16 %v2330, %v2327
    %v2514 = vpack.c.b16 %v2331, %v2328
    %v2515 = vpack.c.b16 %v2335, %v2332
    %v2516 = vpack.c.b16 %v2336, %v2333
    %v2517 = vpack.c.b16 %v2337, %v2334
    %v2518 = vpack.c.b16 %v2341, %v2338
    %v2519 = vpack.c.b16 %v2342, %v2339
    %v2520 = vpack.c.b16 %v2343, %v2340
    %v2521 = vpack.c.b16 %v2347, %v2344
    %v2522 = vpack.c.b16 %v2348, %v2345
    %v2523 = vpack.c.b16 %v2349, %v2346
    %v2524 = vpack.c.b16 %v2353, %v2350
    %v2525 = vpack.c.b16 %v2354, %v2351
    %v2526 = vpack.c.b16 %v2355, %v2352
    %v2527 = vpack.c.b16 %v2359, %v2356
    %v2528 = vpack.c.b16 %v2360, %v2357
    %v2529 = vpack.c.b16 %v2361, %v2358
    %v2530 = vpack.c.b16 %v2365, %v2362
    %v2531 = vpack.c.b16 %v2366, %v2363
    %v2532 = vpack.c.b16 %v2367, %v2364
    %v2533 = vpack.c.b16 %v2371, %v2368
    %v2534 = vpack.c.b16 %v2372, %v2369
    %v2535 = vpack.c.b16 %v2373, %v2370
    %v2536 = vpack.c.b16 %v2377, %v2374
    %v2537 = vpack.c.b16 %v2378, %v2375
    %v2538 = vpack.c.b16 %v2379, %v2376
    %v2539 = vpack.c.b16 %v2383, %v2380
    %v2540 = vpack.c.b16 %v2384, %v2381
    %v2541 = vpack.c.b16 %v2385, %v2382
    %v2542 = vpack.c.b16 %v2389, %v2386
    %v2543 = vpack.c.b16 %v2390, %v2387
    %v2544 = vpack.c.b16 %v2391, %v2388
    %v2545 = vpack.c.b16 %v2395, %v2392
    %v2546 = vpack.c.b16 %v2396, %v2393
    %v2547 = vpack.c.b16 %v2397, %v2394
    %v2548 = vpack.c.b16 %v2401, %v2398
    %v2549 = vpack.c.b16 %v2402, %v2399
    %v2550 = vpack.c.b16 %v2403, %v2400
    %v2551 = vpack.c.b16 %v2407, %v2404
    %v2552 = vpack.c.b16 %v2408, %v2405
    %v2553 = vpack.c.b16 %v2409, %v2406
    %v2554 = vpack.c.b16 %v2413, %v2410
    %v2555 = vpack.c.b16 %v2414, %v2411
    %v2556 = vpack.c.b16 %v2415, %v2412
    %v2557 = vpack.c.b16 %v2419, %v2416
    %v2558 = vpack.c.b16 %v2420, %v2417
    %v2559 = vpack.c.b16 %v2421, %v2418
    %v2560 = vpack.c.b16 %v2425, %v2422
    %v2561 = vpack.c.b16 %v2426, %v2423
    %v2562 = vpack.c.b16 %v2427, %v2424
    %v2563 = vpack.c.b16 %v2431, %v2428
    %v2564 = vpack.c.b16 %v2432, %v2429
    %v2565 = vpack.c.b16 %v2433, %v2430
    %v2566 = vpack.c.b16 %v2437, %v2434
    %v2567 = vpack.c.b16 %v2438, %v2435
    %v2568 = vpack.c.b16 %v2439, %v2436
    %v2569 = vpack.c.b16 %v2443, %v2440
    %v2570 = vpack.c.b16 %v2444, %v2441
    %v2571 = vpack.c.b16 %v2445, %v2442
    %v2572 = vpack.c.b16 %v2449, %v2446
    %v2573 = vpack.c.b16 %v2450, %v2447
    %v2574 = vpack.c.b16 %v2451, %v2448
    %v2575 = vpack.c.b16 %v2455, %v2452
    %v2576 = vpack.c.b16 %v2456, %v2453
    %v2577 = vpack.c.b16 %v2457, %v2454
    %v2578 = vpack.c.b16 %v2461, %v2458
    %v2579 = vpack.c.b16 %v2462, %v2459
    %v2580 = vpack.c.b16 %v2463, %v2460
    %v2581 = vpack.c.b16 %v2467, %v2464
    %v2582 = vpack.c.b16 %v2468, %v2465
    %v2583 = vpack.c.b16 %v2469, %v2466
    %v2584 = vpack.c.b16 %v2473, %v2470
    %v2585 = vpack.c.b16 %v2474, %v2471
    %v2586 = vpack.c.b16 %v2475, %v2472
    %v2587 = vpack.c.b16 %v2479, %v2476
    %v2588 = vpack.c.b16 %v2480, %v2477
    %v2589 = vpack.c.b16 %v2481, %v2478
    %v2590 = vpack.c.b16 %v2485, %v2482
    %v2591 = vpack.c.b16 %v2486, %v2483
    %v2592 = vpack.c.b16 %v2487, %v2484
    %v2593 = vpack.c.b16 %v2491, %v2488
    %v2594 = vpack.c.b16 %v2492, %v2489
    %v2595 = vpack.c.b16 %v2493, %v2490
    %v2596 = vpack.c.b16 %v2497, %v2494
    %v2597 = vpack.c.b16 %v2498, %v2495
    %v2598 = vpack.c.b16 %v2499, %v2496
    %v2599 = vpack.c.b16 %v2503, %v2500
    %v2600 = vpack.c.b16 %v2504, %v2501
    %v2601 = vpack.c.b16 %v2505, %v2502
    %2698 = vmatprep.subr.bf16.mxu0 %v2507
    %2699 = vmatpush1.bf16.msra.mxu0 %v2506
    %2700 = vmatprep.subr.bf16.mxu0 %v2510
    %2701 = vmatpush1.bf16.msra.mxu0 %v2509
    %2702 = vmatprep.subr.bf16.mxu0 %v2513
    %2703 = vmatpush1.bf16.msra.mxu0 %v2512
    %2704 = vmatprep.subr.bf16.mxu0 %v2516
    %2705 = vmatpush1.bf16.msra.mxu0 %v2515
    %2706 = vmatprep.subr.bf16.mxu0 %v2519
    %2707 = vmatpush1.bf16.msra.mxu0 %v2518
    %2708 = vmatprep.subr.bf16.mxu0 %v2522
    %2709 = vmatpush1.bf16.msra.mxu0 %v2521
    %2710 = vmatprep.subr.bf16.mxu0 %v2525
    %2711 = vmatpush1.bf16.msra.mxu0 %v2524
    %2712 = vmatprep.subr.bf16.mxu0 %v2528
    %2713 = vmatpush1.bf16.msra.mxu0 %v2527
    %2714 = vmatprep.subr.bf16.mxu0 %v2531
    %2715 = vmatpush1.bf16.msra.mxu0 %v2530
    %2716 = vmatprep.subr.bf16.mxu0 %v2534
    %2717 = vmatpush1.bf16.msra.mxu0 %v2533
    %2718 = vmatprep.subr.bf16.mxu0 %v2537
    %2719 = vmatpush1.bf16.msra.mxu0 %v2536
    %2720 = vmatprep.subr.bf16.mxu0 %v2540
    %2721 = vmatpush1.bf16.msra.mxu0 %v2539
    %2722 = vmatprep.subr.bf16.mxu0 %v2543
    %2723 = vmatpush1.bf16.msra.mxu0 %v2542
    %2724 = vmatprep.subr.bf16.mxu0 %v2546
    %2725 = vmatpush1.bf16.msra.mxu0 %v2545
    %2726 = vmatprep.subr.bf16.mxu0 %v2549
    %2727 = vmatpush1.bf16.msra.mxu0 %v2548
    %2728 = vmatprep.subr.bf16.mxu0 %v2552
    %2729 = vmatpush1.bf16.msra.mxu0 %v2551
    %2730 = vmatprep.mubr.bf16.mxu0 %v2038
    %2731 = vmatmul.mubr.bf16.gmra.mrb[0].mxu0 %v2037
    %v2732 = vpop.f32.mrb[0].mxu0
    %v2733 = vadd.f32 %v2174, %v2732
    %v2734 = vpop.f32.mrb[0].mxu0
    %v2735 = vadd.f32 %v2178, %v2734
    %v2736 = vpop.f32.mrb[0].mxu0
    %v2737 = vadd.f32 %v2174, %v2736
    %v2738 = vpop.f32.mrb[0].mxu0
    %v2739 = vadd.f32 %v2178, %v2738
    %2740 = vdwg.mxu0
    %2741 = vmatprep.subr.bf16.mxu0 %v2555
    %2742 = vmatpush1.bf16.msra.mxu0 %v2554
    %2743 = vmatprep.subr.bf16.mxu0 %v2558
    %2744 = vmatpush1.bf16.msra.mxu0 %v2557
    %2745 = vmatprep.subr.bf16.mxu0 %v2561
    %2746 = vmatpush1.bf16.msra.mxu0 %v2560
    %2747 = vmatprep.subr.bf16.mxu0 %v2564
    %2748 = vmatpush1.bf16.msra.mxu0 %v2563
    %2749 = vmatprep.subr.bf16.mxu0 %v2567
    %2750 = vmatpush1.bf16.msra.mxu0 %v2566
    %2751 = vmatprep.subr.bf16.mxu0 %v2570
    %2752 = vmatpush1.bf16.msra.mxu0 %v2569
    %2753 = vmatprep.subr.bf16.mxu0 %v2573
    %2754 = vmatpush1.bf16.msra.mxu0 %v2572
    %2755 = vmatprep.subr.bf16.mxu0 %v2576
    %2756 = vmatpush1.bf16.msra.mxu0 %v2575
    %2757 = vmatprep.subr.bf16.mxu0 %v2579
    %2758 = vmatpush1.bf16.msra.mxu0 %v2578
    %2759 = vmatprep.subr.bf16.mxu0 %v2582
    %2760 = vmatpush1.bf16.msra.mxu0 %v2581
    %2761 = vmatprep.subr.bf16.mxu0 %v2585
    %2762 = vmatpush1.bf16.msra.mxu0 %v2584
    %2763 = vmatprep.subr.bf16.mxu0 %v2588
    %2764 = vmatpush1.bf16.msra.mxu0 %v2587
    %2765 = vmatprep.subr.bf16.mxu0 %v2591
    %2766 = vmatpush1.bf16.msra.mxu0 %v2590
    %2767 = vmatprep.subr.bf16.mxu0 %v2594
    %2768 = vmatpush1.bf16.msra.mxu0 %v2593
    %2769 = vmatprep.subr.bf16.mxu0 %v2597
    %2770 = vmatpush1.bf16.msra.mxu0 %v2596
    %2771 = vmatprep.subr.bf16.mxu0 %v2600
    %2772 = vmatpush1.bf16.msra.mxu0 %v2599
    %2773 = vmatprep.mubr.bf16.mxu0 %v2040
    %2774 = vmatmul.mubr.bf16.gmra.mrb[0].mxu0 %v2039
    %v2775 = vpop.f32.mrb[0].mxu0
    %v2776 = vadd.f32 %v2733, %v2775
    %v2777 = vpop.f32.mrb[0].mxu0
    %v2778 = vadd.f32 %v2735, %v2777
    %v2779 = vpop.f32.mrb[0].mxu0
    %v2780 = vadd.f32 %v2737, %v2779
    %v2781 = vpop.f32.mrb[0].mxu0
    %v2782 = vadd.f32 %v2739, %v2781
    %2783 = vdwg.mxu0
    %2784 = vmatprep.subr.bf16.mxu0 0
    %2785 = vmatpush1.bf16.msra.mxu0 %v2508
    %2786 = vmatprep.subr.bf16.mxu0 0
    %2787 = vmatpush1.bf16.msra.mxu0 %v2511
    %2788 = vmatprep.subr.bf16.mxu0 0
    %2789 = vmatpush1.bf16.msra.mxu0 %v2514
    %2790 = vmatprep.subr.bf16.mxu0 0
    %2791 = vmatpush1.bf16.msra.mxu0 %v2517
    %2792 = vmatprep.subr.bf16.mxu0 0
    %2793 = vmatpush1.bf16.msra.mxu0 %v2520
    %2794 = vmatprep.subr.bf16.mxu0 0
    %2795 = vmatpush1.bf16.msra.mxu0 %v2523
    %2796 = vmatprep.subr.bf16.mxu0 0
    %2797 = vmatpush1.bf16.msra.mxu0 %v2526
    %2798 = vmatprep.subr.bf16.mxu0 0
    %2799 = vmatpush1.bf16.msra.mxu0 %v2529
    %2800 = vmatprep.subr.bf16.mxu0 0
    %2801 = vmatpush1.bf16.msra.mxu0 %v2532
    %2802 = vmatprep.subr.bf16.mxu0 0
    %2803 = vmatpush1.bf16.msra.mxu0 %v2535
    %2804 = vmatprep.subr.bf16.mxu0 0
    %2805 = vmatpush1.bf16.msra.mxu0 %v2538
    %2806 = vmatprep.subr.bf16.mxu0 0
    %2807 = vmatpush1.bf16.msra.mxu0 %v2541
    %2808 = vmatprep.subr.bf16.mxu0 0
    %2809 = vmatpush1.bf16.msra.mxu0 %v2544
    %2810 = vmatprep.subr.bf16.mxu0 0
    %2811 = vmatpush1.bf16.msra.mxu0 %v2547
    %2812 = vmatprep.subr.bf16.mxu0 0
    %2813 = vmatpush1.bf16.msra.mxu0 %v2550
    %2814 = vmatprep.subr.bf16.mxu0 0
    %2815 = vmatpush1.bf16.msra.mxu0 %v2553
    %2816 = vmatprep.mubr.bf16.mxu0 %v2038
    %2817 = vmatmul.mubr.bf16.gmra.mrb[0].mxu0 %v2037
    %v2818 = vpop.f32.mrb[0].mxu0
    %v2819 = vadd.f32 %v2182, %v2818
    %v2820 = vpop.f32.mrb[0].mxu0
    %v2821 = vpop.f32.mrb[0].mxu0
    %v2822 = vadd.f32 %v2182, %v2821
    %v2823 = vpop.f32.mrb[0].mxu0
    %2824 = vdwg.mxu0
    %2825 = vmatprep.subr.bf16.mxu0 0
    %2826 = vmatpush1.bf16.msra.mxu0 %v2556
    %2827 = vmatprep.subr.bf16.mxu0 0
    %2828 = vmatpush1.bf16.msra.mxu0 %v2559
    %2829 = vmatprep.subr.bf16.mxu0 0
    %2830 = vmatpush1.bf16.msra.mxu0 %v2562
    %2831 = vmatprep.subr.bf16.mxu0 0
    %2832 = vmatpush1.bf16.msra.mxu0 %v2565
    %2833 = vmatprep.subr.bf16.mxu0 0
    %2834 = vmatpush1.bf16.msra.mxu0 %v2568
    %2835 = vmatprep.subr.bf16.mxu0 0
    %2836 = vmatpush1.bf16.msra.mxu0 %v2571
    %2837 = vmatprep.subr.bf16.mxu0 0
    %2838 = vmatpush1.bf16.msra.mxu0 %v2574
    %2839 = vmatprep.subr.bf16.mxu0 0
    %2840 = vmatpush1.bf16.msra.mxu0 %v2577
    %2841 = vmatprep.subr.bf16.mxu0 0
    %2842 = vmatpush1.bf16.msra.mxu0 %v2580
    %2843 = vmatprep.subr.bf16.mxu0 0
    %2844 = vmatpush1.bf16.msra.mxu0 %v2583
    %2845 = vmatprep.subr.bf16.mxu0 0
    %2846 = vmatpush1.bf16.msra.mxu0 %v2586
    %2847 = vmatprep.subr.bf16.mxu0 0
    %2848 = vmatpush1.bf16.msra.mxu0 %v2589
    %2849 = vmatprep.subr.bf16.mxu0 0
    %2850 = vmatpush1.bf16.msra.mxu0 %v2592
    %2851 = vmatprep.subr.bf16.mxu0 0
    %2852 = vmatpush1.bf16.msra.mxu0 %v2595
    %2853 = vmatprep.subr.bf16.mxu0 0
    %2854 = vmatpush1.bf16.msra.mxu0 %v2598
    %2855 = vmatprep.subr.bf16.mxu0 0
    %2856 = vmatpush1.bf16.msra.mxu0 %v2601
    %2857 = vmatprep.mubr.bf16.mxu0 %v2040
    %2858 = vmatmul.mubr.bf16.gmra.mrb[0].mxu0 %v2039
    %v2859 = vpop.f32.mrb[0].mxu0
    %v2860 = vadd.f32 %v2819, %v2859
    %v2861 = vpop.f32.mrb[0].mxu0
    %v2862 = vpop.f32.mrb[0].mxu0
    %v2863 = vadd.f32 %v2822, %v2862
    %v2864 = vpop.f32.mrb[0].mxu0
    %2865 = vdwg.mxu0
    %v2866 = vxor.u32 %v2776, 2147483648
    %v2867 = vxor.u32 %v2778, 2147483648
    %v2868 = vxor.u32 %v2860, 2147483648
    %v2869 = vxor.u32 %v2780, 2147483648
    %v2870 = vxor.u32 %v2782, 2147483648
    %v2871 = vxor.u32 %v2863, 2147483648
    %v2872 = vmul.f32 %v2866, 1.442695
    %v2873 = vpow.pop %v2872
    %v2874 = vmul.f32 %v2867, 1.442695
    %v2875 = vpow.pop %v2874
    %v2876 = vmul.f32 %v2868, 1.442695
    %v2877 = vpow.pop %v2876
    %v2878 = vmul.f32 %v2869, 1.442695
    %v2879 = vpow.pop %v2878
    %v2880 = vmul.f32 %v2870, 1.442695
    %v2881 = vpow.pop %v2880
    %v2882 = vmul.f32 %v2871, 1.442695
    %v2883 = vpow.pop %v2882
    %v2884 = vadd.f32 %v2873, 1.0
    %v2885 = vadd.f32 %v2875, 1.0
    %v2886 = vadd.f32 %v2877, 1.0
    %v2887 = vadd.f32 %v2879, 1.0
    %v2888 = vadd.f32 %v2881, 1.0
    %v2889 = vadd.f32 %v2883, 1.0
    %v2890 = vrcp.pop %v2884
    %v2891 = vmul.f32 1.0, %v2890
    %v2892 = vrcp.pop %v2885
    %v2893 = vmul.f32 1.0, %v2892
    %v2894 = vrcp.pop %v2886
    %v2895 = vmul.f32 1.0, %v2894
    %v2896 = vrcp.pop %v2887
    %v2897 = vmul.f32 1.0, %v2896
    %v2898 = vrcp.pop %v2888
    %v2899 = vmul.f32 1.0, %v2898
    %v2900 = vrcp.pop %v2889
    %v2901 = vmul.f32 1.0, %v2900
    %v2902 = vpack.c.bf16 %v2897, %v2891
    %v2903 = vpack.c.bf16 %v2899, %v2893
    %v2904 = vpack.c.bf16 %v2901, %v2895
    %v2905 = vld [vmem:[#allocation7] sm:$0xff]
    %v2906 = vld [vmem:[#allocation7 + $0x8] sm:$0xff]
    %v2907 = vld [vmem:[#allocation7 + $0x10] sm:$0xff]
    %v2908 = vld [vmem:[#allocation7 + $0x18] sm:$0xff]
    %v2909 = vld [vmem:[#allocation7 + $0x20] sm:$0xff]
    %v2910 = vld [vmem:[#allocation7 + $0x28] sm:$0xff]
    %v2911 = vld [vmem:[#allocation7 + $0x30] sm:$0xff]
    %v2912 = vld [vmem:[#allocation7 + $0x38] sm:$0xff]
    %v2913 = vld [vmem:[#allocation7 + $0x40] sm:$0xff]
    %v2914 = vld [vmem:[#allocation7 + $0x48] sm:$0xff]
    %v2915 = vld [vmem:[#allocation7 + $0x50] sm:$0xff]
    %v2916 = vld [vmem:[#allocation7 + $0x58] sm:$0xff]
    %v2917 = vld [vmem:[#allocation7 + $0x60] sm:$0xff]
    %v2918 = vld [vmem:[#allocation7 + $0x68] sm:$0xff]
    %v2919 = vld [vmem:[#allocation7 + $0x70] sm:$0xff]
    %v2920 = vld [vmem:[#allocation7 + $0x78] sm:$0xff]
    %v2921 = vld [vmem:[#allocation7 + $0x80] sm:$0xff]
    %v2922 = vld [vmem:[#allocation7 + $0x88] sm:$0xff]
    %v2923 = vld [vmem:[#allocation7 + $0x90] sm:$0xff]
    %v2924 = vld [vmem:[#allocation7 + $0x98] sm:$0xff]
    %v2925 = vld [vmem:[#allocation7 + $0xa0] sm:$0xff]
    %v2926 = vld [vmem:[#allocation7 + $0xa8] sm:$0xff]
    %v2927 = vld [vmem:[#allocation7 + $0xb0] sm:$0xff]
    %v2928 = vld [vmem:[#allocation7 + $0xb8] sm:$0xff]
    %v2929 = vld [vmem:[#allocation7 + $0xc0] sm:$0xff]
    %v2930 = vld [vmem:[#allocation7 + $0xc8] sm:$0xff]
    %v2931 = vld [vmem:[#allocation7 + $0xd0] sm:$0xff]
    %v2932 = vld [vmem:[#allocation7 + $0xd8] sm:$0xff]
    %v2933 = vld [vmem:[#allocation7 + $0xe0] sm:$0xff]
    %v2934 = vld [vmem:[#allocation7 + $0xe8] sm:$0xff]
    %v2935 = vld [vmem:[#allocation7 + $0xf0] sm:$0xff]
    %v2936 = vld [vmem:[#allocation7 + $0xf8] sm:$0xff]
    %v2937 = vld [vmem:[#allocation7 + $0x100] sm:$0xff]
    %v2938 = vld [vmem:[#allocation7 + $0x108] sm:$0xff]
    %v2939 = vld [vmem:[#allocation7 + $0x110] sm:$0xff]
    %v2940 = vld [vmem:[#allocation7 + $0x118] sm:$0xff]
    %v2941 = vld [vmem:[#allocation7 + $0x120] sm:$0xff]
    %v2942 = vld [vmem:[#allocation7 + $0x128] sm:$0xff]
    %v2943 = vld [vmem:[#allocation7 + $0x130] sm:$0xff]
    %v2944 = vld [vmem:[#allocation7 + $0x138] sm:$0xff]
    %v2945 = vld [vmem:[#allocation7 + $0x140] sm:$0xff]
    %v2946 = vld [vmem:[#allocation7 + $0x148] sm:$0xff]
    %v2947 = vld [vmem:[#allocation7 + $0x150] sm:$0xff]
    %v2948 = vld [vmem:[#allocation7 + $0x158] sm:$0xff]
    %v2949 = vld [vmem:[#allocation7 + $0x160] sm:$0xff]
    %v2950 = vld [vmem:[#allocation7 + $0x168] sm:$0xff]
    %v2951 = vld [vmem:[#allocation7 + $0x170] sm:$0xff]
    %v2952 = vld [vmem:[#allocation7 + $0x178] sm:$0xff]
    %v2953 = vld [vmem:[#allocation9] sm:$0x3]
    %v2955 = vlaneseq
    %v2956 = vshrl.u32 %v2955, 7
    %v2957 = vsub.s32 0, %v2956
    %v2958 = vrot.slane %v2953, %v2957
    %v2959 = vlaneseq
    %v2960 = vshrl.u32 %v2959, 7
    %v2961 = vsub.s32 1, %v2960
    %v2962 = vrot.slane %v2953, %v2961
    %v3013 = vunpack.c.l.b16 %v2905
    %v3014 = vunpack.c.h.b16 %v2905
    %v3015 = vunpack.c.l.b16 %v2906
    %v3016 = vunpack.c.h.b16 %v2906
    %v3017 = vunpack.c.l.b16 %v2907
    %v3018 = vunpack.c.h.b16 %v2907
    %v3019 = vunpack.c.l.b16 %v2908
    %v3020 = vunpack.c.h.b16 %v2908
    %v3021 = vunpack.c.l.b16 %v2909
    %v3022 = vunpack.c.h.b16 %v2909
    %v3023 = vunpack.c.l.b16 %v2910
    %v3024 = vunpack.c.h.b16 %v2910
    %v3025 = vunpack.c.l.b16 %v2911
    %v3026 = vunpack.c.h.b16 %v2911
    %v3027 = vunpack.c.l.b16 %v2912
    %v3028 = vunpack.c.h.b16 %v2912
    %v3029 = vunpack.c.l.b16 %v2913
    %v3030 = vunpack.c.h.b16 %v2913
    %v3031 = vunpack.c.l.b16 %v2914
    %v3032 = vunpack.c.h.b16 %v2914
    %v3033 = vunpack.c.l.b16 %v2915
    %v3034 = vunpack.c.h.b16 %v2915
    %v3035 = vunpack.c.l.b16 %v2916
    %v3036 = vunpack.c.h.b16 %v2916
    %v3037 = vunpack.c.l.b16 %v2917
    %v3038 = vunpack.c.h.b16 %v2917
    %v3039 = vunpack.c.l.b16 %v2918
    %v3040 = vunpack.c.h.b16 %v2918
    %v3041 = vunpack.c.l.b16 %v2919
    %v3042 = vunpack.c.h.b16 %v2919
    %v3043 = vunpack.c.l.b16 %v2920
    %v3044 = vunpack.c.h.b16 %v2920
    %v3045 = vunpack.c.l.b16 %v2921
    %v3046 = vunpack.c.h.b16 %v2921
    %v3047 = vunpack.c.l.b16 %v2922
    %v3048 = vunpack.c.h.b16 %v2922
    %v3049 = vunpack.c.l.b16 %v2923
    %v3050 = vunpack.c.h.b16 %v2923
    %v3051 = vunpack.c.l.b16 %v2924
    %v3052 = vunpack.c.h.b16 %v2924
    %v3053 = vunpack.c.l.b16 %v2925
    %v3054 = vunpack.c.h.b16 %v2925
    %v3055 = vunpack.c.l.b16 %v2926
    %v3056 = vunpack.c.h.b16 %v2926
    %v3057 = vunpack.c.l.b16 %v2927
    %v3058 = vunpack.c.h.b16 %v2927
    %v3059 = vunpack.c.l.b16 %v2928
    %v3060 = vunpack.c.h.b16 %v2928
    %v3061 = vunpack.c.l.b16 %v2929
    %v3062 = vunpack.c.h.b16 %v2929
    %v3063 = vunpack.c.l.b16 %v2930
    %v3064 = vunpack.c.h.b16 %v2930
    %v3065 = vunpack.c.l.b16 %v2931
    %v3066 = vunpack.c.h.b16 %v2931
    %v3067 = vunpack.c.l.b16 %v2932
    %v3068 = vunpack.c.h.b16 %v2932
    %v3069 = vunpack.c.l.b16 %v2933
    %v3070 = vunpack.c.h.b16 %v2933
    %v3071 = vunpack.c.l.b16 %v2934
    %v3072 = vunpack.c.h.b16 %v2934
    %v3073 = vunpack.c.l.b16 %v2935
    %v3074 = vunpack.c.h.b16 %v2935
    %v3075 = vunpack.c.l.b16 %v2936
    %v3076 = vunpack.c.h.b16 %v2936
    %v3077 = vunpack.c.l.b16 %v2937
    %v3078 = vunpack.c.h.b16 %v2937
    %v3079 = vunpack.c.l.b16 %v2938
    %v3080 = vunpack.c.h.b16 %v2938
    %v3081 = vunpack.c.l.b16 %v2939
    %v3082 = vunpack.c.h.b16 %v2939
    %v3083 = vunpack.c.l.b16 %v2940
    %v3084 = vunpack.c.h.b16 %v2940
    %v3085 = vunpack.c.l.b16 %v2941
    %v3086 = vunpack.c.h.b16 %v2941
    %v3087 = vunpack.c.l.b16 %v2942
    %v3088 = vunpack.c.h.b16 %v2942
    %v3089 = vunpack.c.l.b16 %v2943
    %v3090 = vunpack.c.h.b16 %v2943
    %v3091 = vunpack.c.l.b16 %v2944
    %v3092 = vunpack.c.h.b16 %v2944
    %v3093 = vunpack.c.l.b16 %v2945
    %v3094 = vunpack.c.h.b16 %v2945
    %v3095 = vunpack.c.l.b16 %v2946
    %v3096 = vunpack.c.h.b16 %v2946
    %v3097 = vunpack.c.l.b16 %v2947
    %v3098 = vunpack.c.h.b16 %v2947
    %v3099 = vunpack.c.l.b16 %v2948
    %v3100 = vunpack.c.h.b16 %v2948
    %v3101 = vunpack.c.l.b16 %v2949
    %v3102 = vunpack.c.h.b16 %v2949
    %v3103 = vunpack.c.l.b16 %v2950
    %v3104 = vunpack.c.h.b16 %v2950
    %v3105 = vunpack.c.l.b16 %v2951
    %v3106 = vunpack.c.h.b16 %v2951
    %v3107 = vunpack.c.l.b16 %v2952
    %v3108 = vunpack.c.h.b16 %v2952
    %v3109 = vpack.c.b16 %v3015, %v3013
    %v3110 = vpack.c.b16 %v3016, %v3014
    %v3111 = vpack.c.b16 %v3019, %v3017
    %v3112 = vpack.c.b16 %v3020, %v3018
    %v3113 = vpack.c.b16 %v3023, %v3021
    %v3114 = vpack.c.b16 %v3024, %v3022
    %v3115 = vpack.c.b16 %v3027, %v3025
    %v3116 = vpack.c.b16 %v3028, %v3026
    %v3117 = vpack.c.b16 %v3031, %v3029
    %v3118 = vpack.c.b16 %v3032, %v3030
    %v3119 = vpack.c.b16 %v3035, %v3033
    %v3120 = vpack.c.b16 %v3036, %v3034
    %v3121 = vpack.c.b16 %v3039, %v3037
    %v3122 = vpack.c.b16 %v3040, %v3038
    %v3123 = vpack.c.b16 %v3043, %v3041
    %v3124 = vpack.c.b16 %v3044, %v3042
    %v3125 = vpack.c.b16 %v3047, %v3045
    %v3126 = vpack.c.b16 %v3048, %v3046
    %v3127 = vpack.c.b16 %v3051, %v3049
    %v3128 = vpack.c.b16 %v3052, %v3050
    %v3129 = vpack.c.b16 %v3055, %v3053
    %v3130 = vpack.c.b16 %v3056, %v3054
    %v3131 = vpack.c.b16 %v3059, %v3057
    %v3132 = vpack.c.b16 %v3060, %v3058
    %v3133 = vpack.c.b16 %v3063, %v3061
    %v3134 = vpack.c.b16 %v3064, %v3062
    %v3135 = vpack.c.b16 %v3067, %v3065
    %v3136 = vpack.c.b16 %v3068, %v3066
    %v3137 = vpack.c.b16 %v3071, %v3069
    %v3138 = vpack.c.b16 %v3072, %v3070
    %v3139 = vpack.c.b16 %v3075, %v3073
    %v3140 = vpack.c.b16 %v3076, %v3074
    %v3141 = vpack.c.b16 %v3079, %v3077
    %v3142 = vpack.c.b16 %v3080, %v3078
    %v3143 = vpack.c.b16 %v3083, %v3081
    %v3144 = vpack.c.b16 %v3084, %v3082
    %v3145 = vpack.c.b16 %v3087, %v3085
    %v3146 = vpack.c.b16 %v3088, %v3086
    %v3147 = vpack.c.b16 %v3091, %v3089
    %v3148 = vpack.c.b16 %v3092, %v3090
    %v3149 = vpack.c.b16 %v3095, %v3093
    %v3150 = vpack.c.b16 %v3096, %v3094
    %v3151 = vpack.c.b16 %v3099, %v3097
    %v3152 = vpack.c.b16 %v3100, %v3098
    %v3153 = vpack.c.b16 %v3103, %v3101
    %v3154 = vpack.c.b16 %v3104, %v3102
    %v3155 = vpack.c.b16 %v3107, %v3105
    %v3156 = vpack.c.b16 %v3108, %v3106
    %3205 = vmatprep.subr.bf16.mxu0 %v3110
    %3206 = vmatpush1.bf16.msra.mxu0 %v3109
    %3207 = vmatprep.subr.bf16.mxu0 %v3112
    %3208 = vmatpush1.bf16.msra.mxu0 %v3111
    %3209 = vmatprep.subr.bf16.mxu0 %v3114
    %3210 = vmatpush1.bf16.msra.mxu0 %v3113
    %3211 = vmatprep.subr.bf16.mxu0 %v3116
    %3212 = vmatpush1.bf16.msra.mxu0 %v3115
    %3213 = vmatprep.subr.bf16.mxu0 %v3118
    %3214 = vmatpush1.bf16.msra.mxu0 %v3117
    %3215 = vmatprep.subr.bf16.mxu0 %v3120
    %3216 = vmatpush1.bf16.msra.mxu0 %v3119
    %3217 = vmatprep.subr.bf16.mxu0 %v3122
    %3218 = vmatpush1.bf16.msra.mxu0 %v3121
    %3219 = vmatprep.subr.bf16.mxu0 %v3124
    %3220 = vmatpush1.bf16.msra.mxu0 %v3123
    %3221 = vmatprep.subr.bf16.mxu0 %v3126
    %3222 = vmatpush1.bf16.msra.mxu0 %v3125
    %3223 = vmatprep.subr.bf16.mxu0 %v3128
    %3224 = vmatpush1.bf16.msra.mxu0 %v3127
    %3225 = vmatprep.subr.bf16.mxu0 %v3130
    %3226 = vmatpush1.bf16.msra.mxu0 %v3129
    %3227 = vmatprep.subr.bf16.mxu0 %v3132
    %3228 = vmatpush1.bf16.msra.mxu0 %v3131
    %3229 = vmatprep.subr.bf16.mxu0 %v3134
    %3230 = vmatpush1.bf16.msra.mxu0 %v3133
    %3231 = vmatprep.subr.bf16.mxu0 %v3136
    %3232 = vmatpush1.bf16.msra.mxu0 %v3135
    %3233 = vmatprep.subr.bf16.mxu0 %v3138
    %3234 = vmatpush1.bf16.msra.mxu0 %v3137
    %3235 = vmatprep.subr.bf16.mxu0 %v3140
    %3236 = vmatpush1.bf16.msra.mxu0 %v3139
    %3237 = vmatprep.mubr.bf16.mxu0 %v2903
    %3238 = vmatmul.mubr.bf16.gmra.mrb[0].mxu0 %v2902
    %v3239 = vpop.f32.mrb[0].mxu0
    %v3240 = vadd.f32 %v2958, %v3239
    %v3241 = vpop.f32.mrb[0].mxu0
    %v3242 = vadd.f32 %v2962, %v3241
    %v3243 = vpop.f32.mrb[0].mxu0
    %v3244 = vadd.f32 %v2958, %v3243
    %v3245 = vpop.f32.mrb[0].mxu0
    %v3246 = vadd.f32 %v2962, %v3245
    %3247 = vdwg.mxu0
    %3248 = vmatprep.subr.bf16.mxu0 %v3142
    %3249 = vmatpush1.bf16.msra.mxu0 %v3141
    %3250 = vmatprep.subr.bf16.mxu0 %v3144
    %3251 = vmatpush1.bf16.msra.mxu0 %v3143
    %3252 = vmatprep.subr.bf16.mxu0 %v3146
    %3253 = vmatpush1.bf16.msra.mxu0 %v3145
    %3254 = vmatprep.subr.bf16.mxu0 %v3148
    %3255 = vmatpush1.bf16.msra.mxu0 %v3147
    %3256 = vmatprep.subr.bf16.mxu0 %v3150
    %3257 = vmatpush1.bf16.msra.mxu0 %v3149
    %3258 = vmatprep.subr.bf16.mxu0 %v3152
    %3259 = vmatpush1.bf16.msra.mxu0 %v3151
    %3260 = vmatprep.subr.bf16.mxu0 %v3154
    %3261 = vmatpush1.bf16.msra.mxu0 %v3153
    %3262 = vmatprep.subr.bf16.mxu0 %v3156
    %3263 = vmatpush1.bf16.msra.mxu0 %v3155
    %3264 = vmatprep.subr.bf16.mxu0 0
    %3265 = vmatpush1.bf16.msra.mxu0 0
    %3266 = vmatprep.subr.bf16.mxu0 0
    %3267 = vmatpush1.bf16.msra.mxu0 0
    %3268 = vmatprep.subr.bf16.mxu0 0
    %3269 = vmatpush1.bf16.msra.mxu0 0
    %3270 = vmatprep.subr.bf16.mxu0 0
    %3271 = vmatpush1.bf16.msra.mxu0 0
    %3272 = vmatprep.subr.bf16.mxu0 0
    %3273 = vmatpush1.bf16.msra.mxu0 0
    %3274 = vmatprep.subr.bf16.mxu0 0
    %3275 = vmatpush1.bf16.msra.mxu0 0
    %3276 = vmatprep.subr.bf16.mxu0 0
    %3277 = vmatpush1.bf16.msra.mxu0 0
    %3278 = vmatprep.subr.bf16.mxu0 0
    %3279 = vmatpush1.bf16.msra.mxu0 0
    %3280 = vmatprep.mubr.bf16.mxu0 0
    %3281 = vmatmul.mubr.bf16.gmra.mrb[0].mxu0 %v2904
    %v3282 = vpop.f32.mrb[0].mxu0
    %v3283 = vadd.f32 %v3240, %v3282
    %v3284 = vpop.f32.mrb[0].mxu0
    %v3285 = vadd.f32 %v3242, %v3284
    %v3286 = vpop.f32.mrb[0].mxu0
    %v3287 = vadd.f32 %v3244, %v3286
    %v3288 = vpop.f32.mrb[0].mxu0
    %v3289 = vadd.f32 %v3246, %v3288
    %3290 = vdwg.mxu0
    %v3291 = vxor.u32 %v3283, 2147483648
    %v3292 = vxor.u32 %v3285, 2147483648
    %v3293 = vxor.u32 %v3287, 2147483648
    %v3294 = vxor.u32 %v3289, 2147483648
    %v3295 = vmul.f32 %v3291, 1.442695
    %v3296 = vpow.pop %v3295
    %v3297 = vmul.f32 %v3292, 1.442695
    %v3298 = vpow.pop %v3297
    %v3299 = vmul.f32 %v3293, 1.442695
    %v3300 = vpow.pop %v3299
    %v3301 = vmul.f32 %v3294, 1.442695
    %v3302 = vpow.pop %v3301
    %v3303 = vadd.f32 %v3296, 1.0
    %v3304 = vadd.f32 %v3298, 1.0
    %v3305 = vadd.f32 %v3300, 1.0
    %v3306 = vadd.f32 %v3302, 1.0
    %v3307 = vrcp.pop %v3303
    %v3308 = vmul.f32 1.0, %v3307
    %v3309 = vrcp.pop %v3304
    %v3310 = vmul.f32 1.0, %v3309
    %v3311 = vrcp.pop %v3305
    %v3312 = vmul.f32 1.0, %v3311
    %v3313 = vrcp.pop %v3306
    %v3314 = vmul.f32 1.0, %v3313
    %v3315 = vpack.c.bf16 %v3312, %v3308
    %v3316 = vpack.c.bf16 %v3314, %v3310
    %v3317 = vld [vmem:[%s7] sm:$0xf]
    %v3318 = vld [vmem:[%s7 + $0x4] sm:$0xf]
    %v3319 = vld [vmem:[%s7 + $0x8] sm:$0xf]
    %v3320 = vld [vmem:[%s7 + $0xc] sm:$0xf]
    %v3321 = vld [vmem:[%s7 + $0x10] sm:$0xf]
    %v3322 = vld [vmem:[%s7 + $0x14] sm:$0xf]
    %v3323 = vld [vmem:[%s7 + $0x18] sm:$0xf]
    %v3324 = vld [vmem:[%s7 + $0x1c] sm:$0xf]
    %v3325 = vld [vmem:[%s7 + $0x20] sm:$0xf]
    %v3326 = vld [vmem:[%s7 + $0x24] sm:$0xf]
    %v3327 = vld [vmem:[%s7 + $0x28] sm:$0xf]
    %v3328 = vld [vmem:[%s7 + $0x2c] sm:$0xf]
    %v3329 = vld [vmem:[%s7 + $0x30] sm:$0xf]
    %v3330 = vld [vmem:[%s7 + $0x34] sm:$0xf]
    %v3331 = vld [vmem:[%s7 + $0x38] sm:$0xf]
    %v3332 = vld [vmem:[%s7 + $0x3c] sm:$0xf]
    %v3333 = vld [vmem:[%s7 + $0x40] sm:$0xf]
    %v3334 = vld [vmem:[%s7 + $0x44] sm:$0xf]
    %v3335 = vld [vmem:[%s7 + $0x48] sm:$0xf]
    %v3336 = vld [vmem:[%s7 + $0x4c] sm:$0xf]
    %v3337 = vld [vmem:[%s7 + $0x50] sm:$0xf]
    %v3338 = vld [vmem:[%s7 + $0x54] sm:$0xf]
    %v3339 = vld [vmem:[%s7 + $0x58] sm:$0xf]
    %v3340 = vld [vmem:[%s7 + $0x5c] sm:$0xf]
    %v3341 = vld [vmem:[%s7 + $0x60] sm:$0xf]
    %v3342 = vld [vmem:[%s7 + $0x64] sm:$0xf]
    %v3343 = vld [vmem:[%s7 + $0x68] sm:$0xf]
    %v3344 = vld [vmem:[%s7 + $0x6c] sm:$0xf]
    %v3345 = vld [vmem:[%s7 + $0x70] sm:$0xf]
    %v3346 = vld [vmem:[%s7 + $0x74] sm:$0xf]
    %v3347 = vld [vmem:[%s7 + $0x78] sm:$0xf]
    %v3348 = vld [vmem:[%s7 + $0x7c] sm:$0xf]
    %v3349 = vld [vmem:[#allocation10] sm:$0x1]
    %v3351 = vlaneseq
    %v3352 = vshrl.u32 %v3351, 7
    %v3353 = vsub.s32 0, %v3352
    %v3354 = vrot.slane %v3349, %v3353
    %v3388 = vunpack.c.l.b16 %v3317
    %v3389 = vunpack.c.l.b16 %v3318
    %v3390 = vunpack.c.l.b16 %v3319
    %v3391 = vunpack.c.l.b16 %v3320
    %v3392 = vunpack.c.l.b16 %v3321
    %v3393 = vunpack.c.l.b16 %v3322
    %v3394 = vunpack.c.l.b16 %v3323
    %v3395 = vunpack.c.l.b16 %v3324
    %v3396 = vunpack.c.l.b16 %v3325
    %v3397 = vunpack.c.l.b16 %v3326
    %v3398 = vunpack.c.l.b16 %v3327
    %v3399 = vunpack.c.l.b16 %v3328
    %v3400 = vunpack.c.l.b16 %v3329
    %v3401 = vunpack.c.l.b16 %v3330
    %v3402 = vunpack.c.l.b16 %v3331
    %v3403 = vunpack.c.l.b16 %v3332
    %v3404 = vunpack.c.l.b16 %v3333
    %v3405 = vunpack.c.l.b16 %v3334
    %v3406 = vunpack.c.l.b16 %v3335
    %v3407 = vunpack.c.l.b16 %v3336
    %v3408 = vunpack.c.l.b16 %v3337
    %v3409 = vunpack.c.l.b16 %v3338
    %v3410 = vunpack.c.l.b16 %v3339
    %v3411 = vunpack.c.l.b16 %v3340
    %v3412 = vunpack.c.l.b16 %v3341
    %v3413 = vunpack.c.l.b16 %v3342
    %v3414 = vunpack.c.l.b16 %v3343
    %v3415 = vunpack.c.l.b16 %v3344
    %v3416 = vunpack.c.l.b16 %v3345
    %v3417 = vunpack.c.l.b16 %v3346
    %v3418 = vunpack.c.l.b16 %v3347
    %v3419 = vunpack.c.l.b16 %v3348
    %v3420 = vpack.c.b16 %v3389, %v3388
    %v3421 = vpack.c.b16 %v3391, %v3390
    %v3422 = vpack.c.b16 %v3393, %v3392
    %v3423 = vpack.c.b16 %v3395, %v3394
    %v3424 = vpack.c.b16 %v3397, %v3396
    %v3425 = vpack.c.b16 %v3399, %v3398
    %v3426 = vpack.c.b16 %v3401, %v3400
    %v3427 = vpack.c.b16 %v3403, %v3402
    %v3428 = vpack.c.b16 %v3405, %v3404
    %v3429 = vpack.c.b16 %v3407, %v3406
    %v3430 = vpack.c.b16 %v3409, %v3408
    %v3431 = vpack.c.b16 %v3411, %v3410
    %v3432 = vpack.c.b16 %v3413, %v3412
    %v3433 = vpack.c.b16 %v3415, %v3414
    %v3434 = vpack.c.b16 %v3417, %v3416
    %v3435 = vpack.c.b16 %v3419, %v3418
    %3452 = vmatprep.subr.bf16.mxu0 0
    %3453 = vmatpush1.bf16.msra.mxu0 %v3420
    %3454 = vmatprep.subr.bf16.mxu0 0
    %3455 = vmatpush1.bf16.msra.mxu0 %v3421
    %3456 = vmatprep.subr.bf16.mxu0 0
    %3457 = vmatpush1.bf16.msra.mxu0 %v3422
    %3458 = vmatprep.subr.bf16.mxu0 0
    %3459 = vmatpush1.bf16.msra.mxu0 %v3423
    %3460 = vmatprep.subr.bf16.mxu0 0
    %3461 = vmatpush1.bf16.msra.mxu0 %v3424
    %3462 = vmatprep.subr.bf16.mxu0 0
    %3463 = vmatpush1.bf16.msra.mxu0 %v3425
    %3464 = vmatprep.subr.bf16.mxu0 0
    %3465 = vmatpush1.bf16.msra.mxu0 %v3426
    %3466 = vmatprep.subr.bf16.mxu0 0
    %3467 = vmatpush1.bf16.msra.mxu0 %v3427
    %3468 = vmatprep.subr.bf16.mxu0 0
    %3469 = vmatpush1.bf16.msra.mxu0 %v3428
    %3470 = vmatprep.subr.bf16.mxu0 0
    %3471 = vmatpush1.bf16.msra.mxu0 %v3429
    %3472 = vmatprep.subr.bf16.mxu0 0
    %3473 = vmatpush1.bf16.msra.mxu0 %v3430
    %3474 = vmatprep.subr.bf16.mxu0 0
    %3475 = vmatpush1.bf16.msra.mxu0 %v3431
    %3476 = vmatprep.subr.bf16.mxu0 0
    %3477 = vmatpush1.bf16.msra.mxu0 %v3432
    %3478 = vmatprep.subr.bf16.mxu0 0
    %3479 = vmatpush1.bf16.msra.mxu0 %v3433
    %3480 = vmatprep.subr.bf16.mxu0 0
    %3481 = vmatpush1.bf16.msra.mxu0 %v3434
    %3482 = vmatprep.subr.bf16.mxu0 0
    %3483 = vmatpush1.bf16.msra.mxu0 %v3435
    %3484 = vmatprep.mubr.bf16.mxu0 %v3316
    %3485 = vmatmul.mubr.bf16.gmra.mrb[0].mxu0 %v3315
    %v3486 = vpop.f32.mrb[0].mxu0
    %v3487 = vadd.f32 %v3354, %v3486
    %v3488 = vpop.f32.mrb[0].mxu0
    %v3489 = vpop.f32.mrb[0].mxu0
    %v3490 = vadd.f32 %v3354, %v3489
    %v3491 = vpop.f32.mrb[0].mxu0
    %3492 = vdwg.mxu0
    %v3493 = vxor.u32 %v3487, 2147483648
    %v3494 = vxor.u32 %v3490, 2147483648
    %v3495 = vmul.f32 %v3493, 1.442695
    %v3496 = vpow.pop %v3495
    %v3497 = vmul.f32 %v3494, 1.442695
    %v3498 = vpow.pop %v3497
    %v3499 = vadd.f32 %v3496, 1.0
    %v3500 = vadd.f32 %v3498, 1.0
    %v3501 = vrcp.pop %v3499
    %v3502 = vmul.f32 1.0, %v3501
    %v3503 = vrcp.pop %v3500
    %v3504 = vmul.f32 1.0, %v3503
    %3505 = vst [vmem:[%s17] sm:$0xff] %v3502
    %3506 = vst [vmem:[%s17 + $0x8] sm:$0xff] %v3504
    %v3507 = vpack.c.bf16 %v3504, %v3502
    %v3508 = vld [vmem:[#allocation12] sm:$0xff]
    %v3509 = vld [vmem:[#allocation12 + $0x8] sm:$0xff]
    %v3510 = vld [vmem:[#allocation12 + $0x10] sm:$0xff]
    %v3511 = vld [vmem:[#allocation12 + $0x18] sm:$0xff]
    %v3512 = vld [vmem:[#allocation12 + $0x20] sm:$0xff]
    %v3513 = vld [vmem:[#allocation12 + $0x28] sm:$0xff]
    %v3514 = vld [vmem:[#allocation12 + $0x30] sm:$0xff]
    %v3515 = vld [vmem:[#allocation12 + $0x38] sm:$0xff]
    %v3516 = vld [vmem:[#allocation12 + $0x40] sm:$0xff]
    %v3517 = vld [vmem:[#allocation12 + $0x48] sm:$0xff]
    %v3518 = vld [vmem:[#allocation12 + $0x50] sm:$0xff]
    %v3519 = vld [vmem:[#allocation12 + $0x58] sm:$0xff]
    %v3520 = vld [vmem:[#allocation12 + $0x60] sm:$0xff]
    %v3521 = vld [vmem:[#allocation12 + $0x68] sm:$0xff]
    %v3522 = vld [vmem:[#allocation12 + $0x70] sm:$0xff]
    %v3523 = vld [vmem:[#allocation12 + $0x78] sm:$0xff]
    %v3524 = vld [vmem:[#allocation13] sm:$0x3]
    %v3526 = vlaneseq
    %v3527 = vshrl.u32 %v3526, 7
    %v3528 = vsub.s32 0, %v3527
    %v3529 = vrot.slane %v3524, %v3528
    %v3530 = vlaneseq
    %v3531 = vshrl.u32 %v3530, 7
    %v3532 = vsub.s32 1, %v3531
    %v3533 = vrot.slane %v3524, %v3532
    %v3552 = vunpack.c.l.b16 %v3508
    %v3553 = vunpack.c.h.b16 %v3508
    %v3554 = vunpack.c.l.b16 %v3509
    %v3555 = vunpack.c.h.b16 %v3509
    %v3556 = vunpack.c.l.b16 %v3510
    %v3557 = vunpack.c.h.b16 %v3510
    %v3558 = vunpack.c.l.b16 %v3511
    %v3559 = vunpack.c.h.b16 %v3511
    %v3560 = vunpack.c.l.b16 %v3512
    %v3561 = vunpack.c.h.b16 %v3512
    %v3562 = vunpack.c.l.b16 %v3513
    %v3563 = vunpack.c.h.b16 %v3513
    %v3564 = vunpack.c.l.b16 %v3514
    %v3565 = vunpack.c.h.b16 %v3514
    %v3566 = vunpack.c.l.b16 %v3515
    %v3567 = vunpack.c.h.b16 %v3515
    %v3568 = vunpack.c.l.b16 %v3516
    %v3569 = vunpack.c.h.b16 %v3516
    %v3570 = vunpack.c.l.b16 %v3517
    %v3571 = vunpack.c.h.b16 %v3517
    %v3572 = vunpack.c.l.b16 %v3518
    %v3573 = vunpack.c.h.b16 %v3518
    %v3574 = vunpack.c.l.b16 %v3519
    %v3575 = vunpack.c.h.b16 %v3519
    %v3576 = vunpack.c.l.b16 %v3520
    %v3577 = vunpack.c.h.b16 %v3520
    %v3578 = vunpack.c.l.b16 %v3521
    %v3579 = vunpack.c.h.b16 %v3521
    %v3580 = vunpack.c.l.b16 %v3522
    %v3581 = vunpack.c.h.b16 %v3522
    %v3582 = vunpack.c.l.b16 %v3523
    %v3583 = vunpack.c.h.b16 %v3523
    %v3584 = vpack.c.b16 %v3554, %v3552
    %v3585 = vpack.c.b16 %v3555, %v3553
    %v3586 = vpack.c.b16 %v3558, %v3556
    %v3587 = vpack.c.b16 %v3559, %v3557
    %v3588 = vpack.c.b16 %v3562, %v3560
    %v3589 = vpack.c.b16 %v3563, %v3561
    %v3590 = vpack.c.b16 %v3566, %v3564
    %v3591 = vpack.c.b16 %v3567, %v3565
    %v3592 = vpack.c.b16 %v3570, %v3568
    %v3593 = vpack.c.b16 %v3571, %v3569
    %v3594 = vpack.c.b16 %v3574, %v3572
    %v3595 = vpack.c.b16 %v3575, %v3573
    %v3596 = vpack.c.b16 %v3578, %v3576
    %v3597 = vpack.c.b16 %v3579, %v3577
    %v3598 = vpack.c.b16 %v3582, %v3580
    %v3599 = vpack.c.b16 %v3583, %v3581
    %3616 = vmatprep.subr.bf16.mxu0 %v3585
    %3617 = vmatpush1.bf16.msra.mxu0 %v3584
    %3618 = vmatprep.subr.bf16.mxu0 %v3587
    %3619 = vmatpush1.bf16.msra.mxu0 %v3586
    %3620 = vmatprep.subr.bf16.mxu0 %v3589
    %3621 = vmatpush1.bf16.msra.mxu0 %v3588
    %3622 = vmatprep.subr.bf16.mxu0 %v3591
    %3623 = vmatpush1.bf16.msra.mxu0 %v3590
    %3624 = vmatprep.subr.bf16.mxu0 %v3593
    %3625 = vmatpush1.bf16.msra.mxu0 %v3592
    %3626 = vmatprep.subr.bf16.mxu0 %v3595
    %3627 = vmatpush1.bf16.msra.mxu0 %v3594
    %3628 = vmatprep.subr.bf16.mxu0 %v3597
    %3629 = vmatpush1.bf16.msra.mxu0 %v3596
    %3630 = vmatprep.subr.bf16.mxu0 %v3599
    %3631 = vmatpush1.bf16.msra.mxu0 %v3598
    %3632 = vmatprep.subr.bf16.mxu0 0
    %3633 = vmatpush1.bf16.msra.mxu0 0
    %3634 = vmatprep.subr.bf16.mxu0 0
    %3635 = vmatpush1.bf16.msra.mxu0 0
    %3636 = vmatprep.subr.bf16.mxu0 0
    %3637 = vmatpush1.bf16.msra.mxu0 0
    %3638 = vmatprep.subr.bf16.mxu0 0
    %3639 = vmatpush1.bf16.msra.mxu0 0
    %3640 = vmatprep.subr.bf16.mxu0 0
    %3641 = vmatpush1.bf16.msra.mxu0 0
    %3642 = vmatprep.subr.bf16.mxu0 0
    %3643 = vmatpush1.bf16.msra.mxu0 0
    %3644 = vmatprep.subr.bf16.mxu0 0
    %3645 = vmatpush1.bf16.msra.mxu0 0
    %3646 = vmatprep.subr.bf16.mxu0 0
    %3647 = vmatpush1.bf16.msra.mxu0 0
    %3648 = vmatprep.mubr.bf16.mxu0 0
    %3649 = vmatmul.mubr.bf16.gmra.mrb[0].mxu0 %v3507
    %v3650 = vpop.f32.mrb[0].mxu0
    %v3651 = vadd.f32 %v3529, %v3650
    %v3652 = vpop.f32.mrb[0].mxu0
    %v3653 = vadd.f32 %v3533, %v3652
    %v3654 = vpop.f32.mrb[0].mxu0
    %v3655 = vadd.f32 %v3529, %v3654
    %v3656 = vpop.f32.mrb[0].mxu0
    %v3657 = vadd.f32 %v3533, %v3656
    %3658 = vdwg.mxu0
    %v3659 = vxor.u32 %v3651, 2147483648
    %v3660 = vxor.u32 %v3653, 2147483648
    %v3661 = vxor.u32 %v3655, 2147483648
    %v3662 = vxor.u32 %v3657, 2147483648
    %v3663 = vmul.f32 %v3659, 1.442695
    %v3664 = vpow.pop %v3663
    %v3665 = vmul.f32 %v3660, 1.442695
    %v3666 = vpow.pop %v3665
    %v3667 = vmul.f32 %v3661, 1.442695
    %v3668 = vpow.pop %v3667
    %v3669 = vmul.f32 %v3662, 1.442695
    %v3670 = vpow.pop %v3669
    %v3671 = vadd.f32 %v3664, 1.0
    %v3672 = vadd.f32 %v3666, 1.0
    %v3673 = vadd.f32 %v3668, 1.0
    %v3674 = vadd.f32 %v3670, 1.0
    %v3675 = vrcp.pop %v3671
    %v3676 = vmul.f32 1.0, %v3675
    %v3677 = vrcp.pop %v3672
    %v3678 = vmul.f32 1.0, %v3677
    %v3679 = vrcp.pop %v3673
    %v3680 = vmul.f32 1.0, %v3679
    %v3681 = vrcp.pop %v3674
    %v3682 = vmul.f32 1.0, %v3681
    %v3683 = vpack.c.bf16 %v3680, %v3676
    %v3684 = vpack.c.bf16 %v3682, %v3678
    %v3685 = vld [vmem:[#allocation15] sm:$0xff]
    %v3686 = vld [vmem:[#allocation15 + $0x8] sm:$0xf]
    %v3687 = vld [vmem:[#allocation15 + $0xc] sm:$0xff]
    %v3688 = vld [vmem:[#allocation15 + $0x14] sm:$0xf]
    %v3689 = vld [vmem:[#allocation15 + $0x18] sm:$0xff]
    %v3690 = vld [vmem:[#allocation15 + $0x20] sm:$0xf]
    %v3691 = vld [vmem:[#allocation15 + $0x24] sm:$0xff]
    %v3692 = vld [vmem:[#allocation15 + $0x2c] sm:$0xf]
    %v3693 = vld [vmem:[#allocation15 + $0x30] sm:$0xff]
    %v3694 = vld [vmem:[#allocation15 + $0x38] sm:$0xf]
    %v3695 = vld [vmem:[#allocation15 + $0x3c] sm:$0xff]
    %v3696 = vld [vmem:[#allocation15 + $0x44] sm:$0xf]
    %v3697 = vld [vmem:[#allocation15 + $0x48] sm:$0xff]
    %v3698 = vld [vmem:[#allocation15 + $0x50] sm:$0xf]
    %v3699 = vld [vmem:[#allocation15 + $0x54] sm:$0xff]
    %v3700 = vld [vmem:[#allocation15 + $0x5c] sm:$0xf]
    %v3701 = vld [vmem:[#allocation15 + $0x60] sm:$0xff]
    %v3702 = vld [vmem:[#allocation15 + $0x68] sm:$0xf]
    %v3703 = vld [vmem:[#allocation15 + $0x6c] sm:$0xff]
    %v3704 = vld [vmem:[#allocation15 + $0x74] sm:$0xf]
    %v3705 = vld [vmem:[#allocation15 + $0x78] sm:$0xff]
    %v3706 = vld [vmem:[#allocation15 + $0x80] sm:$0xf]
    %v3707 = vld [vmem:[#allocation15 + $0x84] sm:$0xff]
    %v3708 = vld [vmem:[#allocation15 + $0x8c] sm:$0xf]
    %v3709 = vld [vmem:[#allocation15 + $0x90] sm:$0xff]
    %v3710 = vld [vmem:[#allocation15 + $0x98] sm:$0xf]
    %v3711 = vld [vmem:[#allocation15 + $0x9c] sm:$0xff]
    %v3712 = vld [vmem:[#allocation15 + $0xa4] sm:$0xf]
    %v3713 = vld [vmem:[#allocation15 + $0xa8] sm:$0xff]
    %v3714 = vld [vmem:[#allocation15 + $0xb0] sm:$0xf]
    %v3715 = vld [vmem:[#allocation15 + $0xb4] sm:$0xff]
    %v3716 = vld [vmem:[#allocation15 + $0xbc] sm:$0xf]
    %v3717 = vld [vmem:[#allocation15 + $0xc0] sm:$0xff]
    %v3718 = vld [vmem:[#allocation15 + $0xc8] sm:$0xf]
    %v3719 = vld [vmem:[#allocation15 + $0xcc] sm:$0xff]
    %v3720 = vld [vmem:[#allocation15 + $0xd4] sm:$0xf]
    %v3721 = vld [vmem:[#allocation15 + $0xd8] sm:$0xff]
    %v3722 = vld [vmem:[#allocation15 + $0xe0] sm:$0xf]
    %v3723 = vld [vmem:[#allocation15 + $0xe4] sm:$0xff]
    %v3724 = vld [vmem:[#allocation15 + $0xec] sm:$0xf]
    %v3725 = vld [vmem:[#allocation15 + $0xf0] sm:$0xff]
    %v3726 = vld [vmem:[#allocation15 + $0xf8] sm:$0xf]
    %v3727 = vld [vmem:[#allocation15 + $0xfc] sm:$0xff]
    %v3728 = vld [vmem:[#allocation15 + $0x104] sm:$0xf]
    %v3729 = vld [vmem:[#allocation15 + $0x108] sm:$0xff]
    %v3730 = vld [vmem:[#allocation15 + $0x110] sm:$0xf]
    %v3731 = vld [vmem:[#allocation15 + $0x114] sm:$0xff]
    %v3732 = vld [vmem:[#allocation15 + $0x11c] sm:$0xf]
    %v3733 = vld [vmem:[#allocation15 + $0x120] sm:$0xff]
    %v3734 = vld [vmem:[#allocation15 + $0x128] sm:$0xf]
    %v3735 = vld [vmem:[#allocation15 + $0x12c] sm:$0xff]
    %v3736 = vld [vmem:[#allocation15 + $0x134] sm:$0xf]
    %v3737 = vld [vmem:[#allocation15 + $0x138] sm:$0xff]
    %v3738 = vld [vmem:[#allocation15 + $0x140] sm:$0xf]
    %v3739 = vld [vmem:[#allocation15 + $0x144] sm:$0xff]
    %v3740 = vld [vmem:[#allocation15 + $0x14c] sm:$0xf]
    %v3741 = vld [vmem:[#allocation15 + $0x150] sm:$0xff]
    %v3742 = vld [vmem:[#allocation15 + $0x158] sm:$0xf]
    %v3743 = vld [vmem:[#allocation15 + $0x15c] sm:$0xff]
    %v3744 = vld [vmem:[#allocation15 + $0x164] sm:$0xf]
    %v3745 = vld [vmem:[#allocation15 + $0x168] sm:$0xff]
    %v3746 = vld [vmem:[#allocation15 + $0x170] sm:$0xf]
    %v3747 = vld [vmem:[#allocation15 + $0x174] sm:$0xff]
    %v3748 = vld [vmem:[#allocation15 + $0x17c] sm:$0xf]
    %v3749 = vld [vmem:[#allocation16] sm:$0x7]
    %v3751 = vlaneseq
    %v3752 = vshrl.u32 %v3751, 7
    %v3753 = vsub.s32 0, %v3752
    %v3754 = vrot.slane %v3749, %v3753
    %v3755 = vlaneseq
    %v3756 = vshrl.u32 %v3755, 7
    %v3757 = vsub.s32 1, %v3756
    %v3758 = vrot.slane %v3749, %v3757
    %v3759 = vlaneseq
    %v3760 = vshrl.u32 %v3759, 7
    %v3761 = vsub.s32 2, %v3760
    %v3762 = vrot.slane %v3749, %v3761
    %v3830 = vunpack.c.l.b16 %v3685
    %v3831 = vunpack.c.h.b16 %v3685
    %v3832 = vunpack.c.l.b16 %v3686
    %v3833 = vunpack.c.l.b16 %v3687
    %v3834 = vunpack.c.h.b16 %v3687
    %v3835 = vunpack.c.l.b16 %v3688
    %v3836 = vunpack.c.l.b16 %v3689
    %v3837 = vunpack.c.h.b16 %v3689
    %v3838 = vunpack.c.l.b16 %v3690
    %v3839 = vunpack.c.l.b16 %v3691
    %v3840 = vunpack.c.h.b16 %v3691
    %v3841 = vunpack.c.l.b16 %v3692
    %v3842 = vunpack.c.l.b16 %v3693
    %v3843 = vunpack.c.h.b16 %v3693
    %v3844 = vunpack.c.l.b16 %v3694
    %v3845 = vunpack.c.l.b16 %v3695
    %v3846 = vunpack.c.h.b16 %v3695
    %v3847 = vunpack.c.l.b16 %v3696
    %v3848 = vunpack.c.l.b16 %v3697
    %v3849 = vunpack.c.h.b16 %v3697
    %v3850 = vunpack.c.l.b16 %v3698
    %v3851 = vunpack.c.l.b16 %v3699
    %v3852 = vunpack.c.h.b16 %v3699
    %v3853 = vunpack.c.l.b16 %v3700
    %v3854 = vunpack.c.l.b16 %v3701
    %v3855 = vunpack.c.h.b16 %v3701
    %v3856 = vunpack.c.l.b16 %v3702
    %v3857 = vunpack.c.l.b16 %v3703
    %v3858 = vunpack.c.h.b16 %v3703
    %v3859 = vunpack.c.l.b16 %v3704
    %v3860 = vunpack.c.l.b16 %v3705
    %v3861 = vunpack.c.h.b16 %v3705
    %v3862 = vunpack.c.l.b16 %v3706
    %v3863 = vunpack.c.l.b16 %v3707
    %v3864 = vunpack.c.h.b16 %v3707
    %v3865 = vunpack.c.l.b16 %v3708
    %v3866 = vunpack.c.l.b16 %v3709
    %v3867 = vunpack.c.h.b16 %v3709
    %v3868 = vunpack.c.l.b16 %v3710
    %v3869 = vunpack.c.l.b16 %v3711
    %v3870 = vunpack.c.h.b16 %v3711
    %v3871 = vunpack.c.l.b16 %v3712
    %v3872 = vunpack.c.l.b16 %v3713
    %v3873 = vunpack.c.h.b16 %v3713
    %v3874 = vunpack.c.l.b16 %v3714
    %v3875 = vunpack.c.l.b16 %v3715
    %v3876 = vunpack.c.h.b16 %v3715
    %v3877 = vunpack.c.l.b16 %v3716
    %v3878 = vunpack.c.l.b16 %v3717
    %v3879 = vunpack.c.h.b16 %v3717
    %v3880 = vunpack.c.l.b16 %v3718
    %v3881 = vunpack.c.l.b16 %v3719
    %v3882 = vunpack.c.h.b16 %v3719
    %v3883 = vunpack.c.l.b16 %v3720
    %v3884 = vunpack.c.l.b16 %v3721
    %v3885 = vunpack.c.h.b16 %v3721
    %v3886 = vunpack.c.l.b16 %v3722
    %v3887 = vunpack.c.l.b16 %v3723
    %v3888 = vunpack.c.h.b16 %v3723
    %v3889 = vunpack.c.l.b16 %v3724
    %v3890 = vunpack.c.l.b16 %v3725
    %v3891 = vunpack.c.h.b16 %v3725
    %v3892 = vunpack.c.l.b16 %v3726
    %v3893 = vunpack.c.l.b16 %v3727
    %v3894 = vunpack.c.h.b16 %v3727
    %v3895 = vunpack.c.l.b16 %v3728
    %v3896 = vunpack.c.l.b16 %v3729
    %v3897 = vunpack.c.h.b16 %v3729
    %v3898 = vunpack.c.l.b16 %v3730
    %v3899 = vunpack.c.l.b16 %v3731
    %v3900 = vunpack.c.h.b16 %v3731
    %v3901 = vunpack.c.l.b16 %v3732
    %v3902 = vunpack.c.l.b16 %v3733
    %v3903 = vunpack.c.h.b16 %v3733
    %v3904 = vunpack.c.l.b16 %v3734
    %v3905 = vunpack.c.l.b16 %v3735
    %v3906 = vunpack.c.h.b16 %v3735
    %v3907 = vunpack.c.l.b16 %v3736
    %v3908 = vunpack.c.l.b16 %v3737
    %v3909 = vunpack.c.h.b16 %v3737
    %v3910 = vunpack.c.l.b16 %v3738
    %v3911 = vunpack.c.l.b16 %v3739
    %v3912 = vunpack.c.h.b16 %v3739
    %v3913 = vunpack.c.l.b16 %v3740
    %v3914 = vunpack.c.l.b16 %v3741
    %v3915 = vunpack.c.h.b16 %v3741
    %v3916 = vunpack.c.l.b16 %v3742
    %v3917 = vunpack.c.l.b16 %v3743
    %v3918 = vunpack.c.h.b16 %v3743
    %v3919 = vunpack.c.l.b16 %v3744
    %v3920 = vunpack.c.l.b16 %v3745
    %v3921 = vunpack.c.h.b16 %v3745
    %v3922 = vunpack.c.l.b16 %v3746
    %v3923 = vunpack.c.l.b16 %v3747
    %v3924 = vunpack.c.h.b16 %v3747
    %v3925 = vunpack.c.l.b16 %v3748
    %v3926 = vpack.c.b16 %v3833, %v3830
    %v3927 = vpack.c.b16 %v3834, %v3831
    %v3928 = vpack.c.b16 %v3835, %v3832
    %v3929 = vpack.c.b16 %v3839, %v3836
    %v3930 = vpack.c.b16 %v3840, %v3837
    %v3931 = vpack.c.b16 %v3841, %v3838
    %v3932 = vpack.c.b16 %v3845, %v3842
    %v3933 = vpack.c.b16 %v3846, %v3843
    %v3934 = vpack.c.b16 %v3847, %v3844
    %v3935 = vpack.c.b16 %v3851, %v3848
    %v3936 = vpack.c.b16 %v3852, %v3849
    %v3937 = vpack.c.b16 %v3853, %v3850
    %v3938 = vpack.c.b16 %v3857, %v3854
    %v3939 = vpack.c.b16 %v3858, %v3855
    %v3940 = vpack.c.b16 %v3859, %v3856
    %v3941 = vpack.c.b16 %v3863, %v3860
    %v3942 = vpack.c.b16 %v3864, %v3861
    %v3943 = vpack.c.b16 %v3865, %v3862
    %v3944 = vpack.c.b16 %v3869, %v3866
    %v3945 = vpack.c.b16 %v3870, %v3867
    %v3946 = vpack.c.b16 %v3871, %v3868
    %v3947 = vpack.c.b16 %v3875, %v3872
    %v3948 = vpack.c.b16 %v3876, %v3873
    %v3949 = vpack.c.b16 %v3877, %v3874
    %v3950 = vpack.c.b16 %v3881, %v3878
    %v3951 = vpack.c.b16 %v3882, %v3879
    %v3952 = vpack.c.b16 %v3883, %v3880
    %v3953 = vpack.c.b16 %v3887, %v3884
    %v3954 = vpack.c.b16 %v3888, %v3885
    %v3955 = vpack.c.b16 %v3889, %v3886
    %v3956 = vpack.c.b16 %v3893, %v3890
    %v3957 = vpack.c.b16 %v3894, %v3891
    %v3958 = vpack.c.b16 %v3895, %v3892
    %v3959 = vpack.c.b16 %v3899, %v3896
    %v3960 = vpack.c.b16 %v3900, %v3897
    %v3961 = vpack.c.b16 %v3901, %v3898
    %v3962 = vpack.c.b16 %v3905, %v3902
    %v3963 = vpack.c.b16 %v3906, %v3903
    %v3964 = vpack.c.b16 %v3907, %v3904
    %v3965 = vpack.c.b16 %v3911, %v3908
    %v3966 = vpack.c.b16 %v3912, %v3909
    %v3967 = vpack.c.b16 %v3913, %v3910
    %v3968 = vpack.c.b16 %v3917, %v3914
    %v3969 = vpack.c.b16 %v3918, %v3915
    %v3970 = vpack.c.b16 %v3919, %v3916
    %v3971 = vpack.c.b16 %v3923, %v3920
    %v3972 = vpack.c.b16 %v3924, %v3921
    %v3973 = vpack.c.b16 %v3925, %v3922
    %4022 = vmatprep.subr.bf16.mxu0 %v3927
    %4023 = vmatpush1.bf16.msra.mxu0 %v3926
    %4024 = vmatprep.subr.bf16.mxu0 %v3930
    %4025 = vmatpush1.bf16.msra.mxu0 %v3929
    %4026 = vmatprep.subr.bf16.mxu0 %v3933
    %4027 = vmatpush1.bf16.msra.mxu0 %v3932
    %4028 = vmatprep.subr.bf16.mxu0 %v3936
    %4029 = vmatpush1.bf16.msra.mxu0 %v3935
    %4030 = vmatprep.subr.bf16.mxu0 %v3939
    %4031 = vmatpush1.bf16.msra.mxu0 %v3938
    %4032 = vmatprep.subr.bf16.mxu0 %v3942
    %4033 = vmatpush1.bf16.msra.mxu0 %v3941
    %4034 = vmatprep.subr.bf16.mxu0 %v3945
    %4035 = vmatpush1.bf16.msra.mxu0 %v3944
    %4036 = vmatprep.subr.bf16.mxu0 %v3948
    %4037 = vmatpush1.bf16.msra.mxu0 %v3947
    %4038 = vmatprep.subr.bf16.mxu0 %v3951
    %4039 = vmatpush1.bf16.msra.mxu0 %v3950
    %4040 = vmatprep.subr.bf16.mxu0 %v3954
    %4041 = vmatpush1.bf16.msra.mxu0 %v3953
    %4042 = vmatprep.subr.bf16.mxu0 %v3957
    %4043 = vmatpush1.bf16.msra.mxu0 %v3956
    %4044 = vmatprep.subr.bf16.mxu0 %v3960
    %4045 = vmatpush1.bf16.msra.mxu0 %v3959
    %4046 = vmatprep.subr.bf16.mxu0 %v3963
    %4047 = vmatpush1.bf16.msra.mxu0 %v3962
    %4048 = vmatprep.subr.bf16.mxu0 %v3966
    %4049 = vmatpush1.bf16.msra.mxu0 %v3965
    %4050 = vmatprep.subr.bf16.mxu0 %v3969
    %4051 = vmatpush1.bf16.msra.mxu0 %v3968
    %4052 = vmatprep.subr.bf16.mxu0 %v3972
    %4053 = vmatpush1.bf16.msra.mxu0 %v3971
    %4054 = vmatprep.mubr.bf16.mxu0 %v3684
    %4055 = vmatmul.mubr.bf16.gmra.mrb[0].mxu0 %v3683
    %v4056 = vpop.f32.mrb[0].mxu0
    %v4057 = vadd.f32 %v3754, %v4056
    %v4058 = vpop.f32.mrb[0].mxu0
    %v4059 = vadd.f32 %v3758, %v4058
    %v4060 = vpop.f32.mrb[0].mxu0
    %v4061 = vadd.f32 %v3754, %v4060
    %v4062 = vpop.f32.mrb[0].mxu0
    %v4063 = vadd.f32 %v3758, %v4062
    %4064 = vdwg.mxu0
    %4065 = vmatprep.subr.bf16.mxu0 0
    %4066 = vmatpush1.bf16.msra.mxu0 %v3928
    %4067 = vmatprep.subr.bf16.mxu0 0
    %4068 = vmatpush1.bf16.msra.mxu0 %v3931
    %4069 = vmatprep.subr.bf16.mxu0 0
    %4070 = vmatpush1.bf16.msra.mxu0 %v3934
    %4071 = vmatprep.subr.bf16.mxu0 0
    %4072 = vmatpush1.bf16.msra.mxu0 %v3937
    %4073 = vmatprep.subr.bf16.mxu0 0
    %4074 = vmatpush1.bf16.msra.mxu0 %v3940
    %4075 = vmatprep.subr.bf16.mxu0 0
    %4076 = vmatpush1.bf16.msra.mxu0 %v3943
    %4077 = vmatprep.subr.bf16.mxu0 0
    %4078 = vmatpush1.bf16.msra.mxu0 %v3946
    %4079 = vmatprep.subr.bf16.mxu0 0
    %4080 = vmatpush1.bf16.msra.mxu0 %v3949
    %4081 = vmatprep.subr.bf16.mxu0 0
    %4082 = vmatpush1.bf16.msra.mxu0 %v3952
    %4083 = vmatprep.subr.bf16.mxu0 0
    %4084 = vmatpush1.bf16.msra.mxu0 %v3955
    %4085 = vmatprep.subr.bf16.mxu0 0
    %4086 = vmatpush1.bf16.msra.mxu0 %v3958
    %4087 = vmatprep.subr.bf16.mxu0 0
    %4088 = vmatpush1.bf16.msra.mxu0 %v3961
    %4089 = vmatprep.subr.bf16.mxu0 0
    %4090 = vmatpush1.bf16.msra.mxu0 %v3964
    %4091 = vmatprep.subr.bf16.mxu0 0
    %4092 = vmatpush1.bf16.msra.mxu0 %v3967
    %4093 = vmatprep.subr.bf16.mxu0 0
    %4094 = vmatpush1.bf16.msra.mxu0 %v3970
    %4095 = vmatprep.subr.bf16.mxu0 0
    %4096 = vmatpush1.bf16.msra.mxu0 %v3973
    %4097 = vmatprep.mubr.bf16.mxu0 %v3684
    %4098 = vmatmul.mubr.bf16.gmra.mrb[0].mxu0 %v3683
    %v4099 = vpop.f32.mrb[0].mxu0
    %v4100 = vadd.f32 %v3762, %v4099
    %v4101 = vpop.f32.mrb[0].mxu0
    %v4102 = vpop.f32.mrb[0].mxu0
    %v4103 = vadd.f32 %v3762, %v4102
    %v4104 = vpop.f32.mrb[0].mxu0
    %4105 = vdwg.mxu0
    %v4106 = vxor.u32 %v4057, 2147483648
    %v4107 = vxor.u32 %v4059, 2147483648
    %v4108 = vxor.u32 %v4100, 2147483648
    %v4109 = vxor.u32 %v4061, 2147483648
    %v4110 = vxor.u32 %v4063, 2147483648
    %v4111 = vxor.u32 %v4103, 2147483648
    %v4112 = vmul.f32 %v4106, 1.442695
    %v4113 = vpow.pop %v4112
    %v4114 = vmul.f32 %v4107, 1.442695
    %v4115 = vpow.pop %v4114
    %v4116 = vmul.f32 %v4108, 1.442695
    %v4117 = vpow.pop %v4116
    %v4118 = vmul.f32 %v4109, 1.442695
    %v4119 = vpow.pop %v4118
    %v4120 = vmul.f32 %v4110, 1.442695
    %v4121 = vpow.pop %v4120
    %v4122 = vmul.f32 %v4111, 1.442695
    %v4123 = vpow.pop %v4122
    %v4124 = vadd.f32 %v4113, 1.0
    %v4125 = vadd.f32 %v4115, 1.0
    %v4126 = vadd.f32 %v4117, 1.0
    %v4127 = vadd.f32 %v4119, 1.0
    %v4128 = vadd.f32 %v4121, 1.0
    %v4129 = vadd.f32 %v4123, 1.0
    %v4130 = vrcp.pop %v4124
    %v4131 = vmul.f32 1.0, %v4130
    %v4132 = vrcp.pop %v4125
    %v4133 = vmul.f32 1.0, %v4132
    %v4134 = vrcp.pop %v4126
    %v4135 = vmul.f32 1.0, %v4134
    %v4136 = vrcp.pop %v4127
    %v4137 = vmul.f32 1.0, %v4136
    %v4138 = vrcp.pop %v4128
    %v4139 = vmul.f32 1.0, %v4138
    %v4140 = vrcp.pop %v4129
    %v4141 = vmul.f32 1.0, %v4140
    %v4142 = vpack.c.bf16 %v4137, %v4131
    %v4143 = vpack.c.bf16 %v4139, %v4133
    %v4144 = vpack.c.bf16 %v4141, %v4135
    %v4145 = vld [vmem:[#allocation18] sm:$0xff]
    %v4146 = vld [vmem:[#allocation18 + $0x8] sm:$0xff]
    %v4147 = vld [vmem:[#allocation18 + $0x10] sm:$0xff]
    %v4148 = vld [vmem:[#allocation18 + $0x18] sm:$0xff]
    %v4149 = vld [vmem:[#allocation18 + $0x20] sm:$0xff]
    %v4150 = vld [vmem:[#allocation18 + $0x28] sm:$0xff]
    %v4151 = vld [vmem:[#allocation18 + $0x30] sm:$0xff]
    %v4152 = vld [vmem:[#allocation18 + $0x38] sm:$0xff]
    %v4153 = vld [vmem:[#allocation18 + $0x40] sm:$0xff]
    %v4154 = vld [vmem:[#allocation18 + $0x48] sm:$0xff]
    %v4155 = vld [vmem:[#allocation18 + $0x50] sm:$0xff]
    %v4156 = vld [vmem:[#allocation18 + $0x58] sm:$0xff]
    %v4157 = vld [vmem:[#allocation18 + $0x60] sm:$0xff]
    %v4158 = vld [vmem:[#allocation18 + $0x68] sm:$0xff]
    %v4159 = vld [vmem:[#allocation18 + $0x70] sm:$0xff]
    %v4160 = vld [vmem:[#allocation18 + $0x78] sm:$0xff]
    %v4161 = vld [vmem:[#allocation18 + $0x80] sm:$0xff]
    %v4162 = vld [vmem:[#allocation18 + $0x88] sm:$0xff]
    %v4163 = vld [vmem:[#allocation18 + $0x90] sm:$0xff]
    %v4164 = vld [vmem:[#allocation18 + $0x98] sm:$0xff]
    %v4165 = vld [vmem:[#allocation18 + $0xa0] sm:$0xff]
    %v4166 = vld [vmem:[#allocation18 + $0xa8] sm:$0xff]
    %v4167 = vld [vmem:[#allocation18 + $0xb0] sm:$0xff]
    %v4168 = vld [vmem:[#allocation18 + $0xb8] sm:$0xff]
    %v4169 = vld [vmem:[#allocation18 + $0xc0] sm:$0xff]
    %v4170 = vld [vmem:[#allocation18 + $0xc8] sm:$0xff]
    %v4171 = vld [vmem:[#allocation18 + $0xd0] sm:$0xff]
    %v4172 = vld [vmem:[#allocation18 + $0xd8] sm:$0xff]
    %v4173 = vld [vmem:[#allocation18 + $0xe0] sm:$0xff]
    %v4174 = vld [vmem:[#allocation18 + $0xe8] sm:$0xff]
    %v4175 = vld [vmem:[#allocation18 + $0xf0] sm:$0xff]
    %v4176 = vld [vmem:[#allocation18 + $0xf8] sm:$0xff]
    %v4177 = vld [vmem:[#allocation18 + $0x100] sm:$0xff]
    %v4178 = vld [vmem:[#allocation18 + $0x108] sm:$0xff]
    %v4179 = vld [vmem:[#allocation18 + $0x110] sm:$0xff]
    %v4180 = vld [vmem:[#allocation18 + $0x118] sm:$0xff]
    %v4181 = vld [vmem:[#allocation18 + $0x120] sm:$0xff]
    %v4182 = vld [vmem:[#allocation18 + $0x128] sm:$0xff]
    %v4183 = vld [vmem:[#allocation18 + $0x130] sm:$0xff]
    %v4184 = vld [vmem:[#allocation18 + $0x138] sm:$0xff]
    %v4185 = vld [vmem:[#allocation18 + $0x140] sm:$0xff]
    %v4186 = vld [vmem:[#allocation18 + $0x148] sm:$0xff]
    %v4187 = vld [vmem:[#allocation18 + $0x150] sm:$0xff]
    %v4188 = vld [vmem:[#allocation18 + $0x158] sm:$0xff]
    %v4189 = vld [vmem:[#allocation18 + $0x160] sm:$0xff]
    %v4190 = vld [vmem:[#allocation18 + $0x168] sm:$0xff]
    %v4191 = vld [vmem:[#allocation18 + $0x170] sm:$0xff]
    %v4192 = vld [vmem:[#allocation18 + $0x178] sm:$0xff]
    %v4193 = vld [vmem:[#allocation18 + $0x180] sm:$0xff]
    %v4194 = vld [vmem:[#allocation18 + $0x188] sm:$0xff]
    %v4195 = vld [vmem:[#allocation18 + $0x190] sm:$0xff]
    %v4196 = vld [vmem:[#allocation18 + $0x198] sm:$0xff]
    %v4197 = vld [vmem:[#allocation18 + $0x1a0] sm:$0xff]
    %v4198 = vld [vmem:[#allocation18 + $0x1a8] sm:$0xff]
    %v4199 = vld [vmem:[#allocation18 + $0x1b0] sm:$0xff]
    %v4200 = vld [vmem:[#allocation18 + $0x1b8] sm:$0xff]
    %v4201 = vld [vmem:[#allocation18 + $0x1c0] sm:$0xff]
    %v4202 = vld [vmem:[#allocation18 + $0x1c8] sm:$0xff]
    %v4203 = vld [vmem:[#allocation18 + $0x1d0] sm:$0xff]
    %v4204 = vld [vmem:[#allocation18 + $0x1d8] sm:$0xff]
    %v4205 = vld [vmem:[#allocation18 + $0x1e0] sm:$0xff]
    %v4206 = vld [vmem:[#allocation18 + $0x1e8] sm:$0xff]
    %v4207 = vld [vmem:[#allocation18 + $0x1f0] sm:$0xff]
    %v4208 = vld [vmem:[#allocation18 + $0x1f8] sm:$0xff]
    %v4209 = vld [vmem:[#allocation18 + $0x200] sm:$0xff]
    %v4210 = vld [vmem:[#allocation18 + $0x208] sm:$0xff]
    %v4211 = vld [vmem:[#allocation18 + $0x210] sm:$0xff]
    %v4212 = vld [vmem:[#allocation18 + $0x218] sm:$0xff]
    %v4213 = vld [vmem:[#allocation18 + $0x220] sm:$0xff]
    %v4214 = vld [vmem:[#allocation18 + $0x228] sm:$0xff]
    %v4215 = vld [vmem:[#allocation18 + $0x230] sm:$0xff]
    %v4216 = vld [vmem:[#allocation18 + $0x238] sm:$0xff]
    %v4217 = vld [vmem:[#allocation18 + $0x240] sm:$0xff]
    %v4218 = vld [vmem:[#allocation18 + $0x248] sm:$0xff]
    %v4219 = vld [vmem:[#allocation18 + $0x250] sm:$0xff]
    %v4220 = vld [vmem:[#allocation18 + $0x258] sm:$0xff]
    %v4221 = vld [vmem:[#allocation18 + $0x260] sm:$0xff]
    %v4222 = vld [vmem:[#allocation18 + $0x268] sm:$0xff]
    %v4223 = vld [vmem:[#allocation18 + $0x270] sm:$0xff]
    %v4224 = vld [vmem:[#allocation18 + $0x278] sm:$0xff]
    %v4225 = vld [vmem:[#allocation18 + $0x280] sm:$0xff]
    %v4226 = vld [vmem:[#allocation18 + $0x288] sm:$0xff]
    %v4227 = vld [vmem:[#allocation18 + $0x290] sm:$0xff]
    %v4228 = vld [vmem:[#allocation18 + $0x298] sm:$0xff]
    %v4229 = vld [vmem:[#allocation18 + $0x2a0] sm:$0xff]
    %v4230 = vld [vmem:[#allocation18 + $0x2a8] sm:$0xff]
    %v4231 = vld [vmem:[#allocation18 + $0x2b0] sm:$0xff]
    %v4232 = vld [vmem:[#allocation18 + $0x2b8] sm:$0xff]
    %v4233 = vld [vmem:[#allocation18 + $0x2c0] sm:$0xff]
    %v4234 = vld [vmem:[#allocation18 + $0x2c8] sm:$0xff]
    %v4235 = vld [vmem:[#allocation18 + $0x2d0] sm:$0xff]
    %v4236 = vld [vmem:[#allocation18 + $0x2d8] sm:$0xff]
    %v4237 = vld [vmem:[#allocation18 + $0x2e0] sm:$0xff]
    %v4238 = vld [vmem:[#allocation18 + $0x2e8] sm:$0xff]
    %v4239 = vld [vmem:[#allocation18 + $0x2f0] sm:$0xff]
    %v4240 = vld [vmem:[#allocation18 + $0x2f8] sm:$0xff]
    %v4241 = vld [vmem:[#allocation19] sm:$0xf]
    %v4243 = vlaneseq
    %v4244 = vshrl.u32 %v4243, 7
    %v4245 = vsub.s32 0, %v4244
    %v4246 = vrot.slane %v4241, %v4245
    %v4247 = vlaneseq
    %v4248 = vshrl.u32 %v4247, 7
    %v4249 = vsub.s32 1, %v4248
    %v4250 = vrot.slane %v4241, %v4249
    %v4251 = vlaneseq
    %v4252 = vshrl.u32 %v4251, 7
    %v4253 = vsub.s32 2, %v4252
    %v4254 = vrot.slane %v4241, %v4253
    %v4255 = vlaneseq
    %v4256 = vshrl.u32 %v4255, 7
    %v4257 = vsub.s32 3, %v4256
    %v4258 = vrot.slane %v4241, %v4257
    %v4359 = vunpack.c.l.b16 %v4145
    %v4360 = vunpack.c.h.b16 %v4145
    %v4361 = vunpack.c.l.b16 %v4146
    %v4362 = vunpack.c.h.b16 %v4146
    %v4363 = vunpack.c.l.b16 %v4147
    %v4364 = vunpack.c.h.b16 %v4147
    %v4365 = vunpack.c.l.b16 %v4148
    %v4366 = vunpack.c.h.b16 %v4148
    %v4367 = vunpack.c.l.b16 %v4149
    %v4368 = vunpack.c.h.b16 %v4149
    %v4369 = vunpack.c.l.b16 %v4150
    %v4370 = vunpack.c.h.b16 %v4150
    %v4371 = vunpack.c.l.b16 %v4151
    %v4372 = vunpack.c.h.b16 %v4151
    %v4373 = vunpack.c.l.b16 %v4152
    %v4374 = vunpack.c.h.b16 %v4152
    %v4375 = vunpack.c.l.b16 %v4153
    %v4376 = vunpack.c.h.b16 %v4153
    %v4377 = vunpack.c.l.b16 %v4154
    %v4378 = vunpack.c.h.b16 %v4154
    %v4379 = vunpack.c.l.b16 %v4155
    %v4380 = vunpack.c.h.b16 %v4155
    %v4381 = vunpack.c.l.b16 %v4156
    %v4382 = vunpack.c.h.b16 %v4156
    %v4383 = vunpack.c.l.b16 %v4157
    %v4384 = vunpack.c.h.b16 %v4157
    %v4385 = vunpack.c.l.b16 %v4158
    %v4386 = vunpack.c.h.b16 %v4158
    %v4387 = vunpack.c.l.b16 %v4159
    %v4388 = vunpack.c.h.b16 %v4159
    %v4389 = vunpack.c.l.b16 %v4160
    %v4390 = vunpack.c.h.b16 %v4160
    %v4391 = vunpack.c.l.b16 %v4161
    %v4392 = vunpack.c.h.b16 %v4161
    %v4393 = vunpack.c.l.b16 %v4162
    %v4394 = vunpack.c.h.b16 %v4162
    %v4395 = vunpack.c.l.b16 %v4163
    %v4396 = vunpack.c.h.b16 %v4163
    %v4397 = vunpack.c.l.b16 %v4164
    %v4398 = vunpack.c.h.b16 %v4164
    %v4399 = vunpack.c.l.b16 %v4165
    %v4400 = vunpack.c.h.b16 %v4165
    %v4401 = vunpack.c.l.b16 %v4166
    %v4402 = vunpack.c.h.b16 %v4166
    %v4403 = vunpack.c.l.b16 %v4167
    %v4404 = vunpack.c.h.b16 %v4167
    %v4405 = vunpack.c.l.b16 %v4168
    %v4406 = vunpack.c.h.b16 %v4168
    %v4407 = vunpack.c.l.b16 %v4169
    %v4408 = vunpack.c.h.b16 %v4169
    %v4409 = vunpack.c.l.b16 %v4170
    %v4410 = vunpack.c.h.b16 %v4170
    %v4411 = vunpack.c.l.b16 %v4171
    %v4412 = vunpack.c.h.b16 %v4171
    %v4413 = vunpack.c.l.b16 %v4172
    %v4414 = vunpack.c.h.b16 %v4172
    %v4415 = vunpack.c.l.b16 %v4173
    %v4416 = vunpack.c.h.b16 %v4173
    %v4417 = vunpack.c.l.b16 %v4174
    %v4418 = vunpack.c.h.b16 %v4174
    %v4419 = vunpack.c.l.b16 %v4175
    %v4420 = vunpack.c.h.b16 %v4175
    %v4421 = vunpack.c.l.b16 %v4176
    %v4422 = vunpack.c.h.b16 %v4176
    %v4423 = vunpack.c.l.b16 %v4177
    %v4424 = vunpack.c.h.b16 %v4177
    %v4425 = vunpack.c.l.b16 %v4178
    %v4426 = vunpack.c.h.b16 %v4178
    %v4427 = vunpack.c.l.b16 %v4179
    %v4428 = vunpack.c.h.b16 %v4179
    %v4429 = vunpack.c.l.b16 %v4180
    %v4430 = vunpack.c.h.b16 %v4180
    %v4431 = vunpack.c.l.b16 %v4181
    %v4432 = vunpack.c.h.b16 %v4181
    %v4433 = vunpack.c.l.b16 %v4182
    %v4434 = vunpack.c.h.b16 %v4182
    %v4435 = vunpack.c.l.b16 %v4183
    %v4436 = vunpack.c.h.b16 %v4183
    %v4437 = vunpack.c.l.b16 %v4184
    %v4438 = vunpack.c.h.b16 %v4184
    %v4439 = vunpack.c.l.b16 %v4185
    %v4440 = vunpack.c.h.b16 %v4185
    %v4441 = vunpack.c.l.b16 %v4186
    %v4442 = vunpack.c.h.b16 %v4186
    %v4443 = vunpack.c.l.b16 %v4187
    %v4444 = vunpack.c.h.b16 %v4187
    %v4445 = vunpack.c.l.b16 %v4188
    %v4446 = vunpack.c.h.b16 %v4188
    %v4447 = vunpack.c.l.b16 %v4189
    %v4448 = vunpack.c.h.b16 %v4189
    %v4449 = vunpack.c.l.b16 %v4190
    %v4450 = vunpack.c.h.b16 %v4190
    %v4451 = vunpack.c.l.b16 %v4191
    %v4452 = vunpack.c.h.b16 %v4191
    %v4453 = vunpack.c.l.b16 %v4192
    %v4454 = vunpack.c.h.b16 %v4192
    %v4455 = vunpack.c.l.b16 %v4193
    %v4456 = vunpack.c.h.b16 %v4193
    %v4457 = vunpack.c.l.b16 %v4194
    %v4458 = vunpack.c.h.b16 %v4194
    %v4459 = vunpack.c.l.b16 %v4195
    %v4460 = vunpack.c.h.b16 %v4195
    %v4461 = vunpack.c.l.b16 %v4196
    %v4462 = vunpack.c.h.b16 %v4196
    %v4463 = vunpack.c.l.b16 %v4197
    %v4464 = vunpack.c.h.b16 %v4197
    %v4465 = vunpack.c.l.b16 %v4198
    %v4466 = vunpack.c.h.b16 %v4198
    %v4467 = vunpack.c.l.b16 %v4199
    %v4468 = vunpack.c.h.b16 %v4199
    %v4469 = vunpack.c.l.b16 %v4200
    %v4470 = vunpack.c.h.b16 %v4200
    %v4471 = vunpack.c.l.b16 %v4201
    %v4472 = vunpack.c.h.b16 %v4201
    %v4473 = vunpack.c.l.b16 %v4202
    %v4474 = vunpack.c.h.b16 %v4202
    %v4475 = vunpack.c.l.b16 %v4203
    %v4476 = vunpack.c.h.b16 %v4203
    %v4477 = vunpack.c.l.b16 %v4204
    %v4478 = vunpack.c.h.b16 %v4204
    %v4479 = vunpack.c.l.b16 %v4205
    %v4480 = vunpack.c.h.b16 %v4205
    %v4481 = vunpack.c.l.b16 %v4206
    %v4482 = vunpack.c.h.b16 %v4206
    %v4483 = vunpack.c.l.b16 %v4207
    %v4484 = vunpack.c.h.b16 %v4207
    %v4485 = vunpack.c.l.b16 %v4208
    %v4486 = vunpack.c.h.b16 %v4208
    %v4487 = vunpack.c.l.b16 %v4209
    %v4488 = vunpack.c.h.b16 %v4209
    %v4489 = vunpack.c.l.b16 %v4210
    %v4490 = vunpack.c.h.b16 %v4210
    %v4491 = vunpack.c.l.b16 %v4211
    %v4492 = vunpack.c.h.b16 %v4211
    %v4493 = vunpack.c.l.b16 %v4212
    %v4494 = vunpack.c.h.b16 %v4212
    %v4495 = vunpack.c.l.b16 %v4213
    %v4496 = vunpack.c.h.b16 %v4213
    %v4497 = vunpack.c.l.b16 %v4214
    %v4498 = vunpack.c.h.b16 %v4214
    %v4499 = vunpack.c.l.b16 %v4215
    %v4500 = vunpack.c.h.b16 %v4215
    %v4501 = vunpack.c.l.b16 %v4216
    %v4502 = vunpack.c.h.b16 %v4216
    %v4503 = vunpack.c.l.b16 %v4217
    %v4504 = vunpack.c.h.b16 %v4217
    %v4505 = vunpack.c.l.b16 %v4218
    %v4506 = vunpack.c.h.b16 %v4218
    %v4507 = vunpack.c.l.b16 %v4219
    %v4508 = vunpack.c.h.b16 %v4219
    %v4509 = vunpack.c.l.b16 %v4220
    %v4510 = vunpack.c.h.b16 %v4220
    %v4511 = vunpack.c.l.b16 %v4221
    %v4512 = vunpack.c.h.b16 %v4221
    %v4513 = vunpack.c.l.b16 %v4222
    %v4514 = vunpack.c.h.b16 %v4222
    %v4515 = vunpack.c.l.b16 %v4223
    %v4516 = vunpack.c.h.b16 %v4223
    %v4517 = vunpack.c.l.b16 %v4224
    %v4518 = vunpack.c.h.b16 %v4224
    %v4519 = vunpack.c.l.b16 %v4225
    %v4520 = vunpack.c.h.b16 %v4225
    %v4521 = vunpack.c.l.b16 %v4226
    %v4522 = vunpack.c.h.b16 %v4226
    %v4523 = vunpack.c.l.b16 %v4227
    %v4524 = vunpack.c.h.b16 %v4227
    %v4525 = vunpack.c.l.b16 %v4228
    %v4526 = vunpack.c.h.b16 %v4228
    %v4527 = vunpack.c.l.b16 %v4229
    %v4528 = vunpack.c.h.b16 %v4229
    %v4529 = vunpack.c.l.b16 %v4230
    %v4530 = vunpack.c.h.b16 %v4230
    %v4531 = vunpack.c.l.b16 %v4231
    %v4532 = vunpack.c.h.b16 %v4231
    %v4533 = vunpack.c.l.b16 %v4232
    %v4534 = vunpack.c.h.b16 %v4232
    %v4535 = vunpack.c.l.b16 %v4233
    %v4536 = vunpack.c.h.b16 %v4233
    %v4537 = vunpack.c.l.b16 %v4234
    %v4538 = vunpack.c.h.b16 %v4234
    %v4539 = vunpack.c.l.b16 %v4235
    %v4540 = vunpack.c.h.b16 %v4235
    %v4541 = vunpack.c.l.b16 %v4236
    %v4542 = vunpack.c.h.b16 %v4236
    %v4543 = vunpack.c.l.b16 %v4237
    %v4544 = vunpack.c.h.b16 %v4237
    %v4545 = vunpack.c.l.b16 %v4238
    %v4546 = vunpack.c.h.b16 %v4238
    %v4547 = vunpack.c.l.b16 %v4239
    %v4548 = vunpack.c.h.b16 %v4239
    %v4549 = vunpack.c.l.b16 %v4240
    %v4550 = vunpack.c.h.b16 %v4240
    %v4551 = vpack.c.b16 %v4363, %v4359
    %v4552 = vpack.c.b16 %v4364, %v4360
    %v4553 = vpack.c.b16 %v4365, %v4361
    %v4554 = vpack.c.b16 %v4366, %v4362
    %v4555 = vpack.c.b16 %v4371, %v4367
    %v4556 = vpack.c.b16 %v4372, %v4368
    %v4557 = vpack.c.b16 %v4373, %v4369
    %v4558 = vpack.c.b16 %v4374, %v4370
    %v4559 = vpack.c.b16 %v4379, %v4375
    %v4560 = vpack.c.b16 %v4380, %v4376
    %v4561 = vpack.c.b16 %v4381, %v4377
    %v4562 = vpack.c.b16 %v4382, %v4378
    %v4563 = vpack.c.b16 %v4387, %v4383
    %v4564 = vpack.c.b16 %v4388, %v4384
    %v4565 = vpack.c.b16 %v4389, %v4385
    %v4566 = vpack.c.b16 %v4390, %v4386
    %v4567 = vpack.c.b16 %v4395, %v4391
    %v4568 = vpack.c.b16 %v4396, %v4392
    %v4569 = vpack.c.b16 %v4397, %v4393
    %v4570 = vpack.c.b16 %v4398, %v4394
    %v4571 = vpack.c.b16 %v4403, %v4399
    %v4572 = vpack.c.b16 %v4404, %v4400
    %v4573 = vpack.c.b16 %v4405, %v4401
    %v4574 = vpack.c.b16 %v4406, %v4402
    %v4575 = vpack.c.b16 %v4411, %v4407
    %v4576 = vpack.c.b16 %v4412, %v4408
    %v4577 = vpack.c.b16 %v4413, %v4409
    %v4578 = vpack.c.b16 %v4414, %v4410
    %v4579 = vpack.c.b16 %v4419, %v4415
    %v4580 = vpack.c.b16 %v4420, %v4416
    %v4581 = vpack.c.b16 %v4421, %v4417
    %v4582 = vpack.c.b16 %v4422, %v4418
    %v4583 = vpack.c.b16 %v4427, %v4423
    %v4584 = vpack.c.b16 %v4428, %v4424
    %v4585 = vpack.c.b16 %v4429, %v4425
    %v4586 = vpack.c.b16 %v4430, %v4426
    %v4587 = vpack.c.b16 %v4435, %v4431
    %v4588 = vpack.c.b16 %v4436, %v4432
    %v4589 = vpack.c.b16 %v4437, %v4433
    %v4590 = vpack.c.b16 %v4438, %v4434
    %v4591 = vpack.c.b16 %v4443, %v4439
    %v4592 = vpack.c.b16 %v4444, %v4440
    %v4593 = vpack.c.b16 %v4445, %v4441
    %v4594 = vpack.c.b16 %v4446, %v4442
    %v4595 = vpack.c.b16 %v4451, %v4447
    %v4596 = vpack.c.b16 %v4452, %v4448
    %v4597 = vpack.c.b16 %v4453, %v4449
    %v4598 = vpack.c.b16 %v4454, %v4450
    %v4599 = vpack.c.b16 %v4459, %v4455
    %v4600 = vpack.c.b16 %v4460, %v4456
    %v4601 = vpack.c.b16 %v4461, %v4457
    %v4602 = vpack.c.b16 %v4462, %v4458
    %v4603 = vpack.c.b16 %v4467, %v4463
    %v4604 = vpack.c.b16 %v4468, %v4464
    %v4605 = vpack.c.b16 %v4469, %v4465
    %v4606 = vpack.c.b16 %v4470, %v4466
    %v4607 = vpack.c.b16 %v4475, %v4471
    %v4608 = vpack.c.b16 %v4476, %v4472
    %v4609 = vpack.c.b16 %v4477, %v4473
    %v4610 = vpack.c.b16 %v4478, %v4474
    %v4611 = vpack.c.b16 %v4483, %v4479
    %v4612 = vpack.c.b16 %v4484, %v4480
    %v4613 = vpack.c.b16 %v4485, %v4481
    %v4614 = vpack.c.b16 %v4486, %v4482
    %v4615 = vpack.c.b16 %v4491, %v4487
    %v4616 = vpack.c.b16 %v4492, %v4488
    %v4617 = vpack.c.b16 %v4493, %v4489
    %v4618 = vpack.c.b16 %v4494, %v4490
    %v4619 = vpack.c.b16 %v4499, %v4495
    %v4620 = vpack.c.b16 %v4500, %v4496
    %v4621 = vpack.c.b16 %v4501, %v4497
    %v4622 = vpack.c.b16 %v4502, %v4498
    %v4623 = vpack.c.b16 %v4507, %v4503
    %v4624 = vpack.c.b16 %v4508, %v4504
    %v4625 = vpack.c.b16 %v4509, %v4505
    %v4626 = vpack.c.b16 %v4510, %v4506
    %v4627 = vpack.c.b16 %v4515, %v4511
    %v4628 = vpack.c.b16 %v4516, %v4512
    %v4629 = vpack.c.b16 %v4517, %v4513
    %v4630 = vpack.c.b16 %v4518, %v4514
    %v4631 = vpack.c.b16 %v4523, %v4519
    %v4632 = vpack.c.b16 %v4524, %v4520
    %v4633 = vpack.c.b16 %v4525, %v4521
    %v4634 = vpack.c.b16 %v4526, %v4522
    %v4635 = vpack.c.b16 %v4531, %v4527
    %v4636 = vpack.c.b16 %v4532, %v4528
    %v4637 = vpack.c.b16 %v4533, %v4529
    %v4638 = vpack.c.b16 %v4534, %v4530
    %v4639 = vpack.c.b16 %v4539, %v4535
    %v4640 = vpack.c.b16 %v4540, %v4536
    %v4641 = vpack.c.b16 %v4541, %v4537
    %v4642 = vpack.c.b16 %v4542, %v4538
    %v4643 = vpack.c.b16 %v4547, %v4543
    %v4644 = vpack.c.b16 %v4548, %v4544
    %v4645 = vpack.c.b16 %v4549, %v4545
    %v4646 = vpack.c.b16 %v4550, %v4546
    %4743 = vmatprep.subr.bf16.mxu0 %v4552
    %4744 = vmatpush1.bf16.msra.mxu0 %v4551
    %4745 = vmatprep.subr.bf16.mxu0 %v4556
    %4746 = vmatpush1.bf16.msra.mxu0 %v4555
    %4747 = vmatprep.subr.bf16.mxu0 %v4560
    %4748 = vmatpush1.bf16.msra.mxu0 %v4559
    %4749 = vmatprep.subr.bf16.mxu0 %v4564
    %4750 = vmatpush1.bf16.msra.mxu0 %v4563
    %4751 = vmatprep.subr.bf16.mxu0 %v4568
    %4752 = vmatpush1.bf16.msra.mxu0 %v4567
    %4753 = vmatprep.subr.bf16.mxu0 %v4572
    %4754 = vmatpush1.bf16.msra.mxu0 %v4571
    %4755 = vmatprep.subr.bf16.mxu0 %v4576
    %4756 = vmatpush1.bf16.msra.mxu0 %v4575
    %4757 = vmatprep.subr.bf16.mxu0 %v4580
    %4758 = vmatpush1.bf16.msra.mxu0 %v4579
    %4759 = vmatprep.subr.bf16.mxu0 %v4584
    %4760 = vmatpush1.bf16.msra.mxu0 %v4583
    %4761 = vmatprep.subr.bf16.mxu0 %v4588
    %4762 = vmatpush1.bf16.msra.mxu0 %v4587
    %4763 = vmatprep.subr.bf16.mxu0 %v4592
    %4764 = vmatpush1.bf16.msra.mxu0 %v4591
    %4765 = vmatprep.subr.bf16.mxu0 %v4596
    %4766 = vmatpush1.bf16.msra.mxu0 %v4595
    %4767 = vmatprep.subr.bf16.mxu0 %v4600
    %4768 = vmatpush1.bf16.msra.mxu0 %v4599
    %4769 = vmatprep.subr.bf16.mxu0 %v4604
    %4770 = vmatpush1.bf16.msra.mxu0 %v4603
    %4771 = vmatprep.subr.bf16.mxu0 %v4608
    %4772 = vmatpush1.bf16.msra.mxu0 %v4607
    %4773 = vmatprep.subr.bf16.mxu0 %v4612
    %4774 = vmatpush1.bf16.msra.mxu0 %v4611
    %4775 = vmatprep.mubr.bf16.mxu0 %v4143
    %4776 = vmatmul.mubr.bf16.gmra.mrb[0].mxu0 %v4142
    %v4777 = vpop.f32.mrb[0].mxu0
    %v4778 = vadd.f32 %v4246, %v4777
    %v4779 = vpop.f32.mrb[0].mxu0
    %v4780 = vadd.f32 %v4250, %v4779
    %v4781 = vpop.f32.mrb[0].mxu0
    %v4782 = vadd.f32 %v4246, %v4781
    %v4783 = vpop.f32.mrb[0].mxu0
    %v4784 = vadd.f32 %v4250, %v4783
    %4785 = vdwg.mxu0
    %4786 = vmatprep.subr.bf16.mxu0 %v4616
    %4787 = vmatpush1.bf16.msra.mxu0 %v4615
    %4788 = vmatprep.subr.bf16.mxu0 %v4620
    %4789 = vmatpush1.bf16.msra.mxu0 %v4619
    %4790 = vmatprep.subr.bf16.mxu0 %v4624
    %4791 = vmatpush1.bf16.msra.mxu0 %v4623
    %4792 = vmatprep.subr.bf16.mxu0 %v4628
    %4793 = vmatpush1.bf16.msra.mxu0 %v4627
    %4794 = vmatprep.subr.bf16.mxu0 %v4632
    %4795 = vmatpush1.bf16.msra.mxu0 %v4631
    %4796 = vmatprep.subr.bf16.mxu0 %v4636
    %4797 = vmatpush1.bf16.msra.mxu0 %v4635
    %4798 = vmatprep.subr.bf16.mxu0 %v4640
    %4799 = vmatpush1.bf16.msra.mxu0 %v4639
    %4800 = vmatprep.subr.bf16.mxu0 %v4644
    %4801 = vmatpush1.bf16.msra.mxu0 %v4643
    %4802 = vmatprep.subr.bf16.mxu0 0
    %4803 = vmatpush1.bf16.msra.mxu0 0
    %4804 = vmatprep.subr.bf16.mxu0 0
    %4805 = vmatpush1.bf16.msra.mxu0 0
    %4806 = vmatprep.subr.bf16.mxu0 0
    %4807 = vmatpush1.bf16.msra.mxu0 0
    %4808 = vmatprep.subr.bf16.mxu0 0
    %4809 = vmatpush1.bf16.msra.mxu0 0
    %4810 = vmatprep.subr.bf16.mxu0 0
    %4811 = vmatpush1.bf16.msra.mxu0 0
    %4812 = vmatprep.subr.bf16.mxu0 0
    %4813 = vmatpush1.bf16.msra.mxu0 0
    %4814 = vmatprep.subr.bf16.mxu0 0
    %4815 = vmatpush1.bf16.msra.mxu0 0
    %4816 = vmatprep.subr.bf16.mxu0 0
    %4817 = vmatpush1.bf16.msra.mxu0 0
    %4818 = vmatprep.mubr.bf16.mxu0 0
    %4819 = vmatmul.mubr.bf16.gmra.mrb[0].mxu0 %v4144
    %v4820 = vpop.f32.mrb[0].mxu0
    %v4821 = vadd.f32 %v4778, %v4820
    %v4822 = vpop.f32.mrb[0].mxu0
    %v4823 = vadd.f32 %v4780, %v4822
    %v4824 = vpop.f32.mrb[0].mxu0
    %v4825 = vadd.f32 %v4782, %v4824
    %v4826 = vpop.f32.mrb[0].mxu0
    %v4827 = vadd.f32 %v4784, %v4826
    %4828 = vdwg.mxu0
    %4829 = vmatprep.subr.bf16.mxu0 %v4554
    %4830 = vmatpush1.bf16.msra.mxu0 %v4553
    %4831 = vmatprep.subr.bf16.mxu0 %v4558
    %4832 = vmatpush1.bf16.msra.mxu0 %v4557
    %4833 = vmatprep.subr.bf16.mxu0 %v4562
    %4834 = vmatpush1.bf16.msra.mxu0 %v4561
    %4835 = vmatprep.subr.bf16.mxu0 %v4566
    %4836 = vmatpush1.bf16.msra.mxu0 %v4565
    %4837 = vmatprep.subr.bf16.mxu0 %v4570
    %4838 = vmatpush1.bf16.msra.mxu0 %v4569
    %4839 = vmatprep.subr.bf16.mxu0 %v4574
    %4840 = vmatpush1.bf16.msra.mxu0 %v4573
    %4841 = vmatprep.subr.bf16.mxu0 %v4578
    %4842 = vmatpush1.bf16.msra.mxu0 %v4577
    %4843 = vmatprep.subr.bf16.mxu0 %v4582
    %4844 = vmatpush1.bf16.msra.mxu0 %v4581
    %4845 = vmatprep.subr.bf16.mxu0 %v4586
    %4846 = vmatpush1.bf16.msra.mxu0 %v4585
    %4847 = vmatprep.subr.bf16.mxu0 %v4590
    %4848 = vmatpush1.bf16.msra.mxu0 %v4589
    %4849 = vmatprep.subr.bf16.mxu0 %v4594
    %4850 = vmatpush1.bf16.msra.mxu0 %v4593
    %4851 = vmatprep.subr.bf16.mxu0 %v4598
    %4852 = vmatpush1.bf16.msra.mxu0 %v4597
    %4853 = vmatprep.subr.bf16.mxu0 %v4602
    %4854 = vmatpush1.bf16.msra.mxu0 %v4601
    %4855 = vmatprep.subr.bf16.mxu0 %v4606
    %4856 = vmatpush1.bf16.msra.mxu0 %v4605
    %4857 = vmatprep.subr.bf16.mxu0 %v4610
    %4858 = vmatpush1.bf16.msra.mxu0 %v4609
    %4859 = vmatprep.subr.bf16.mxu0 %v4614
    %4860 = vmatpush1.bf16.msra.mxu0 %v4613
    %4861 = vmatprep.mubr.bf16.mxu0 %v4143
    %4862 = vmatmul.mubr.bf16.gmra.mrb[0].mxu0 %v4142
    %v4863 = vpop.f32.mrb[0].mxu0
    %v4864 = vadd.f32 %v4254, %v4863
    %v4865 = vpop.f32.mrb[0].mxu0
    %v4866 = vadd.f32 %v4258, %v4865
    %v4867 = vpop.f32.mrb[0].mxu0
    %v4868 = vadd.f32 %v4254, %v4867
    %v4869 = vpop.f32.mrb[0].mxu0
    %v4870 = vadd.f32 %v4258, %v4869
    %4871 = vdwg.mxu0
    %4872 = vmatprep.subr.bf16.mxu0 %v4618
    %4873 = vmatpush1.bf16.msra.mxu0 %v4617
    %4874 = vmatprep.subr.bf16.mxu0 %v4622
    %4875 = vmatpush1.bf16.msra.mxu0 %v4621
    %4876 = vmatprep.subr.bf16.mxu0 %v4626
    %4877 = vmatpush1.bf16.msra.mxu0 %v4625
    %4878 = vmatprep.subr.bf16.mxu0 %v4630
    %4879 = vmatpush1.bf16.msra.mxu0 %v4629
    %4880 = vmatprep.subr.bf16.mxu0 %v4634
    %4881 = vmatpush1.bf16.msra.mxu0 %v4633
    %4882 = vmatprep.subr.bf16.mxu0 %v4638
    %4883 = vmatpush1.bf16.msra.mxu0 %v4637
    %4884 = vmatprep.subr.bf16.mxu0 %v4642
    %4885 = vmatpush1.bf16.msra.mxu0 %v4641
    %4886 = vmatprep.subr.bf16.mxu0 %v4646
    %4887 = vmatpush1.bf16.msra.mxu0 %v4645
    %4888 = vmatprep.subr.bf16.mxu0 0
    %4889 = vmatpush1.bf16.msra.mxu0 0
    %4890 = vmatprep.subr.bf16.mxu0 0
    %4891 = vmatpush1.bf16.msra.mxu0 0
    %4892 = vmatprep.subr.bf16.mxu0 0
    %4893 = vmatpush1.bf16.msra.mxu0 0
    %4894 = vmatprep.subr.bf16.mxu0 0
    %4895 = vmatpush1.bf16.msra.mxu0 0
    %4896 = vmatprep.subr.bf16.mxu0 0
    %4897 = vmatpush1.bf16.msra.mxu0 0
    %4898 = vmatprep.subr.bf16.mxu0 0
    %4899 = vmatpush1.bf16.msra.mxu0 0
    %4900 = vmatprep.subr.bf16.mxu0 0
    %4901 = vmatpush1.bf16.msra.mxu0 0
    %4902 = vmatprep.subr.bf16.mxu0 0
    %4903 = vmatpush1.bf16.msra.mxu0 0
    %4904 = vmatprep.mubr.bf16.mxu0 0
    %4905 = vmatmul.mubr.bf16.gmra.mrb[0].mxu0 %v4144
    %v4906 = vpop.f32.mrb[0].mxu0
    %v4907 = vadd.f32 %v4864, %v4906
    %v4908 = vpop.f32.mrb[0].mxu0
    %v4909 = vadd.f32 %v4866, %v4908
    %v4910 = vpop.f32.mrb[0].mxu0
    %v4911 = vadd.f32 %v4868, %v4910
    %v4912 = vpop.f32.mrb[0].mxu0
    %v4913 = vadd.f32 %v4870, %v4912
    %4914 = vdwg.mxu0
    %v4915 = vxor.u32 %v4821, 2147483648
    %v4916 = vxor.u32 %v4823, 2147483648
    %v4917 = vxor.u32 %v4907, 2147483648
    %v4918 = vxor.u32 %v4909, 2147483648
    %v4919 = vxor.u32 %v4825, 2147483648
    %v4920 = vxor.u32 %v4827, 2147483648
    %v4921 = vxor.u32 %v4911, 2147483648
    %v4922 = vxor.u32 %v4913, 2147483648
    %v4923 = vmul.f32 %v4915, 1.442695
    %v4924 = vpow.pop %v4923
    %v4925 = vmul.f32 %v4916, 1.442695
    %v4926 = vpow.pop %v4925
    %v4927 = vmul.f32 %v4917, 1.442695
    %v4928 = vpow.pop %v4927
    %v4929 = vmul.f32 %v4918, 1.442695
    %v4930 = vpow.pop %v4929
    %v4931 = vmul.f32 %v4919, 1.442695
    %v4932 = vpow.pop %v4931
    %v4933 = vmul.f32 %v4920, 1.442695
    %v4934 = vpow.pop %v4933
    %v4935 = vmul.f32 %v4921, 1.442695
    %v4936 = vpow.pop %v4935
    %v4937 = vmul.f32 %v4922, 1.442695
    %v4938 = vpow.pop %v4937
    %v4939 = vadd.f32 %v4924, 1.0
    %v4940 = vadd.f32 %v4926, 1.0
    %v4941 = vadd.f32 %v4928, 1.0
    %v4942 = vadd.f32 %v4930, 1.0
    %v4943 = vadd.f32 %v4932, 1.0
    %v4944 = vadd.f32 %v4934, 1.0
    %v4945 = vadd.f32 %v4936, 1.0
    %v4946 = vadd.f32 %v4938, 1.0
    %v4947 = vrcp.pop %v4939
    %v4948 = vmul.f32 1.0, %v4947
    %v4949 = vrcp.pop %v4940
    %v4950 = vmul.f32 1.0, %v4949
    %v4951 = vrcp.pop %v4941
    %v4952 = vmul.f32 1.0, %v4951
    %v4953 = vrcp.pop %v4942
    %v4954 = vmul.f32 1.0, %v4953
    %v4955 = vrcp.pop %v4943
    %v4956 = vmul.f32 1.0, %v4955
    %v4957 = vrcp.pop %v4944
    %v4958 = vmul.f32 1.0, %v4957
    %v4959 = vrcp.pop %v4945
    %v4960 = vmul.f32 1.0, %v4959
    %v4961 = vrcp.pop %v4946
    %v4962 = vmul.f32 1.0, %v4961
    %v4963 = vpack.c.bf16 %v4956, %v4948
    %v4964 = vpack.c.bf16 %v4958, %v4950
    %v4965 = vpack.c.bf16 %v4960, %v4952
    %v4966 = vpack.c.bf16 %v4962, %v4954
    %v4967 = vld [vmem:[#allocation21] sm:$0xff]
    %v4968 = vld [vmem:[#allocation21 + $0x8] sm:$0xff]
    %v4969 = vld [vmem:[#allocation21 + $0x10] sm:$0xff]
    %v4970 = vld [vmem:[#allocation21 + $0x18] sm:$0xf]
    %v4971 = vld [vmem:[#allocation21 + $0x1c] sm:$0xff]
    %v4972 = vld [vmem:[#allocation21 + $0x24] sm:$0xff]
    %v4973 = vld [vmem:[#allocation21 + $0x2c] sm:$0xff]
    %v4974 = vld [vmem:[#allocation21 + $0x34] sm:$0xf]
    %v4975 = vld [vmem:[#allocation21 + $0x38] sm:$0xff]
    %v4976 = vld [vmem:[#allocation21 + $0x40] sm:$0xff]
    %v4977 = vld [vmem:[#allocation21 + $0x48] sm:$0xff]
    %v4978 = vld [vmem:[#allocation21 + $0x50] sm:$0xf]
    %v4979 = vld [vmem:[#allocation21 + $0x54] sm:$0xff]
    %v4980 = vld [vmem:[#allocation21 + $0x5c] sm:$0xff]
    %v4981 = vld [vmem:[#allocation21 + $0x64] sm:$0xff]
    %v4982 = vld [vmem:[#allocation21 + $0x6c] sm:$0xf]
    %v4983 = vld [vmem:[#allocation21 + $0x70] sm:$0xff]
    %v4984 = vld [vmem:[#allocation21 + $0x78] sm:$0xff]
    %v4985 = vld [vmem:[#allocation21 + $0x80] sm:$0xff]
    %v4986 = vld [vmem:[#allocation21 + $0x88] sm:$0xf]
    %v4987 = vld [vmem:[#allocation21 + $0x8c] sm:$0xff]
    %v4988 = vld [vmem:[#allocation21 + $0x94] sm:$0xff]
    %v4989 = vld [vmem:[#allocation21 + $0x9c] sm:$0xff]
    %v4990 = vld [vmem:[#allocation21 + $0xa4] sm:$0xf]
    %v4991 = vld [vmem:[#allocation21 + $0xa8] sm:$0xff]
    %v4992 = vld [vmem:[#allocation21 + $0xb0] sm:$0xff]
    %v4993 = vld [vmem:[#allocation21 + $0xb8] sm:$0xff]
    %v4994 = vld [vmem:[#allocation21 + $0xc0] sm:$0xf]
    %v4995 = vld [vmem:[#allocation21 + $0xc4] sm:$0xff]
    %v4996 = vld [vmem:[#allocation21 + $0xcc] sm:$0xff]
    %v4997 = vld [vmem:[#allocation21 + $0xd4] sm:$0xff]
    %v4998 = vld [vmem:[#allocation21 + $0xdc] sm:$0xf]
    %v4999 = vld [vmem:[#allocation21 + $0xe0] sm:$0xff]
    %v5000 = vld [vmem:[#allocation21 + $0xe8] sm:$0xff]
    %v5001 = vld [vmem:[#allocation21 + $0xf0] sm:$0xff]
    %v5002 = vld [vmem:[#allocation21 + $0xf8] sm:$0xf]
    %v5003 = vld [vmem:[#allocation21 + $0xfc] sm:$0xff]
    %v5004 = vld [vmem:[#allocation21 + $0x104] sm:$0xff]
    %v5005 = vld [vmem:[#allocation21 + $0x10c] sm:$0xff]
    %v5006 = vld [vmem:[#allocation21 + $0x114] sm:$0xf]
    %v5007 = vld [vmem:[#allocation21 + $0x118] sm:$0xff]
    %v5008 = vld [vmem:[#allocation21 + $0x120] sm:$0xff]
    %v5009 = vld [vmem:[#allocation21 + $0x128] sm:$0xff]
    %v5010 = vld [vmem:[#allocation21 + $0x130] sm:$0xf]
    %v5011 = vld [vmem:[#allocation21 + $0x134] sm:$0xff]
    %v5012 = vld [vmem:[#allocation21 + $0x13c] sm:$0xff]
    %v5013 = vld [vmem:[#allocation21 + $0x144] sm:$0xff]
    %v5014 = vld [vmem:[#allocation21 + $0x14c] sm:$0xf]
    %v5015 = vld [vmem:[#allocation21 + $0x150] sm:$0xff]
    %v5016 = vld [vmem:[#allocation21 + $0x158] sm:$0xff]
    %v5017 = vld [vmem:[#allocation21 + $0x160] sm:$0xff]
    %v5018 = vld [vmem:[#allocation21 + $0x168] sm:$0xf]
    %v5019 = vld [vmem:[#allocation21 + $0x16c] sm:$0xff]
    %v5020 = vld [vmem:[#allocation21 + $0x174] sm:$0xff]
    %v5021 = vld [vmem:[#allocation21 + $0x17c] sm:$0xff]
    %v5022 = vld [vmem:[#allocation21 + $0x184] sm:$0xf]
    %v5023 = vld [vmem:[#allocation21 + $0x188] sm:$0xff]
    %v5024 = vld [vmem:[#allocation21 + $0x190] sm:$0xff]
    %v5025 = vld [vmem:[#allocation21 + $0x198] sm:$0xff]
    %v5026 = vld [vmem:[#allocation21 + $0x1a0] sm:$0xf]
    %v5027 = vld [vmem:[#allocation21 + $0x1a4] sm:$0xff]
    %v5028 = vld [vmem:[#allocation21 + $0x1ac] sm:$0xff]
    %v5029 = vld [vmem:[#allocation21 + $0x1b4] sm:$0xff]
    %v5030 = vld [vmem:[#allocation21 + $0x1bc] sm:$0xf]
    %v5031 = vld [vmem:[#allocation21 + $0x1c0] sm:$0xff]
    %v5032 = vld [vmem:[#allocation21 + $0x1c8] sm:$0xff]
    %v5033 = vld [vmem:[#allocation21 + $0x1d0] sm:$0xff]
    %v5034 = vld [vmem:[#allocation21 + $0x1d8] sm:$0xf]
    %v5035 = vld [vmem:[#allocation21 + $0x1dc] sm:$0xff]
    %v5036 = vld [vmem:[#allocation21 + $0x1e4] sm:$0xff]
    %v5037 = vld [vmem:[#allocation21 + $0x1ec] sm:$0xff]
    %v5038 = vld [vmem:[#allocation21 + $0x1f4] sm:$0xf]
    %v5039 = vld [vmem:[#allocation21 + $0x1f8] sm:$0xff]
    %v5040 = vld [vmem:[#allocation21 + $0x200] sm:$0xff]
    %v5041 = vld [vmem:[#allocation21 + $0x208] sm:$0xff]
    %v5042 = vld [vmem:[#allocation21 + $0x210] sm:$0xf]
    %v5043 = vld [vmem:[#allocation21 + $0x214] sm:$0xff]
    %v5044 = vld [vmem:[#allocation21 + $0x21c] sm:$0xff]
    %v5045 = vld [vmem:[#allocation21 + $0x224] sm:$0xff]
    %v5046 = vld [vmem:[#allocation21 + $0x22c] sm:$0xf]
    %v5047 = vld [vmem:[#allocation21 + $0x230] sm:$0xff]
    %v5048 = vld [vmem:[#allocation21 + $0x238] sm:$0xff]
    %v5049 = vld [vmem:[#allocation21 + $0x240] sm:$0xff]
    %v5050 = vld [vmem:[#allocation21 + $0x248] sm:$0xf]
    %v5051 = vld [vmem:[#allocation21 + $0x24c] sm:$0xff]
    %v5052 = vld [vmem:[#allocation21 + $0x254] sm:$0xff]
    %v5053 = vld [vmem:[#allocation21 + $0x25c] sm:$0xff]
    %v5054 = vld [vmem:[#allocation21 + $0x264] sm:$0xf]
    %v5055 = vld [vmem:[#allocation21 + $0x268] sm:$0xff]
    %v5056 = vld [vmem:[#allocation21 + $0x270] sm:$0xff]
    %v5057 = vld [vmem:[#allocation21 + $0x278] sm:$0xff]
    %v5058 = vld [vmem:[#allocation21 + $0x280] sm:$0xf]
    %v5059 = vld [vmem:[#allocation21 + $0x284] sm:$0xff]
    %v5060 = vld [vmem:[#allocation21 + $0x28c] sm:$0xff]
    %v5061 = vld [vmem:[#allocation21 + $0x294] sm:$0xff]
    %v5062 = vld [vmem:[#allocation21 + $0x29c] sm:$0xf]
    %v5063 = vld [vmem:[#allocation21 + $0x2a0] sm:$0xff]
    %v5064 = vld [vmem:[#allocation21 + $0x2a8] sm:$0xff]
    %v5065 = vld [vmem:[#allocation21 + $0x2b0] sm:$0xff]
    %v5066 = vld [vmem:[#allocation21 + $0x2b8] sm:$0xf]
    %v5067 = vld [vmem:[#allocation21 + $0x2bc] sm:$0xff]
    %v5068 = vld [vmem:[#allocation21 + $0x2c4] sm:$0xff]
    %v5069 = vld [vmem:[#allocation21 + $0x2cc] sm:$0xff]
    %v5070 = vld [vmem:[#allocation21 + $0x2d4] sm:$0xf]
    %v5071 = vld [vmem:[#allocation21 + $0x2d8] sm:$0xff]
    %v5072 = vld [vmem:[#allocation21 + $0x2e0] sm:$0xff]
    %v5073 = vld [vmem:[#allocation21 + $0x2e8] sm:$0xff]
    %v5074 = vld [vmem:[#allocation21 + $0x2f0] sm:$0xf]
    %v5075 = vld [vmem:[#allocation21 + $0x2f4] sm:$0xff]
    %v5076 = vld [vmem:[#allocation21 + $0x2fc] sm:$0xff]
    %v5077 = vld [vmem:[#allocation21 + $0x304] sm:$0xff]
    %v5078 = vld [vmem:[#allocation21 + $0x30c] sm:$0xf]
    %v5079 = vld [vmem:[#allocation21 + $0x310] sm:$0xff]
    %v5080 = vld [vmem:[#allocation21 + $0x318] sm:$0xff]
    %v5081 = vld [vmem:[#allocation21 + $0x320] sm:$0xff]
    %v5082 = vld [vmem:[#allocation21 + $0x328] sm:$0xf]
    %v5083 = vld [vmem:[#allocation21 + $0x32c] sm:$0xff]
    %v5084 = vld [vmem:[#allocation21 + $0x334] sm:$0xff]
    %v5085 = vld [vmem:[#allocation21 + $0x33c] sm:$0xff]
    %v5086 = vld [vmem:[#allocation21 + $0x344] sm:$0xf]
    %v5087 = vld [vmem:[#allocation21 + $0x348] sm:$0xff]
    %v5088 = vld [vmem:[#allocation21 + $0x350] sm:$0xff]
    %v5089 = vld [vmem:[#allocation21 + $0x358] sm:$0xff]
    %v5090 = vld [vmem:[#allocation21 + $0x360] sm:$0xf]
    %v5091 = vld [vmem:[#allocation21 + $0x364] sm:$0xff]
    %v5092 = vld [vmem:[#allocation21 + $0x36c] sm:$0xff]
    %v5093 = vld [vmem:[#allocation21 + $0x374] sm:$0xff]
    %v5094 = vld [vmem:[#allocation21 + $0x37c] sm:$0xf]
    %v5095 = vld [vmem:[#allocation21 + $0x380] sm:$0xff]
    %v5096 = vld [vmem:[#allocation21 + $0x388] sm:$0xff]
    %v5097 = vld [vmem:[#allocation21 + $0x390] sm:$0xff]
    %v5098 = vld [vmem:[#allocation21 + $0x398] sm:$0xf]
    %v5099 = vld [vmem:[#allocation21 + $0x39c] sm:$0xff]
    %v5100 = vld [vmem:[#allocation21 + $0x3a4] sm:$0xff]
    %v5101 = vld [vmem:[#allocation21 + $0x3ac] sm:$0xff]
    %v5102 = vld [vmem:[#allocation21 + $0x3b4] sm:$0xf]
    %v5103 = vld [vmem:[#allocation21 + $0x3b8] sm:$0xff]
    %v5104 = vld [vmem:[#allocation21 + $0x3c0] sm:$0xff]
    %v5105 = vld [vmem:[#allocation21 + $0x3c8] sm:$0xff]
    %v5106 = vld [vmem:[#allocation21 + $0x3d0] sm:$0xf]
    %v5107 = vld [vmem:[#allocation21 + $0x3d4] sm:$0xff]
    %v5108 = vld [vmem:[#allocation21 + $0x3dc] sm:$0xff]
    %v5109 = vld [vmem:[#allocation21 + $0x3e4] sm:$0xff]
    %v5110 = vld [vmem:[#allocation21 + $0x3ec] sm:$0xf]
    %v5111 = vld [vmem:[#allocation21 + $0x3f0] sm:$0xff]
    %v5112 = vld [vmem:[#allocation21 + $0x3f8] sm:$0xff]
    %v5113 = vld [vmem:[#allocation21 + $0x400] sm:$0xff]
    %v5114 = vld [vmem:[#allocation21 + $0x408] sm:$0xf]
    %v5115 = vld [vmem:[#allocation21 + $0x40c] sm:$0xff]
    %v5116 = vld [vmem:[#allocation21 + $0x414] sm:$0xff]
    %v5117 = vld [vmem:[#allocation21 + $0x41c] sm:$0xff]
    %v5118 = vld [vmem:[#allocation21 + $0x424] sm:$0xf]
    %v5119 = vld [vmem:[#allocation21 + $0x428] sm:$0xff]
    %v5120 = vld [vmem:[#allocation21 + $0x430] sm:$0xff]
    %v5121 = vld [vmem:[#allocation21 + $0x438] sm:$0xff]
    %v5122 = vld [vmem:[#allocation21 + $0x440] sm:$0xf]
    %v5123 = vld [vmem:[#allocation21 + $0x444] sm:$0xff]
    %v5124 = vld [vmem:[#allocation21 + $0x44c] sm:$0xff]
    %v5125 = vld [vmem:[#allocation21 + $0x454] sm:$0xff]
    %v5126 = vld [vmem:[#allocation21 + $0x45c] sm:$0xf]
    %v5127 = vld [vmem:[#allocation21 + $0x460] sm:$0xff]
    %v5128 = vld [vmem:[#allocation21 + $0x468] sm:$0xff]
    %v5129 = vld [vmem:[#allocation21 + $0x470] sm:$0xff]
    %v5130 = vld [vmem:[#allocation21 + $0x478] sm:$0xf]
    %v5131 = vld [vmem:[#allocation21 + $0x47c] sm:$0xff]
    %v5132 = vld [vmem:[#allocation21 + $0x484] sm:$0xff]
    %v5133 = vld [vmem:[#allocation21 + $0x48c] sm:$0xff]
    %v5134 = vld [vmem:[#allocation21 + $0x494] sm:$0xf]
    %v5135 = vld [vmem:[#allocation21 + $0x498] sm:$0xff]
    %v5136 = vld [vmem:[#allocation21 + $0x4a0] sm:$0xff]
    %v5137 = vld [vmem:[#allocation21 + $0x4a8] sm:$0xff]
    %v5138 = vld [vmem:[#allocation21 + $0x4b0] sm:$0xf]
    %v5139 = vld [vmem:[#allocation21 + $0x4b4] sm:$0xff]
    %v5140 = vld [vmem:[#allocation21 + $0x4bc] sm:$0xff]
    %v5141 = vld [vmem:[#allocation21 + $0x4c4] sm:$0xff]
    %v5142 = vld [vmem:[#allocation21 + $0x4cc] sm:$0xf]
    %v5143 = vld [vmem:[#allocation21 + $0x4d0] sm:$0xff]
    %v5144 = vld [vmem:[#allocation21 + $0x4d8] sm:$0xff]
    %v5145 = vld [vmem:[#allocation21 + $0x4e0] sm:$0xff]
    %v5146 = vld [vmem:[#allocation21 + $0x4e8] sm:$0xf]
    %v5147 = vld [vmem:[#allocation21 + $0x4ec] sm:$0xff]
    %v5148 = vld [vmem:[#allocation21 + $0x4f4] sm:$0xff]
    %v5149 = vld [vmem:[#allocation21 + $0x4fc] sm:$0xff]
    %v5150 = vld [vmem:[#allocation21 + $0x504] sm:$0xf]
    %v5151 = vld [vmem:[#allocation21 + $0x508] sm:$0xff]
    %v5152 = vld [vmem:[#allocation21 + $0x510] sm:$0xff]
    %v5153 = vld [vmem:[#allocation21 + $0x518] sm:$0xff]
    %v5154 = vld [vmem:[#allocation21 + $0x520] sm:$0xf]
    %v5155 = vld [vmem:[#allocation21 + $0x524] sm:$0xff]
    %v5156 = vld [vmem:[#allocation21 + $0x52c] sm:$0xff]
    %v5157 = vld [vmem:[#allocation21 + $0x534] sm:$0xff]
    %v5158 = vld [vmem:[#allocation21 + $0x53c] sm:$0xf]
    %v5159 = vld [vmem:[#allocation21 + $0x540] sm:$0xff]
    %v5160 = vld [vmem:[#allocation21 + $0x548] sm:$0xff]
    %v5161 = vld [vmem:[#allocation21 + $0x550] sm:$0xff]
    %v5162 = vld [vmem:[#allocation21 + $0x558] sm:$0xf]
    %v5163 = vld [vmem:[#allocation21 + $0x55c] sm:$0xff]
    %v5164 = vld [vmem:[#allocation21 + $0x564] sm:$0xff]
    %v5165 = vld [vmem:[#allocation21 + $0x56c] sm:$0xff]
    %v5166 = vld [vmem:[#allocation21 + $0x574] sm:$0xf]
    %v5167 = vld [vmem:[#allocation21 + $0x578] sm:$0xff]
    %v5168 = vld [vmem:[#allocation21 + $0x580] sm:$0xff]
    %v5169 = vld [vmem:[#allocation21 + $0x588] sm:$0xff]
    %v5170 = vld [vmem:[#allocation21 + $0x590] sm:$0xf]
    %v5171 = vld [vmem:[#allocation21 + $0x594] sm:$0xff]
    %v5172 = vld [vmem:[#allocation21 + $0x59c] sm:$0xff]
    %v5173 = vld [vmem:[#allocation21 + $0x5a4] sm:$0xff]
    %v5174 = vld [vmem:[#allocation21 + $0x5ac] sm:$0xf]
    %v5175 = vld [vmem:[#allocation21 + $0x5b0] sm:$0xff]
    %v5176 = vld [vmem:[#allocation21 + $0x5b8] sm:$0xff]
    %v5177 = vld [vmem:[#allocation21 + $0x5c0] sm:$0xff]
    %v5178 = vld [vmem:[#allocation21 + $0x5c8] sm:$0xf]
    %v5179 = vld [vmem:[#allocation21 + $0x5cc] sm:$0xff]
    %v5180 = vld [vmem:[#allocation21 + $0x5d4] sm:$0xff]
    %v5181 = vld [vmem:[#allocation21 + $0x5dc] sm:$0xff]
    %v5182 = vld [vmem:[#allocation21 + $0x5e4] sm:$0xf]
    %v5183 = vld [vmem:[#allocation21 + $0x5e8] sm:$0xff]
    %v5184 = vld [vmem:[#allocation21 + $0x5f0] sm:$0xff]
    %v5185 = vld [vmem:[#allocation21 + $0x5f8] sm:$0xff]
    %v5186 = vld [vmem:[#allocation21 + $0x600] sm:$0xf]
    %v5187 = vld [vmem:[#allocation21 + $0x604] sm:$0xff]
    %v5188 = vld [vmem:[#allocation21 + $0x60c] sm:$0xff]
    %v5189 = vld [vmem:[#allocation21 + $0x614] sm:$0xff]
    %v5190 = vld [vmem:[#allocation21 + $0x61c] sm:$0xf]
    %v5191 = vld [vmem:[#allocation21 + $0x620] sm:$0xff]
    %v5192 = vld [vmem:[#allocation21 + $0x628] sm:$0xff]
    %v5193 = vld [vmem:[#allocation21 + $0x630] sm:$0xff]
    %v5194 = vld [vmem:[#allocation21 + $0x638] sm:$0xf]
    %v5195 = vld [vmem:[#allocation21 + $0x63c] sm:$0xff]
    %v5196 = vld [vmem:[#allocation21 + $0x644] sm:$0xff]
    %v5197 = vld [vmem:[#allocation21 + $0x64c] sm:$0xff]
    %v5198 = vld [vmem:[#allocation21 + $0x654] sm:$0xf]
    %v5199 = vld [vmem:[#allocation21 + $0x658] sm:$0xff]
    %v5200 = vld [vmem:[#allocation21 + $0x660] sm:$0xff]
    %v5201 = vld [vmem:[#allocation21 + $0x668] sm:$0xff]
    %v5202 = vld [vmem:[#allocation21 + $0x670] sm:$0xf]
    %v5203 = vld [vmem:[#allocation21 + $0x674] sm:$0xff]
    %v5204 = vld [vmem:[#allocation21 + $0x67c] sm:$0xff]
    %v5205 = vld [vmem:[#allocation21 + $0x684] sm:$0xff]
    %v5206 = vld [vmem:[#allocation21 + $0x68c] sm:$0xf]
    %v5207 = vld [vmem:[#allocation21 + $0x690] sm:$0xff]
    %v5208 = vld [vmem:[#allocation21 + $0x698] sm:$0xff]
    %v5209 = vld [vmem:[#allocation21 + $0x6a0] sm:$0xff]
    %v5210 = vld [vmem:[#allocation21 + $0x6a8] sm:$0xf]
    %v5211 = vld [vmem:[#allocation21 + $0x6ac] sm:$0xff]
    %v5212 = vld [vmem:[#allocation21 + $0x6b4] sm:$0xff]
    %v5213 = vld [vmem:[#allocation21 + $0x6bc] sm:$0xff]
    %v5214 = vld [vmem:[#allocation21 + $0x6c4] sm:$0xf]
    %v5215 = vld [vmem:[#allocation21 + $0x6c8] sm:$0xff]
    %v5216 = vld [vmem:[#allocation21 + $0x6d0] sm:$0xff]
    %v5217 = vld [vmem:[#allocation21 + $0x6d8] sm:$0xff]
    %v5218 = vld [vmem:[#allocation21 + $0x6e0] sm:$0xf]
    %v5219 = vld [vmem:[#allocation21 + $0x6e4] sm:$0xff]
    %v5220 = vld [vmem:[#allocation21 + $0x6ec] sm:$0xff]
    %v5221 = vld [vmem:[#allocation21 + $0x6f4] sm:$0xff]
    %v5222 = vld [vmem:[#allocation21 + $0x6fc] sm:$0xf]
    %v5223 = vld [vmem:[#allocation22] sm:$0xff]
    %v5225 = vlaneseq
    %v5226 = vshrl.u32 %v5225, 7
    %v5227 = vsub.s32 0, %v5226
    %v5228 = vrot.slane %v5223, %v5227
    %v5229 = vlaneseq
    %v5230 = vshrl.u32 %v5229, 7
    %v5231 = vsub.s32 1, %v5230
    %v5232 = vrot.slane %v5223, %v5231
    %v5233 = vlaneseq
    %v5234 = vshrl.u32 %v5233, 7
    %v5235 = vsub.s32 2, %v5234
    %v5236 = vrot.slane %v5223, %v5235
    %v5237 = vlaneseq
    %v5238 = vshrl.u32 %v5237, 7
    %v5239 = vsub.s32 3, %v5238
    %v5240 = vrot.slane %v5223, %v5239
    %v5241 = vlaneseq
    %v5242 = vshrl.u32 %v5241, 7
    %v5243 = vsub.s32 4, %v5242
    %v5244 = vrot.slane %v5223, %v5243
    %v5245 = vlaneseq
    %v5246 = vshrl.u32 %v5245, 7
    %v5247 = vsub.s32 5, %v5246
    %v5248 = vrot.slane %v5223, %v5247
    %v5249 = vlaneseq
    %v5250 = vshrl.u32 %v5249, 7
    %v5251 = vsub.s32 6, %v5250
    %v5252 = vrot.slane %v5223, %v5251
    %v5516 = vunpack.c.l.b16 %v4967
    %v5517 = vunpack.c.h.b16 %v4967
    %v5518 = vunpack.c.l.b16 %v4968
    %v5519 = vunpack.c.h.b16 %v4968
    %v5520 = vunpack.c.l.b16 %v4969
    %v5521 = vunpack.c.h.b16 %v4969
    %v5522 = vunpack.c.l.b16 %v4970
    %v5523 = vunpack.c.l.b16 %v4971
    %v5524 = vunpack.c.h.b16 %v4971
    %v5525 = vunpack.c.l.b16 %v4972
    %v5526 = vunpack.c.h.b16 %v4972
    %v5527 = vunpack.c.l.b16 %v4973
    %v5528 = vunpack.c.h.b16 %v4973
    %v5529 = vunpack.c.l.b16 %v4974
    %v5530 = vunpack.c.l.b16 %v4975
    %v5531 = vunpack.c.h.b16 %v4975
    %v5532 = vunpack.c.l.b16 %v4976
    %v5533 = vunpack.c.h.b16 %v4976
    %v5534 = vunpack.c.l.b16 %v4977
    %v5535 = vunpack.c.h.b16 %v4977
    %v5536 = vunpack.c.l.b16 %v4978
    %v5537 = vunpack.c.l.b16 %v4979
    %v5538 = vunpack.c.h.b16 %v4979
    %v5539 = vunpack.c.l.b16 %v4980
    %v5540 = vunpack.c.h.b16 %v4980
    %v5541 = vunpack.c.l.b16 %v4981
    %v5542 = vunpack.c.h.b16 %v4981
    %v5543 = vunpack.c.l.b16 %v4982
    %v5544 = vunpack.c.l.b16 %v4983
    %v5545 = vunpack.c.h.b16 %v4983
    %v5546 = vunpack.c.l.b16 %v4984
    %v5547 = vunpack.c.h.b16 %v4984
    %v5548 = vunpack.c.l.b16 %v4985
    %v5549 = vunpack.c.h.b16 %v4985
    %v5550 = vunpack.c.l.b16 %v4986
    %v5551 = vunpack.c.l.b16 %v4987
    %v5552 = vunpack.c.h.b16 %v4987
    %v5553 = vunpack.c.l.b16 %v4988
    %v5554 = vunpack.c.h.b16 %v4988
    %v5555 = vunpack.c.l.b16 %v4989
    %v5556 = vunpack.c.h.b16 %v4989
    %v5557 = vunpack.c.l.b16 %v4990
    %v5558 = vunpack.c.l.b16 %v4991
    %v5559 = vunpack.c.h.b16 %v4991
    %v5560 = vunpack.c.l.b16 %v4992
    %v5561 = vunpack.c.h.b16 %v4992
    %v5562 = vunpack.c.l.b16 %v4993
    %v5563 = vunpack.c.h.b16 %v4993
    %v5564 = vunpack.c.l.b16 %v4994
    %v5565 = vunpack.c.l.b16 %v4995
    %v5566 = vunpack.c.h.b16 %v4995
    %v5567 = vunpack.c.l.b16 %v4996
    %v5568 = vunpack.c.h.b16 %v4996
    %v5569 = vunpack.c.l.b16 %v4997
    %v5570 = vunpack.c.h.b16 %v4997
    %v5571 = vunpack.c.l.b16 %v4998
    %v5572 = vunpack.c.l.b16 %v4999
    %v5573 = vunpack.c.h.b16 %v4999
    %v5574 = vunpack.c.l.b16 %v5000
    %v5575 = vunpack.c.h.b16 %v5000
    %v5576 = vunpack.c.l.b16 %v5001
    %v5577 = vunpack.c.h.b16 %v5001
    %v5578 = vunpack.c.l.b16 %v5002
    %v5579 = vunpack.c.l.b16 %v5003
    %v5580 = vunpack.c.h.b16 %v5003
    %v5581 = vunpack.c.l.b16 %v5004
    %v5582 = vunpack.c.h.b16 %v5004
    %v5583 = vunpack.c.l.b16 %v5005
    %v5584 = vunpack.c.h.b16 %v5005
    %v5585 = vunpack.c.l.b16 %v5006
    %v5586 = vunpack.c.l.b16 %v5007
    %v5587 = vunpack.c.h.b16 %v5007
    %v5588 = vunpack.c.l.b16 %v5008
    %v5589 = vunpack.c.h.b16 %v5008
    %v5590 = vunpack.c.l.b16 %v5009
    %v5591 = vunpack.c.h.b16 %v5009
    %v5592 = vunpack.c.l.b16 %v5010
    %v5593 = vunpack.c.l.b16 %v5011
    %v5594 = vunpack.c.h.b16 %v5011
    %v5595 = vunpack.c.l.b16 %v5012
    %v5596 = vunpack.c.h.b16 %v5012
    %v5597 = vunpack.c.l.b16 %v5013
    %v5598 = vunpack.c.h.b16 %v5013
    %v5599 = vunpack.c.l.b16 %v5014
    %v5600 = vunpack.c.l.b16 %v5015
    %v5601 = vunpack.c.h.b16 %v5015
    %v5602 = vunpack.c.l.b16 %v5016
    %v5603 = vunpack.c.h.b16 %v5016
    %v5604 = vunpack.c.l.b16 %v5017
    %v5605 = vunpack.c.h.b16 %v5017
    %v5606 = vunpack.c.l.b16 %v5018
    %v5607 = vunpack.c.l.b16 %v5019
    %v5608 = vunpack.c.h.b16 %v5019
    %v5609 = vunpack.c.l.b16 %v5020
    %v5610 = vunpack.c.h.b16 %v5020
    %v5611 = vunpack.c.l.b16 %v5021
    %v5612 = vunpack.c.h.b16 %v5021
    %v5613 = vunpack.c.l.b16 %v5022
    %v5614 = vunpack.c.l.b16 %v5023
    %v5615 = vunpack.c.h.b16 %v5023
    %v5616 = vunpack.c.l.b16 %v5024
    %v5617 = vunpack.c.h.b16 %v5024
    %v5618 = vunpack.c.l.b16 %v5025
    %v5619 = vunpack.c.h.b16 %v5025
    %v5620 = vunpack.c.l.b16 %v5026
    %v5621 = vunpack.c.l.b16 %v5027
    %v5622 = vunpack.c.h.b16 %v5027
    %v5623 = vunpack.c.l.b16 %v5028
    %v5624 = vunpack.c.h.b16 %v5028
    %v5625 = vunpack.c.l.b16 %v5029
    %v5626 = vunpack.c.h.b16 %v5029
    %v5627 = vunpack.c.l.b16 %v5030
    %v5628 = vunpack.c.l.b16 %v5031
    %v5629 = vunpack.c.h.b16 %v5031
    %v5630 = vunpack.c.l.b16 %v5032
    %v5631 = vunpack.c.h.b16 %v5032
    %v5632 = vunpack.c.l.b16 %v5033
    %v5633 = vunpack.c.h.b16 %v5033
    %v5634 = vunpack.c.l.b16 %v5034
    %v5635 = vunpack.c.l.b16 %v5035
    %v5636 = vunpack.c.h.b16 %v5035
    %v5637 = vunpack.c.l.b16 %v5036
    %v5638 = vunpack.c.h.b16 %v5036
    %v5639 = vunpack.c.l.b16 %v5037
    %v5640 = vunpack.c.h.b16 %v5037
    %v5641 = vunpack.c.l.b16 %v5038
    %v5642 = vunpack.c.l.b16 %v5039
    %v5643 = vunpack.c.h.b16 %v5039
    %v5644 = vunpack.c.l.b16 %v5040
    %v5645 = vunpack.c.h.b16 %v5040
    %v5646 = vunpack.c.l.b16 %v5041
    %v5647 = vunpack.c.h.b16 %v5041
    %v5648 = vunpack.c.l.b16 %v5042
    %v5649 = vunpack.c.l.b16 %v5043
    %v5650 = vunpack.c.h.b16 %v5043
    %v5651 = vunpack.c.l.b16 %v5044
    %v5652 = vunpack.c.h.b16 %v5044
    %v5653 = vunpack.c.l.b16 %v5045
    %v5654 = vunpack.c.h.b16 %v5045
    %v5655 = vunpack.c.l.b16 %v5046
    %v5656 = vunpack.c.l.b16 %v5047
    %v5657 = vunpack.c.h.b16 %v5047
    %v5658 = vunpack.c.l.b16 %v5048
    %v5659 = vunpack.c.h.b16 %v5048
    %v5660 = vunpack.c.l.b16 %v5049
    %v5661 = vunpack.c.h.b16 %v5049
    %v5662 = vunpack.c.l.b16 %v5050
    %v5663 = vunpack.c.l.b16 %v5051
    %v5664 = vunpack.c.h.b16 %v5051
    %v5665 = vunpack.c.l.b16 %v5052
    %v5666 = vunpack.c.h.b16 %v5052
    %v5667 = vunpack.c.l.b16 %v5053
    %v5668 = vunpack.c.h.b16 %v5053
    %v5669 = vunpack.c.l.b16 %v5054
    %v5670 = vunpack.c.l.b16 %v5055
    %v5671 = vunpack.c.h.b16 %v5055
    %v5672 = vunpack.c.l.b16 %v5056
    %v5673 = vunpack.c.h.b16 %v5056
    %v5674 = vunpack.c.l.b16 %v5057
    %v5675 = vunpack.c.h.b16 %v5057
    %v5676 = vunpack.c.l.b16 %v5058
    %v5677 = vunpack.c.l.b16 %v5059
    %v5678 = vunpack.c.h.b16 %v5059
    %v5679 = vunpack.c.l.b16 %v5060
    %v5680 = vunpack.c.h.b16 %v5060
    %v5681 = vunpack.c.l.b16 %v5061
    %v5682 = vunpack.c.h.b16 %v5061
    %v5683 = vunpack.c.l.b16 %v5062
    %v5684 = vunpack.c.l.b16 %v5063
    %v5685 = vunpack.c.h.b16 %v5063
    %v5686 = vunpack.c.l.b16 %v5064
    %v5687 = vunpack.c.h.b16 %v5064
    %v5688 = vunpack.c.l.b16 %v5065
    %v5689 = vunpack.c.h.b16 %v5065
    %v5690 = vunpack.c.l.b16 %v5066
    %v5691 = vunpack.c.l.b16 %v5067
    %v5692 = vunpack.c.h.b16 %v5067
    %v5693 = vunpack.c.l.b16 %v5068
    %v5694 = vunpack.c.h.b16 %v5068
    %v5695 = vunpack.c.l.b16 %v5069
    %v5696 = vunpack.c.h.b16 %v5069
    %v5697 = vunpack.c.l.b16 %v5070
    %v5698 = vunpack.c.l.b16 %v5071
    %v5699 = vunpack.c.h.b16 %v5071
    %v5700 = vunpack.c.l.b16 %v5072
    %v5701 = vunpack.c.h.b16 %v5072
    %v5702 = vunpack.c.l.b16 %v5073
    %v5703 = vunpack.c.h.b16 %v5073
    %v5704 = vunpack.c.l.b16 %v5074
    %v5705 = vunpack.c.l.b16 %v5075
    %v5706 = vunpack.c.h.b16 %v5075
    %v5707 = vunpack.c.l.b16 %v5076
    %v5708 = vunpack.c.h.b16 %v5076
    %v5709 = vunpack.c.l.b16 %v5077
    %v5710 = vunpack.c.h.b16 %v5077
    %v5711 = vunpack.c.l.b16 %v5078
    %v5712 = vunpack.c.l.b16 %v5079
    %v5713 = vunpack.c.h.b16 %v5079
    %v5714 = vunpack.c.l.b16 %v5080
    %v5715 = vunpack.c.h.b16 %v5080
    %v5716 = vunpack.c.l.b16 %v5081
    %v5717 = vunpack.c.h.b16 %v5081
    %v5718 = vunpack.c.l.b16 %v5082
    %v5719 = vunpack.c.l.b16 %v5083
    %v5720 = vunpack.c.h.b16 %v5083
    %v5721 = vunpack.c.l.b16 %v5084
    %v5722 = vunpack.c.h.b16 %v5084
    %v5723 = vunpack.c.l.b16 %v5085
    %v5724 = vunpack.c.h.b16 %v5085
    %v5725 = vunpack.c.l.b16 %v5086
    %v5726 = vunpack.c.l.b16 %v5087
    %v5727 = vunpack.c.h.b16 %v5087
    %v5728 = vunpack.c.l.b16 %v5088
    %v5729 = vunpack.c.h.b16 %v5088
    %v5730 = vunpack.c.l.b16 %v5089
    %v5731 = vunpack.c.h.b16 %v5089
    %v5732 = vunpack.c.l.b16 %v5090
    %v5733 = vunpack.c.l.b16 %v5091
    %v5734 = vunpack.c.h.b16 %v5091
    %v5735 = vunpack.c.l.b16 %v5092
    %v5736 = vunpack.c.h.b16 %v5092
    %v5737 = vunpack.c.l.b16 %v5093
    %v5738 = vunpack.c.h.b16 %v5093
    %v5739 = vunpack.c.l.b16 %v5094
    %v5740 = vunpack.c.l.b16 %v5095
    %v5741 = vunpack.c.h.b16 %v5095
    %v5742 = vunpack.c.l.b16 %v5096
    %v5743 = vunpack.c.h.b16 %v5096
    %v5744 = vunpack.c.l.b16 %v5097
    %v5745 = vunpack.c.h.b16 %v5097
    %v5746 = vunpack.c.l.b16 %v5098
    %v5747 = vunpack.c.l.b16 %v5099
    %v5748 = vunpack.c.h.b16 %v5099
    %v5749 = vunpack.c.l.b16 %v5100
    %v5750 = vunpack.c.h.b16 %v5100
    %v5751 = vunpack.c.l.b16 %v5101
    %v5752 = vunpack.c.h.b16 %v5101
    %v5753 = vunpack.c.l.b16 %v5102
    %v5754 = vunpack.c.l.b16 %v5103
    %v5755 = vunpack.c.h.b16 %v5103
    %v5756 = vunpack.c.l.b16 %v5104
    %v5757 = vunpack.c.h.b16 %v5104
    %v5758 = vunpack.c.l.b16 %v5105
    %v5759 = vunpack.c.h.b16 %v5105
    %v5760 = vunpack.c.l.b16 %v5106
    %v5761 = vunpack.c.l.b16 %v5107
    %v5762 = vunpack.c.h.b16 %v5107
    %v5763 = vunpack.c.l.b16 %v5108
    %v5764 = vunpack.c.h.b16 %v5108
    %v5765 = vunpack.c.l.b16 %v5109
    %v5766 = vunpack.c.h.b16 %v5109
    %v5767 = vunpack.c.l.b16 %v5110
    %v5768 = vunpack.c.l.b16 %v5111
    %v5769 = vunpack.c.h.b16 %v5111
    %v5770 = vunpack.c.l.b16 %v5112
    %v5771 = vunpack.c.h.b16 %v5112
    %v5772 = vunpack.c.l.b16 %v5113
    %v5773 = vunpack.c.h.b16 %v5113
    %v5774 = vunpack.c.l.b16 %v5114
    %v5775 = vunpack.c.l.b16 %v5115
    %v5776 = vunpack.c.h.b16 %v5115
    %v5777 = vunpack.c.l.b16 %v5116
    %v5778 = vunpack.c.h.b16 %v5116
    %v5779 = vunpack.c.l.b16 %v5117
    %v5780 = vunpack.c.h.b16 %v5117
    %v5781 = vunpack.c.l.b16 %v5118
    %v5782 = vunpack.c.l.b16 %v5119
    %v5783 = vunpack.c.h.b16 %v5119
    %v5784 = vunpack.c.l.b16 %v5120
    %v5785 = vunpack.c.h.b16 %v5120
    %v5786 = vunpack.c.l.b16 %v5121
    %v5787 = vunpack.c.h.b16 %v5121
    %v5788 = vunpack.c.l.b16 %v5122
    %v5789 = vunpack.c.l.b16 %v5123
    %v5790 = vunpack.c.h.b16 %v5123
    %v5791 = vunpack.c.l.b16 %v5124
    %v5792 = vunpack.c.h.b16 %v5124
    %v5793 = vunpack.c.l.b16 %v5125
    %v5794 = vunpack.c.h.b16 %v5125
    %v5795 = vunpack.c.l.b16 %v5126
    %v5796 = vunpack.c.l.b16 %v5127
    %v5797 = vunpack.c.h.b16 %v5127
    %v5798 = vunpack.c.l.b16 %v5128
    %v5799 = vunpack.c.h.b16 %v5128
    %v5800 = vunpack.c.l.b16 %v5129
    %v5801 = vunpack.c.h.b16 %v5129
    %v5802 = vunpack.c.l.b16 %v5130
    %v5803 = vunpack.c.l.b16 %v5131
    %v5804 = vunpack.c.h.b16 %v5131
    %v5805 = vunpack.c.l.b16 %v5132
    %v5806 = vunpack.c.h.b16 %v5132
    %v5807 = vunpack.c.l.b16 %v5133
    %v5808 = vunpack.c.h.b16 %v5133
    %v5809 = vunpack.c.l.b16 %v5134
    %v5810 = vunpack.c.l.b16 %v5135
    %v5811 = vunpack.c.h.b16 %v5135
    %v5812 = vunpack.c.l.b16 %v5136
    %v5813 = vunpack.c.h.b16 %v5136
    %v5814 = vunpack.c.l.b16 %v5137
    %v5815 = vunpack.c.h.b16 %v5137
    %v5816 = vunpack.c.l.b16 %v5138
    %v5817 = vunpack.c.l.b16 %v5139
    %v5818 = vunpack.c.h.b16 %v5139
    %v5819 = vunpack.c.l.b16 %v5140
    %v5820 = vunpack.c.h.b16 %v5140
    %v5821 = vunpack.c.l.b16 %v5141
    %v5822 = vunpack.c.h.b16 %v5141
    %v5823 = vunpack.c.l.b16 %v5142
    %v5824 = vunpack.c.l.b16 %v5143
    %v5825 = vunpack.c.h.b16 %v5143
    %v5826 = vunpack.c.l.b16 %v5144
    %v5827 = vunpack.c.h.b16 %v5144
    %v5828 = vunpack.c.l.b16 %v5145
    %v5829 = vunpack.c.h.b16 %v5145
    %v5830 = vunpack.c.l.b16 %v5146
    %v5831 = vunpack.c.l.b16 %v5147
    %v5832 = vunpack.c.h.b16 %v5147
    %v5833 = vunpack.c.l.b16 %v5148
    %v5834 = vunpack.c.h.b16 %v5148
    %v5835 = vunpack.c.l.b16 %v5149
    %v5836 = vunpack.c.h.b16 %v5149
    %v5837 = vunpack.c.l.b16 %v5150
    %v5838 = vunpack.c.l.b16 %v5151
    %v5839 = vunpack.c.h.b16 %v5151
    %v5840 = vunpack.c.l.b16 %v5152
    %v5841 = vunpack.c.h.b16 %v5152
    %v5842 = vunpack.c.l.b16 %v5153
    %v5843 = vunpack.c.h.b16 %v5153
    %v5844 = vunpack.c.l.b16 %v5154
    %v5845 = vunpack.c.l.b16 %v5155
    %v5846 = vunpack.c.h.b16 %v5155
    %v5847 = vunpack.c.l.b16 %v5156
    %v5848 = vunpack.c.h.b16 %v5156
    %v5849 = vunpack.c.l.b16 %v5157
    %v5850 = vunpack.c.h.b16 %v5157
    %v5851 = vunpack.c.l.b16 %v5158
    %v5852 = vunpack.c.l.b16 %v5159
    %v5853 = vunpack.c.h.b16 %v5159
    %v5854 = vunpack.c.l.b16 %v5160
    %v5855 = vunpack.c.h.b16 %v5160
    %v5856 = vunpack.c.l.b16 %v5161
    %v5857 = vunpack.c.h.b16 %v5161
    %v5858 = vunpack.c.l.b16 %v5162
    %v5859 = vunpack.c.l.b16 %v5163
    %v5860 = vunpack.c.h.b16 %v5163
    %v5861 = vunpack.c.l.b16 %v5164
    %v5862 = vunpack.c.h.b16 %v5164
    %v5863 = vunpack.c.l.b16 %v5165
    %v5864 = vunpack.c.h.b16 %v5165
    %v5865 = vunpack.c.l.b16 %v5166
    %v5866 = vunpack.c.l.b16 %v5167
    %v5867 = vunpack.c.h.b16 %v5167
    %v5868 = vunpack.c.l.b16 %v5168
    %v5869 = vunpack.c.h.b16 %v5168
    %v5870 = vunpack.c.l.b16 %v5169
    %v5871 = vunpack.c.h.b16 %v5169
    %v5872 = vunpack.c.l.b16 %v5170
    %v5873 = vunpack.c.l.b16 %v5171
    %v5874 = vunpack.c.h.b16 %v5171
    %v5875 = vunpack.c.l.b16 %v5172
    %v5876 = vunpack.c.h.b16 %v5172
    %v5877 = vunpack.c.l.b16 %v5173
    %v5878 = vunpack.c.h.b16 %v5173
    %v5879 = vunpack.c.l.b16 %v5174
    %v5880 = vunpack.c.l.b16 %v5175
    %v5881 = vunpack.c.h.b16 %v5175
    %v5882 = vunpack.c.l.b16 %v5176
    %v5883 = vunpack.c.h.b16 %v5176
    %v5884 = vunpack.c.l.b16 %v5177
    %v5885 = vunpack.c.h.b16 %v5177
    %v5886 = vunpack.c.l.b16 %v5178
    %v5887 = vunpack.c.l.b16 %v5179
    %v5888 = vunpack.c.h.b16 %v5179
    %v5889 = vunpack.c.l.b16 %v5180
    %v5890 = vunpack.c.h.b16 %v5180
    %v5891 = vunpack.c.l.b16 %v5181
    %v5892 = vunpack.c.h.b16 %v5181
    %v5893 = vunpack.c.l.b16 %v5182
    %v5894 = vunpack.c.l.b16 %v5183
    %v5895 = vunpack.c.h.b16 %v5183
    %v5896 = vunpack.c.l.b16 %v5184
    %v5897 = vunpack.c.h.b16 %v5184
    %v5898 = vunpack.c.l.b16 %v5185
    %v5899 = vunpack.c.h.b16 %v5185
    %v5900 = vunpack.c.l.b16 %v5186
    %v5901 = vunpack.c.l.b16 %v5187
    %v5902 = vunpack.c.h.b16 %v5187
    %v5903 = vunpack.c.l.b16 %v5188
    %v5904 = vunpack.c.h.b16 %v5188
    %v5905 = vunpack.c.l.b16 %v5189
    %v5906 = vunpack.c.h.b16 %v5189
    %v5907 = vunpack.c.l.b16 %v5190
    %v5908 = vunpack.c.l.b16 %v5191
    %v5909 = vunpack.c.h.b16 %v5191
    %v5910 = vunpack.c.l.b16 %v5192
    %v5911 = vunpack.c.h.b16 %v5192
    %v5912 = vunpack.c.l.b16 %v5193
    %v5913 = vunpack.c.h.b16 %v5193
    %v5914 = vunpack.c.l.b16 %v5194
    %v5915 = vunpack.c.l.b16 %v5195
    %v5916 = vunpack.c.h.b16 %v5195
    %v5917 = vunpack.c.l.b16 %v5196
    %v5918 = vunpack.c.h.b16 %v5196
    %v5919 = vunpack.c.l.b16 %v5197
    %v5920 = vunpack.c.h.b16 %v5197
    %v5921 = vunpack.c.l.b16 %v5198
    %v5922 = vunpack.c.l.b16 %v5199
    %v5923 = vunpack.c.h.b16 %v5199
    %v5924 = vunpack.c.l.b16 %v5200
    %v5925 = vunpack.c.h.b16 %v5200
    %v5926 = vunpack.c.l.b16 %v5201
    %v5927 = vunpack.c.h.b16 %v5201
    %v5928 = vunpack.c.l.b16 %v5202
    %v5929 = vunpack.c.l.b16 %v5203
    %v5930 = vunpack.c.h.b16 %v5203
    %v5931 = vunpack.c.l.b16 %v5204
    %v5932 = vunpack.c.h.b16 %v5204
    %v5933 = vunpack.c.l.b16 %v5205
    %v5934 = vunpack.c.h.b16 %v5205
    %v5935 = vunpack.c.l.b16 %v5206
    %v5936 = vunpack.c.l.b16 %v5207
    %v5937 = vunpack.c.h.b16 %v5207
    %v5938 = vunpack.c.l.b16 %v5208
    %v5939 = vunpack.c.h.b16 %v5208
    %v5940 = vunpack.c.l.b16 %v5209
    %v5941 = vunpack.c.h.b16 %v5209
    %v5942 = vunpack.c.l.b16 %v5210
    %v5943 = vunpack.c.l.b16 %v5211
    %v5944 = vunpack.c.h.b16 %v5211
    %v5945 = vunpack.c.l.b16 %v5212
    %v5946 = vunpack.c.h.b16 %v5212
    %v5947 = vunpack.c.l.b16 %v5213
    %v5948 = vunpack.c.h.b16 %v5213
    %v5949 = vunpack.c.l.b16 %v5214
    %v5950 = vunpack.c.l.b16 %v5215
    %v5951 = vunpack.c.h.b16 %v5215
    %v5952 = vunpack.c.l.b16 %v5216
    %v5953 = vunpack.c.h.b16 %v5216
    %v5954 = vunpack.c.l.b16 %v5217
    %v5955 = vunpack.c.h.b16 %v5217
    %v5956 = vunpack.c.l.b16 %v5218
    %v5957 = vunpack.c.l.b16 %v5219
    %v5958 = vunpack.c.h.b16 %v5219
    %v5959 = vunpack.c.l.b16 %v5220
    %v5960 = vunpack.c.h.b16 %v5220
    %v5961 = vunpack.c.l.b16 %v5221
    %v5962 = vunpack.c.h.b16 %v5221
    %v5963 = vunpack.c.l.b16 %v5222
    %v5964 = vpack.c.b16 %v5523, %v5516
    %v5965 = vpack.c.b16 %v5524, %v5517
    %v5966 = vpack.c.b16 %v5525, %v5518
    %v5967 = vpack.c.b16 %v5526, %v5519
    %v5968 = vpack.c.b16 %v5527, %v5520
    %v5969 = vpack.c.b16 %v5528, %v5521
    %v5970 = vpack.c.b16 %v5529, %v5522
    %v5971 = vpack.c.b16 %v5537, %v5530
    %v5972 = vpack.c.b16 %v5538, %v5531
    %v5973 = vpack.c.b16 %v5539, %v5532
    %v5974 = vpack.c.b16 %v5540, %v5533
    %v5975 = vpack.c.b16 %v5541, %v5534
    %v5976 = vpack.c.b16 %v5542, %v5535
    %v5977 = vpack.c.b16 %v5543, %v5536
    %v5978 = vpack.c.b16 %v5551, %v5544
    %v5979 = vpack.c.b16 %v5552, %v5545
    %v5980 = vpack.c.b16 %v5553, %v5546
    %v5981 = vpack.c.b16 %v5554, %v5547
    %v5982 = vpack.c.b16 %v5555, %v5548
    %v5983 = vpack.c.b16 %v5556, %v5549
    %v5984 = vpack.c.b16 %v5557, %v5550
    %v5985 = vpack.c.b16 %v5565, %v5558
    %v5986 = vpack.c.b16 %v5566, %v5559
    %v5987 = vpack.c.b16 %v5567, %v5560
    %v5988 = vpack.c.b16 %v5568, %v5561
    %v5989 = vpack.c.b16 %v5569, %v5562
    %v5990 = vpack.c.b16 %v5570, %v5563
    %v5991 = vpack.c.b16 %v5571, %v5564
    %v5992 = vpack.c.b16 %v5579, %v5572
    %v5993 = vpack.c.b16 %v5580, %v5573
    %v5994 = vpack.c.b16 %v5581, %v5574
    %v5995 = vpack.c.b16 %v5582, %v5575
    %v5996 = vpack.c.b16 %v5583, %v5576
    %v5997 = vpack.c.b16 %v5584, %v5577
    %v5998 = vpack.c.b16 %v5585, %v5578
    %v5999 = vpack.c.b16 %v5593, %v5586
    %v6000 = vpack.c.b16 %v5594, %v5587
    %v6001 = vpack.c.b16 %v5595, %v5588
    %v6002 = vpack.c.b16 %v5596, %v5589
    %v6003 = vpack.c.b16 %v5597, %v5590
    %v6004 = vpack.c.b16 %v5598, %v5591
    %v6005 = vpack.c.b16 %v5599, %v5592
    %v6006 = vpack.c.b16 %v5607, %v5600
    %v6007 = vpack.c.b16 %v5608, %v5601
    %v6008 = vpack.c.b16 %v5609, %v5602
    %v6009 = vpack.c.b16 %v5610, %v5603
    %v6010 = vpack.c.b16 %v5611, %v5604
    %v6011 = vpack.c.b16 %v5612, %v5605
    %v6012 = vpack.c.b16 %v5613, %v5606
    %v6013 = vpack.c.b16 %v5621, %v5614
    %v6014 = vpack.c.b16 %v5622, %v5615
    %v6015 = vpack.c.b16 %v5623, %v5616
    %v6016 = vpack.c.b16 %v5624, %v5617
    %v6017 = vpack.c.b16 %v5625, %v5618
    %v6018 = vpack.c.b16 %v5626, %v5619
    %v6019 = vpack.c.b16 %v5627, %v5620
    %v6020 = vpack.c.b16 %v5635, %v5628
    %v6021 = vpack.c.b16 %v5636, %v5629
    %v6022 = vpack.c.b16 %v5637, %v5630
    %v6023 = vpack.c.b16 %v5638, %v5631
    %v6024 = vpack.c.b16 %v5639, %v5632
    %v6025 = vpack.c.b16 %v5640, %v5633
    %v6026 = vpack.c.b16 %v5641, %v5634
    %v6027 = vpack.c.b16 %v5649, %v5642
    %v6028 = vpack.c.b16 %v5650, %v5643
    %v6029 = vpack.c.b16 %v5651, %v5644
    %v6030 = vpack.c.b16 %v5652, %v5645
    %v6031 = vpack.c.b16 %v5653, %v5646
    %v6032 = vpack.c.b16 %v5654, %v5647
    %v6033 = vpack.c.b16 %v5655, %v5648
    %v6034 = vpack.c.b16 %v5663, %v5656
    %v6035 = vpack.c.b16 %v5664, %v5657
    %v6036 = vpack.c.b16 %v5665, %v5658
    %v6037 = vpack.c.b16 %v5666, %v5659
    %v6038 = vpack.c.b16 %v5667, %v5660
    %v6039 = vpack.c.b16 %v5668, %v5661
    %v6040 = vpack.c.b16 %v5669, %v5662
    %v6041 = vpack.c.b16 %v5677, %v5670
    %v6042 = vpack.c.b16 %v5678, %v5671
    %v6043 = vpack.c.b16 %v5679, %v5672
    %v6044 = vpack.c.b16 %v5680, %v5673
    %v6045 = vpack.c.b16 %v5681, %v5674
    %v6046 = vpack.c.b16 %v5682, %v5675
    %v6047 = vpack.c.b16 %v5683, %v5676
    %v6048 = vpack.c.b16 %v5691, %v5684
    %v6049 = vpack.c.b16 %v5692, %v5685
    %v6050 = vpack.c.b16 %v5693, %v5686
    %v6051 = vpack.c.b16 %v5694, %v5687
    %v6052 = vpack.c.b16 %v5695, %v5688
    %v6053 = vpack.c.b16 %v5696, %v5689
    %v6054 = vpack.c.b16 %v5697, %v5690
    %v6055 = vpack.c.b16 %v5705, %v5698
    %v6056 = vpack.c.b16 %v5706, %v5699
    %v6057 = vpack.c.b16 %v5707, %v5700
    %v6058 = vpack.c.b16 %v5708, %v5701
    %v6059 = vpack.c.b16 %v5709, %v5702
    %v6060 = vpack.c.b16 %v5710, %v5703
    %v6061 = vpack.c.b16 %v5711, %v5704
    %v6062 = vpack.c.b16 %v5719, %v5712
    %v6063 = vpack.c.b16 %v5720, %v5713
    %v6064 = vpack.c.b16 %v5721, %v5714
    %v6065 = vpack.c.b16 %v5722, %v5715
    %v6066 = vpack.c.b16 %v5723, %v5716
    %v6067 = vpack.c.b16 %v5724, %v5717
    %v6068 = vpack.c.b16 %v5725, %v5718
    %v6069 = vpack.c.b16 %v5733, %v5726
    %v6070 = vpack.c.b16 %v5734, %v5727
    %v6071 = vpack.c.b16 %v5735, %v5728
    %v6072 = vpack.c.b16 %v5736, %v5729
    %v6073 = vpack.c.b16 %v5737, %v5730
    %v6074 = vpack.c.b16 %v5738, %v5731
    %v6075 = vpack.c.b16 %v5739, %v5732
    %v6076 = vpack.c.b16 %v5747, %v5740
    %v6077 = vpack.c.b16 %v5748, %v5741
    %v6078 = vpack.c.b16 %v5749, %v5742
    %v6079 = vpack.c.b16 %v5750, %v5743
    %v6080 = vpack.c.b16 %v5751, %v5744
    %v6081 = vpack.c.b16 %v5752, %v5745
    %v6082 = vpack.c.b16 %v5753, %v5746
    %v6083 = vpack.c.b16 %v5761, %v5754
    %v6084 = vpack.c.b16 %v5762, %v5755
    %v6085 = vpack.c.b16 %v5763, %v5756
    %v6086 = vpack.c.b16 %v5764, %v5757
    %v6087 = vpack.c.b16 %v5765, %v5758
    %v6088 = vpack.c.b16 %v5766, %v5759
    %v6089 = vpack.c.b16 %v5767, %v5760
    %v6090 = vpack.c.b16 %v5775, %v5768
    %v6091 = vpack.c.b16 %v5776, %v5769
    %v6092 = vpack.c.b16 %v5777, %v5770
    %v6093 = vpack.c.b16 %v5778, %v5771
    %v6094 = vpack.c.b16 %v5779, %v5772
    %v6095 = vpack.c.b16 %v5780, %v5773
    %v6096 = vpack.c.b16 %v5781, %v5774
    %v6097 = vpack.c.b16 %v5789, %v5782
    %v6098 = vpack.c.b16 %v5790, %v5783
    %v6099 = vpack.c.b16 %v5791, %v5784
    %v6100 = vpack.c.b16 %v5792, %v5785
    %v6101 = vpack.c.b16 %v5793, %v5786
    %v6102 = vpack.c.b16 %v5794, %v5787
    %v6103 = vpack.c.b16 %v5795, %v5788
    %v6104 = vpack.c.b16 %v5803, %v5796
    %v6105 = vpack.c.b16 %v5804, %v5797
    %v6106 = vpack.c.b16 %v5805, %v5798
    %v6107 = vpack.c.b16 %v5806, %v5799
    %v6108 = vpack.c.b16 %v5807, %v5800
    %v6109 = vpack.c.b16 %v5808, %v5801
    %v6110 = vpack.c.b16 %v5809, %v5802
    %v6111 = vpack.c.b16 %v5817, %v5810
    %v6112 = vpack.c.b16 %v5818, %v5811
    %v6113 = vpack.c.b16 %v5819, %v5812
    %v6114 = vpack.c.b16 %v5820, %v5813
    %v6115 = vpack.c.b16 %v5821, %v5814
    %v6116 = vpack.c.b16 %v5822, %v5815
    %v6117 = vpack.c.b16 %v5823, %v5816
    %v6118 = vpack.c.b16 %v5831, %v5824
    %v6119 = vpack.c.b16 %v5832, %v5825
    %v6120 = vpack.c.b16 %v5833, %v5826
    %v6121 = vpack.c.b16 %v5834, %v5827
    %v6122 = vpack.c.b16 %v5835, %v5828
    %v6123 = vpack.c.b16 %v5836, %v5829
    %v6124 = vpack.c.b16 %v5837, %v5830
    %v6125 = vpack.c.b16 %v5845, %v5838
    %v6126 = vpack.c.b16 %v5846, %v5839
    %v6127 = vpack.c.b16 %v5847, %v5840
    %v6128 = vpack.c.b16 %v5848, %v5841
    %v6129 = vpack.c.b16 %v5849, %v5842
    %v6130 = vpack.c.b16 %v5850, %v5843
    %v6131 = vpack.c.b16 %v5851, %v5844
    %v6132 = vpack.c.b16 %v5859, %v5852
    %v6133 = vpack.c.b16 %v5860, %v5853
    %v6134 = vpack.c.b16 %v5861, %v5854
    %v6135 = vpack.c.b16 %v5862, %v5855
    %v6136 = vpack.c.b16 %v5863, %v5856
    %v6137 = vpack.c.b16 %v5864, %v5857
    %v6138 = vpack.c.b16 %v5865, %v5858
    %v6139 = vpack.c.b16 %v5873, %v5866
    %v6140 = vpack.c.b16 %v5874, %v5867
    %v6141 = vpack.c.b16 %v5875, %v5868
    %v6142 = vpack.c.b16 %v5876, %v5869
    %v6143 = vpack.c.b16 %v5877, %v5870
    %v6144 = vpack.c.b16 %v5878, %v5871
    %v6145 = vpack.c.b16 %v5879, %v5872
    %v6146 = vpack.c.b16 %v5887, %v5880
    %v6147 = vpack.c.b16 %v5888, %v5881
    %v6148 = vpack.c.b16 %v5889, %v5882
    %v6149 = vpack.c.b16 %v5890, %v5883
    %v6150 = vpack.c.b16 %v5891, %v5884
    %v6151 = vpack.c.b16 %v5892, %v5885
    %v6152 = vpack.c.b16 %v5893, %v5886
    %v6153 = vpack.c.b16 %v5901, %v5894
    %v6154 = vpack.c.b16 %v5902, %v5895
    %v6155 = vpack.c.b16 %v5903, %v5896
    %v6156 = vpack.c.b16 %v5904, %v5897
    %v6157 = vpack.c.b16 %v5905, %v5898
    %v6158 = vpack.c.b16 %v5906, %v5899
    %v6159 = vpack.c.b16 %v5907, %v5900
    %v6160 = vpack.c.b16 %v5915, %v5908
    %v6161 = vpack.c.b16 %v5916, %v5909
    %v6162 = vpack.c.b16 %v5917, %v5910
    %v6163 = vpack.c.b16 %v5918, %v5911
    %v6164 = vpack.c.b16 %v5919, %v5912
    %v6165 = vpack.c.b16 %v5920, %v5913
    %v6166 = vpack.c.b16 %v5921, %v5914
    %v6167 = vpack.c.b16 %v5929, %v5922
    %v6168 = vpack.c.b16 %v5930, %v5923
    %v6169 = vpack.c.b16 %v5931, %v5924
    %v6170 = vpack.c.b16 %v5932, %v5925
    %v6171 = vpack.c.b16 %v5933, %v5926
    %v6172 = vpack.c.b16 %v5934, %v5927
    %v6173 = vpack.c.b16 %v5935, %v5928
    %v6174 = vpack.c.b16 %v5943, %v5936
    %v6175 = vpack.c.b16 %v5944, %v5937
    %v6176 = vpack.c.b16 %v5945, %v5938
    %v6177 = vpack.c.b16 %v5946, %v5939
    %v6178 = vpack.c.b16 %v5947, %v5940
    %v6179 = vpack.c.b16 %v5948, %v5941
    %v6180 = vpack.c.b16 %v5949, %v5942
    %v6181 = vpack.c.b16 %v5957, %v5950
    %v6182 = vpack.c.b16 %v5958, %v5951
    %v6183 = vpack.c.b16 %v5959, %v5952
    %v6184 = vpack.c.b16 %v5960, %v5953
    %v6185 = vpack.c.b16 %v5961, %v5954
    %v6186 = vpack.c.b16 %v5962, %v5955
    %v6187 = vpack.c.b16 %v5963, %v5956
    %6412 = vmatprep.subr.bf16.mxu0 %v5965
    %6413 = vmatpush1.bf16.msra.mxu0 %v5964
    %6414 = vmatprep.subr.bf16.mxu0 %v5972
    %6415 = vmatpush1.bf16.msra.mxu0 %v5971
    %6416 = vmatprep.subr.bf16.mxu0 %v5979
    %6417 = vmatpush1.bf16.msra.mxu0 %v5978
    %6418 = vmatprep.subr.bf16.mxu0 %v5986
    %6419 = vmatpush1.bf16.msra.mxu0 %v5985
    %6420 = vmatprep.subr.bf16.mxu0 %v5993
    %6421 = vmatpush1.bf16.msra.mxu0 %v5992
    %6422 = vmatprep.subr.bf16.mxu0 %v6000
    %6423 = vmatpush1.bf16.msra.mxu0 %v5999
    %6424 = vmatprep.subr.bf16.mxu0 %v6007
    %6425 = vmatpush1.bf16.msra.mxu0 %v6006
    %6426 = vmatprep.subr.bf16.mxu0 %v6014
    %6427 = vmatpush1.bf16.msra.mxu0 %v6013
    %6428 = vmatprep.subr.bf16.mxu0 %v6021
    %6429 = vmatpush1.bf16.msra.mxu0 %v6020
    %6430 = vmatprep.subr.bf16.mxu0 %v6028
    %6431 = vmatpush1.bf16.msra.mxu0 %v6027
    %6432 = vmatprep.subr.bf16.mxu0 %v6035
    %6433 = vmatpush1.bf16.msra.mxu0 %v6034
    %6434 = vmatprep.subr.bf16.mxu0 %v6042
    %6435 = vmatpush1.bf16.msra.mxu0 %v6041
    %6436 = vmatprep.subr.bf16.mxu0 %v6049
    %6437 = vmatpush1.bf16.msra.mxu0 %v6048
    %6438 = vmatprep.subr.bf16.mxu0 %v6056
    %6439 = vmatpush1.bf16.msra.mxu0 %v6055
    %6440 = vmatprep.subr.bf16.mxu0 %v6063
    %6441 = vmatpush1.bf16.msra.mxu0 %v6062
    %6442 = vmatprep.subr.bf16.mxu0 %v6070
    %6443 = vmatpush1.bf16.msra.mxu0 %v6069
    %6444 = vmatprep.mubr.bf16.mxu0 %v4964
    %6445 = vmatmul.mubr.bf16.gmra.mrb[0].mxu0 %v4963
    %v6446 = vpop.f32.mrb[0].mxu0
    %v6447 = vadd.f32 %v5228, %v6446
    %v6448 = vpop.f32.mrb[0].mxu0
    %v6449 = vadd.f32 %v5232, %v6448
    %v6450 = vpop.f32.mrb[0].mxu0
    %v6451 = vadd.f32 %v5228, %v6450
    %v6452 = vpop.f32.mrb[0].mxu0
    %v6453 = vadd.f32 %v5232, %v6452
    %6454 = vdwg.mxu0
    %6455 = vmatprep.subr.bf16.mxu0 %v6077
    %6456 = vmatpush1.bf16.msra.mxu0 %v6076
    %6457 = vmatprep.subr.bf16.mxu0 %v6084
    %6458 = vmatpush1.bf16.msra.mxu0 %v6083
    %6459 = vmatprep.subr.bf16.mxu0 %v6091
    %6460 = vmatpush1.bf16.msra.mxu0 %v6090
    %6461 = vmatprep.subr.bf16.mxu0 %v6098
    %6462 = vmatpush1.bf16.msra.mxu0 %v6097
    %6463 = vmatprep.subr.bf16.mxu0 %v6105
    %6464 = vmatpush1.bf16.msra.mxu0 %v6104
    %6465 = vmatprep.subr.bf16.mxu0 %v6112
    %6466 = vmatpush1.bf16.msra.mxu0 %v6111
    %6467 = vmatprep.subr.bf16.mxu0 %v6119
    %6468 = vmatpush1.bf16.msra.mxu0 %v6118
    %6469 = vmatprep.subr.bf16.mxu0 %v6126
    %6470 = vmatpush1.bf16.msra.mxu0 %v6125
    %6471 = vmatprep.subr.bf16.mxu0 %v6133
    %6472 = vmatpush1.bf16.msra.mxu0 %v6132
    %6473 = vmatprep.subr.bf16.mxu0 %v6140
    %6474 = vmatpush1.bf16.msra.mxu0 %v6139
    %6475 = vmatprep.subr.bf16.mxu0 %v6147
    %6476 = vmatpush1.bf16.msra.mxu0 %v6146
    %6477 = vmatprep.subr.bf16.mxu0 %v6154
    %6478 = vmatpush1.bf16.msra.mxu0 %v6153
    %6479 = vmatprep.subr.bf16.mxu0 %v6161
    %6480 = vmatpush1.bf16.msra.mxu0 %v6160
    %6481 = vmatprep.subr.bf16.mxu0 %v6168
    %6482 = vmatpush1.bf16.msra.mxu0 %v6167
    %6483 = vmatprep.subr.bf16.mxu0 %v6175
    %6484 = vmatpush1.bf16.msra.mxu0 %v6174
    %6485 = vmatprep.subr.bf16.mxu0 %v6182
    %6486 = vmatpush1.bf16.msra.mxu0 %v6181
    %6487 = vmatprep.mubr.bf16.mxu0 %v4966
    %6488 = vmatmul.mubr.bf16.gmra.mrb[0].mxu0 %v4965
    %v6489 = vpop.f32.mrb[0].mxu0
    %v6490 = vadd.f32 %v6447, %v6489
    %v6491 = vpop.f32.mrb[0].mxu0
    %v6492 = vadd.f32 %v6449, %v6491
    %v6493 = vpop.f32.mrb[0].mxu0
    %v6494 = vadd.f32 %v6451, %v6493
    %v6495 = vpop.f32.mrb[0].mxu0
    %v6496 = vadd.f32 %v6453, %v6495
    %6497 = vdwg.mxu0
    %6498 = vmatprep.subr.bf16.mxu0 %v5967
    %6499 = vmatpush1.bf16.msra.mxu0 %v5966
    %6500 = vmatprep.subr.bf16.mxu0 %v5974
    %6501 = vmatpush1.bf16.msra.mxu0 %v5973
    %6502 = vmatprep.subr.bf16.mxu0 %v5981
    %6503 = vmatpush1.bf16.msra.mxu0 %v5980
    %6504 = vmatprep.subr.bf16.mxu0 %v5988
    %6505 = vmatpush1.bf16.msra.mxu0 %v5987
    %6506 = vmatprep.subr.bf16.mxu0 %v5995
    %6507 = vmatpush1.bf16.msra.mxu0 %v5994
    %6508 = vmatprep.subr.bf16.mxu0 %v6002
    %6509 = vmatpush1.bf16.msra.mxu0 %v6001
    %6510 = vmatprep.subr.bf16.mxu0 %v6009
    %6511 = vmatpush1.bf16.msra.mxu0 %v6008
    %6512 = vmatprep.subr.bf16.mxu0 %v6016
    %6513 = vmatpush1.bf16.msra.mxu0 %v6015
    %6514 = vmatprep.subr.bf16.mxu0 %v6023
    %6515 = vmatpush1.bf16.msra.mxu0 %v6022
    %6516 = vmatprep.subr.bf16.mxu0 %v6030
    %6517 = vmatpush1.bf16.msra.mxu0 %v6029
    %6518 = vmatprep.subr.bf16.mxu0 %v6037
    %6519 = vmatpush1.bf16.msra.mxu0 %v6036
    %6520 = vmatprep.subr.bf16.mxu0 %v6044
    %6521 = vmatpush1.bf16.msra.mxu0 %v6043
    %6522 = vmatprep.subr.bf16.mxu0 %v6051
    %6523 = vmatpush1.bf16.msra.mxu0 %v6050
    %6524 = vmatprep.subr.bf16.mxu0 %v6058
    %6525 = vmatpush1.bf16.msra.mxu0 %v6057
    %6526 = vmatprep.subr.bf16.mxu0 %v6065
    %6527 = vmatpush1.bf16.msra.mxu0 %v6064
    %6528 = vmatprep.subr.bf16.mxu0 %v6072
    %6529 = vmatpush1.bf16.msra.mxu0 %v6071
    %6530 = vmatprep.mubr.bf16.mxu0 %v4964
    %6531 = vmatmul.mubr.bf16.gmra.mrb[0].mxu0 %v4963
    %v6532 = vpop.f32.mrb[0].mxu0
    %v6533 = vadd.f32 %v5236, %v6532
    %v6534 = vpop.f32.mrb[0].mxu0
    %v6535 = vadd.f32 %v5240, %v6534
    %v6536 = vpop.f32.mrb[0].mxu0
    %v6537 = vadd.f32 %v5236, %v6536
    %v6538 = vpop.f32.mrb[0].mxu0
    %v6539 = vadd.f32 %v5240, %v6538
    %6540 = vdwg.mxu0
    %6541 = vmatprep.subr.bf16.mxu0 %v6079
    %6542 = vmatpush1.bf16.msra.mxu0 %v6078
    %6543 = vmatprep.subr.bf16.mxu0 %v6086
    %6544 = vmatpush1.bf16.msra.mxu0 %v6085
    %6545 = vmatprep.subr.bf16.mxu0 %v6093
    %6546 = vmatpush1.bf16.msra.mxu0 %v6092
    %6547 = vmatprep.subr.bf16.mxu0 %v6100
    %6548 = vmatpush1.bf16.msra.mxu0 %v6099
    %6549 = vmatprep.subr.bf16.mxu0 %v6107
    %6550 = vmatpush1.bf16.msra.mxu0 %v6106
    %6551 = vmatprep.subr.bf16.mxu0 %v6114
    %6552 = vmatpush1.bf16.msra.mxu0 %v6113
    %6553 = vmatprep.subr.bf16.mxu0 %v6121
    %6554 = vmatpush1.bf16.msra.mxu0 %v6120
    %6555 = vmatprep.subr.bf16.mxu0 %v6128
    %6556 = vmatpush1.bf16.msra.mxu0 %v6127
    %6557 = vmatprep.subr.bf16.mxu0 %v6135
    %6558 = vmatpush1.bf16.msra.mxu0 %v6134
    %6559 = vmatprep.subr.bf16.mxu0 %v6142
    %6560 = vmatpush1.bf16.msra.mxu0 %v6141
    %6561 = vmatprep.subr.bf16.mxu0 %v6149
    %6562 = vmatpush1.bf16.msra.mxu0 %v6148
    %6563 = vmatprep.subr.bf16.mxu0 %v6156
    %6564 = vmatpush1.bf16.msra.mxu0 %v6155
    %6565 = vmatprep.subr.bf16.mxu0 %v6163
    %6566 = vmatpush1.bf16.msra.mxu0 %v6162
    %6567 = vmatprep.subr.bf16.mxu0 %v6170
    %6568 = vmatpush1.bf16.msra.mxu0 %v6169
    %6569 = vmatprep.subr.bf16.mxu0 %v6177
    %6570 = vmatpush1.bf16.msra.mxu0 %v6176
    %6571 = vmatprep.subr.bf16.mxu0 %v6184
    %6572 = vmatpush1.bf16.msra.mxu0 %v6183
    %6573 = vmatprep.mubr.bf16.mxu0 %v4966
    %6574 = vmatmul.mubr.bf16.gmra.mrb[0].mxu0 %v4965
    %v6575 = vpop.f32.mrb[0].mxu0
    %v6576 = vadd.f32 %v6533, %v6575
    %v6577 = vpop.f32.mrb[0].mxu0
    %v6578 = vadd.f32 %v6535, %v6577
    %v6579 = vpop.f32.mrb[0].mxu0
    %v6580 = vadd.f32 %v6537, %v6579
    %v6581 = vpop.f32.mrb[0].mxu0
    %v6582 = vadd.f32 %v6539, %v6581
    %6583 = vdwg.mxu0
    %6584 = vmatprep.subr.bf16.mxu0 %v5969
    %6585 = vmatpush1.bf16.msra.mxu0 %v5968
    %6586 = vmatprep.subr.bf16.mxu0 %v5976
    %6587 = vmatpush1.bf16.msra.mxu0 %v5975
    %6588 = vmatprep.subr.bf16.mxu0 %v5983
    %6589 = vmatpush1.bf16.msra.mxu0 %v5982
    %6590 = vmatprep.subr.bf16.mxu0 %v5990
    %6591 = vmatpush1.bf16.msra.mxu0 %v5989
    %6592 = vmatprep.subr.bf16.mxu0 %v5997
    %6593 = vmatpush1.bf16.msra.mxu0 %v5996
    %6594 = vmatprep.subr.bf16.mxu0 %v6004
    %6595 = vmatpush1.bf16.msra.mxu0 %v6003
    %6596 = vmatprep.subr.bf16.mxu0 %v6011
    %6597 = vmatpush1.bf16.msra.mxu0 %v6010
    %6598 = vmatprep.subr.bf16.mxu0 %v6018
    %6599 = vmatpush1.bf16.msra.mxu0 %v6017
    %6600 = vmatprep.subr.bf16.mxu0 %v6025
    %6601 = vmatpush1.bf16.msra.mxu0 %v6024
    %6602 = vmatprep.subr.bf16.mxu0 %v6032
    %6603 = vmatpush1.bf16.msra.mxu0 %v6031
    %6604 = vmatprep.subr.bf16.mxu0 %v6039
    %6605 = vmatpush1.bf16.msra.mxu0 %v6038
    %6606 = vmatprep.subr.bf16.mxu0 %v6046
    %6607 = vmatpush1.bf16.msra.mxu0 %v6045
    %6608 = vmatprep.subr.bf16.mxu0 %v6053
    %6609 = vmatpush1.bf16.msra.mxu0 %v6052
    %6610 = vmatprep.subr.bf16.mxu0 %v6060
    %6611 = vmatpush1.bf16.msra.mxu0 %v6059
    %6612 = vmatprep.subr.bf16.mxu0 %v6067
    %6613 = vmatpush1.bf16.msra.mxu0 %v6066
    %6614 = vmatprep.subr.bf16.mxu0 %v6074
    %6615 = vmatpush1.bf16.msra.mxu0 %v6073
    %6616 = vmatprep.mubr.bf16.mxu0 %v4964
    %6617 = vmatmul.mubr.bf16.gmra.mrb[0].mxu0 %v4963
    %v6618 = vpop.f32.mrb[0].mxu0
    %v6619 = vadd.f32 %v5244, %v6618
    %v6620 = vpop.f32.mrb[0].mxu0
    %v6621 = vadd.f32 %v5248, %v6620
    %v6622 = vpop.f32.mrb[0].mxu0
    %v6623 = vadd.f32 %v5244, %v6622
    %v6624 = vpop.f32.mrb[0].mxu0
    %v6625 = vadd.f32 %v5248, %v6624
    %6626 = vdwg.mxu0
    %6627 = vmatprep.subr.bf16.mxu0 %v6081
    %6628 = vmatpush1.bf16.msra.mxu0 %v6080
    %6629 = vmatprep.subr.bf16.mxu0 %v6088
    %6630 = vmatpush1.bf16.msra.mxu0 %v6087
    %6631 = vmatprep.subr.bf16.mxu0 %v6095
    %6632 = vmatpush1.bf16.msra.mxu0 %v6094
    %6633 = vmatprep.subr.bf16.mxu0 %v6102
    %6634 = vmatpush1.bf16.msra.mxu0 %v6101
    %6635 = vmatprep.subr.bf16.mxu0 %v6109
    %6636 = vmatpush1.bf16.msra.mxu0 %v6108
    %6637 = vmatprep.subr.bf16.mxu0 %v6116
    %6638 = vmatpush1.bf16.msra.mxu0 %v6115
    %6639 = vmatprep.subr.bf16.mxu0 %v6123
    %6640 = vmatpush1.bf16.msra.mxu0 %v6122
    %6641 = vmatprep.subr.bf16.mxu0 %v6130
    %6642 = vmatpush1.bf16.msra.mxu0 %v6129
    %6643 = vmatprep.subr.bf16.mxu0 %v6137
    %6644 = vmatpush1.bf16.msra.mxu0 %v6136
    %6645 = vmatprep.subr.bf16.mxu0 %v6144
    %6646 = vmatpush1.bf16.msra.mxu0 %v6143
    %6647 = vmatprep.subr.bf16.mxu0 %v6151
    %6648 = vmatpush1.bf16.msra.mxu0 %v6150
    %6649 = vmatprep.subr.bf16.mxu0 %v6158
    %6650 = vmatpush1.bf16.msra.mxu0 %v6157
    %6651 = vmatprep.subr.bf16.mxu0 %v6165
    %6652 = vmatpush1.bf16.msra.mxu0 %v6164
    %6653 = vmatprep.subr.bf16.mxu0 %v6172
    %6654 = vmatpush1.bf16.msra.mxu0 %v6171
    %6655 = vmatprep.subr.bf16.mxu0 %v6179
    %6656 = vmatpush1.bf16.msra.mxu0 %v6178
    %6657 = vmatprep.subr.bf16.mxu0 %v6186
    %6658 = vmatpush1.bf16.msra.mxu0 %v6185
    %6659 = vmatprep.mubr.bf16.mxu0 %v4966
    %6660 = vmatmul.mubr.bf16.gmra.mrb[0].mxu0 %v4965
    %v6661 = vpop.f32.mrb[0].mxu0
    %v6662 = vadd.f32 %v6619, %v6661
    %v6663 = vpop.f32.mrb[0].mxu0
    %v6664 = vadd.f32 %v6621, %v6663
    %v6665 = vpop.f32.mrb[0].mxu0
    %v6666 = vadd.f32 %v6623, %v6665
    %v6667 = vpop.f32.mrb[0].mxu0
    %v6668 = vadd.f32 %v6625, %v6667
    %6669 = vdwg.mxu0
    %6670 = vmatprep.subr.bf16.mxu0 0
    %6671 = vmatpush1.bf16.msra.mxu0 %v5970
    %6672 = vmatprep.subr.bf16.mxu0 0
    %6673 = vmatpush1.bf16.msra.mxu0 %v5977
    %6674 = vmatprep.subr.bf16.mxu0 0
    %6675 = vmatpush1.bf16.msra.mxu0 %v5984
    %6676 = vmatprep.subr.bf16.mxu0 0
    %6677 = vmatpush1.bf16.msra.mxu0 %v5991
    %6678 = vmatprep.subr.bf16.mxu0 0
    %6679 = vmatpush1.bf16.msra.mxu0 %v5998
    %6680 = vmatprep.subr.bf16.mxu0 0
    %6681 = vmatpush1.bf16.msra.mxu0 %v6005
    %6682 = vmatprep.subr.bf16.mxu0 0
    %6683 = vmatpush1.bf16.msra.mxu0 %v6012
    %6684 = vmatprep.subr.bf16.mxu0 0
    %6685 = vmatpush1.bf16.msra.mxu0 %v6019
    %6686 = vmatprep.subr.bf16.mxu0 0
    %6687 = vmatpush1.bf16.msra.mxu0 %v6026
    %6688 = vmatprep.subr.bf16.mxu0 0
    %6689 = vmatpush1.bf16.msra.mxu0 %v6033
    %6690 = vmatprep.subr.bf16.mxu0 0
    %6691 = vmatpush1.bf16.msra.mxu0 %v6040
    %6692 = vmatprep.subr.bf16.mxu0 0
    %6693 = vmatpush1.bf16.msra.mxu0 %v6047
    %6694 = vmatprep.subr.bf16.mxu0 0
    %6695 = vmatpush1.bf16.msra.mxu0 %v6054
    %6696 = vmatprep.subr.bf16.mxu0 0
    %6697 = vmatpush1.bf16.msra.mxu0 %v6061
    %6698 = vmatprep.subr.bf16.mxu0 0
    %6699 = vmatpush1.bf16.msra.mxu0 %v6068
    %6700 = vmatprep.subr.bf16.mxu0 0
    %6701 = vmatpush1.bf16.msra.mxu0 %v6075
    %6702 = vmatprep.mubr.bf16.mxu0 %v4964
    %6703 = vmatmul.mubr.bf16.gmra.mrb[0].mxu0 %v4963
    %v6704 = vpop.f32.mrb[0].mxu0
    %v6705 = vadd.f32 %v5252, %v6704
    %v6706 = vpop.f32.mrb[0].mxu0
    %v6707 = vpop.f32.mrb[0].mxu0
    %v6708 = vadd.f32 %v5252, %v6707
    %v6709 = vpop.f32.mrb[0].mxu0
    %6710 = vdwg.mxu0
    %6711 = vmatprep.subr.bf16.mxu0 0
    %6712 = vmatpush1.bf16.msra.mxu0 %v6082
    %6713 = vmatprep.subr.bf16.mxu0 0
    %6714 = vmatpush1.bf16.msra.mxu0 %v6089
    %6715 = vmatprep.subr.bf16.mxu0 0
    %6716 = vmatpush1.bf16.msra.mxu0 %v6096
    %6717 = vmatprep.subr.bf16.mxu0 0
    %6718 = vmatpush1.bf16.msra.mxu0 %v6103
    %6719 = vmatprep.subr.bf16.mxu0 0
    %6720 = vmatpush1.bf16.msra.mxu0 %v6110
    %6721 = vmatprep.subr.bf16.mxu0 0
    %6722 = vmatpush1.bf16.msra.mxu0 %v6117
    %6723 = vmatprep.subr.bf16.mxu0 0
    %6724 = vmatpush1.bf16.msra.mxu0 %v6124
    %6725 = vmatprep.subr.bf16.mxu0 0
    %6726 = vmatpush1.bf16.msra.mxu0 %v6131
    %6727 = vmatprep.subr.bf16.mxu0 0
    %6728 = vmatpush1.bf16.msra.mxu0 %v6138
    %6729 = vmatprep.subr.bf16.mxu0 0
    %6730 = vmatpush1.bf16.msra.mxu0 %v6145
    %6731 = vmatprep.subr.bf16.mxu0 0
    %6732 = vmatpush1.bf16.msra.mxu0 %v6152
    %6733 = vmatprep.subr.bf16.mxu0 0
    %6734 = vmatpush1.bf16.msra.mxu0 %v6159
    %6735 = vmatprep.subr.bf16.mxu0 0
    %6736 = vmatpush1.bf16.msra.mxu0 %v6166
    %6737 = vmatprep.subr.bf16.mxu0 0
    %6738 = vmatpush1.bf16.msra.mxu0 %v6173
    %6739 = vmatprep.subr.bf16.mxu0 0
    %6740 = vmatpush1.bf16.msra.mxu0 %v6180
    %6741 = vmatprep.subr.bf16.mxu0 0
    %6742 = vmatpush1.bf16.msra.mxu0 %v6187
    %6743 = vmatprep.mubr.bf16.mxu0 %v4966
    %6744 = vmatmul.mubr.bf16.gmra.mrb[0].mxu0 %v4965
    %v6745 = vpop.f32.mrb[0].mxu0
    %v6746 = vadd.f32 %v6705, %v6745
    %v6747 = vpop.f32.mrb[0].mxu0
    %v6748 = vpop.f32.mrb[0].mxu0
    %v6749 = vadd.f32 %v6708, %v6748
    %v6750 = vpop.f32.mrb[0].mxu0
    %6751 = vdwg.mxu0
    %v6752 = vxor.u32 %v6490, 2147483648
    %v6753 = vxor.u32 %v6492, 2147483648
    %v6754 = vxor.u32 %v6576, 2147483648
    %v6755 = vxor.u32 %v6578, 2147483648
    %v6756 = vxor.u32 %v6662, 2147483648
    %v6757 = vxor.u32 %v6664, 2147483648
    %v6758 = vxor.u32 %v6746, 2147483648
    %v6759 = vxor.u32 %v6494, 2147483648
    %v6760 = vxor.u32 %v6496, 2147483648
    %v6761 = vxor.u32 %v6580, 2147483648
    %v6762 = vxor.u32 %v6582, 2147483648
    %v6763 = vxor.u32 %v6666, 2147483648
    %v6764 = vxor.u32 %v6668, 2147483648
    %v6765 = vxor.u32 %v6749, 2147483648
    %v6766 = vmul.f32 %v6752, 1.442695
    %v6767 = vpow.pop %v6766
    %v6768 = vmul.f32 %v6753, 1.442695
    %v6769 = vpow.pop %v6768
    %v6770 = vmul.f32 %v6754, 1.442695
    %v6771 = vpow.pop %v6770
    %v6772 = vmul.f32 %v6755, 1.442695
    %v6773 = vpow.pop %v6772
    %v6774 = vmul.f32 %v6756, 1.442695
    %v6775 = vpow.pop %v6774
    %v6776 = vmul.f32 %v6757, 1.442695
    %v6777 = vpow.pop %v6776
    %v6778 = vmul.f32 %v6758, 1.442695
    %v6779 = vpow.pop %v6778
    %v6780 = vmul.f32 %v6759, 1.442695
    %v6781 = vpow.pop %v6780
    %v6782 = vmul.f32 %v6760, 1.442695
    %v6783 = vpow.pop %v6782
    %v6784 = vmul.f32 %v6761, 1.442695
    %v6785 = vpow.pop %v6784
    %v6786 = vmul.f32 %v6762, 1.442695
    %v6787 = vpow.pop %v6786
    %v6788 = vmul.f32 %v6763, 1.442695
    %v6789 = vpow.pop %v6788
    %v6790 = vmul.f32 %v6764, 1.442695
    %v6791 = vpow.pop %v6790
    %v6792 = vmul.f32 %v6765, 1.442695
    %v6793 = vpow.pop %v6792
    %v6794 = vadd.f32 %v6767, 1.0
    %v6795 = vadd.f32 %v6769, 1.0
    %v6796 = vadd.f32 %v6771, 1.0
    %v6797 = vadd.f32 %v6773, 1.0
    %v6798 = vadd.f32 %v6775, 1.0
    %v6799 = vadd.f32 %v6777, 1.0
    %v6800 = vadd.f32 %v6779, 1.0
    %v6801 = vadd.f32 %v6781, 1.0
    %v6802 = vadd.f32 %v6783, 1.0
    %v6803 = vadd.f32 %v6785, 1.0
    %v6804 = vadd.f32 %v6787, 1.0
    %v6805 = vadd.f32 %v6789, 1.0
    %v6806 = vadd.f32 %v6791, 1.0
    %v6807 = vadd.f32 %v6793, 1.0
    %v6808 = vrcp.pop %v6794
    %v6809 = vmul.f32 1.0, %v6808
    %v6810 = vrcp.pop %v6795
    %v6811 = vmul.f32 1.0, %v6810
    %v6812 = vrcp.pop %v6796
    %v6813 = vmul.f32 1.0, %v6812
    %v6814 = vrcp.pop %v6797
    %v6815 = vmul.f32 1.0, %v6814
    %v6816 = vrcp.pop %v6798
    %v6817 = vmul.f32 1.0, %v6816
    %v6818 = vrcp.pop %v6799
    %v6819 = vmul.f32 1.0, %v6818
    %v6820 = vrcp.pop %v6800
    %v6821 = vmul.f32 1.0, %v6820
    %v6822 = vrcp.pop %v6801
    %v6823 = vmul.f32 1.0, %v6822
    %v6824 = vrcp.pop %v6802
    %v6825 = vmul.f32 1.0, %v6824
    %v6826 = vrcp.pop %v6803
    %v6827 = vmul.f32 1.0, %v6826
    %v6828 = vrcp.pop %v6804
    %v6829 = vmul.f32 1.0, %v6828
    %v6830 = vrcp.pop %v6805
    %v6831 = vmul.f32 1.0, %v6830
    %v6832 = vrcp.pop %v6806
    %v6833 = vmul.f32 1.0, %v6832
    %v6834 = vrcp.pop %v6807
    %v6835 = vmul.f32 1.0, %v6834
    %6836 = vst [vmem:[%s18] sm:$0xff] %v6809
    %6837 = vst [vmem:[%s18 + $0x8] sm:$0xff] %v6811
    %6838 = vst [vmem:[%s18 + $0x10] sm:$0xff] %v6813
    %6839 = vst [vmem:[%s18 + $0x18] sm:$0xff] %v6815
    %6840 = vst [vmem:[%s18 + $0x20] sm:$0xff] %v6817
    %6841 = vst [vmem:[%s18 + $0x28] sm:$0xff] %v6819
    %6842 = vst [vmem:[%s18 + $0x30] sm:$0xff] %v6821
    %6843 = vst [vmem:[%s18 + $0x38] sm:$0xff] %v6823
    %6844 = vst [vmem:[%s18 + $0x40] sm:$0xff] %v6825
    %6845 = vst [vmem:[%s18 + $0x48] sm:$0xff] %v6827
    %6846 = vst [vmem:[%s18 + $0x50] sm:$0xff] %v6829
    %6847 = vst [vmem:[%s18 + $0x58] sm:$0xff] %v6831
    %6848 = vst [vmem:[%s18 + $0x60] sm:$0xff] %v6833
    %6849 = vst [vmem:[%s18 + $0x68] sm:$0xff] %v6835
    // Predicated region
    $region126: #{aes_forward.1} parent=1 // pred_check
      _
    $region127: #{aes_forward.1} parent=1 // pred_check_branch
      %6851 = sbr.rel (0) target = $region129
    $region128: #{aes_forward.1} parent=1 // pred_region
      _
    $region129: #{aes_forward.1} parent=1 // pred_fallthru
      _
    // Predicated region
    $region130: #{aes_forward.1} parent=1 // pred_check
      _
    $region131: #{aes_forward.1} parent=1 // pred_check_branch
      %6853 = sbr.rel (0) target = $region133
    $region132: #{aes_forward.1} parent=1 // pred_region
      _
    $region133: #{aes_forward.1} parent=1 // pred_fallthru
      _
    // Predicated region
    $region134: #{aes_forward.1} parent=1 // pred_check
      _
    $region135: #{aes_forward.1} parent=1 // pred_check_branch
      %6855 = sbr.rel (0) target = $region137
    $region136: #{aes_forward.1} parent=1 // pred_region
      _
    $region137: #{aes_forward.1} parent=1 // pred_fallthru
      _
    // Predicated region
    $region138: #{aes_forward.1} parent=1 // pred_check
      _
    $region139: #{aes_forward.1} parent=1 // pred_check_branch
      %6857 = sbr.rel (0) target = $region141
    $region140: #{aes_forward.1} parent=1 // pred_region
      _
    $region141: #{aes_forward.1} parent=1 // pred_fallthru
      _
    %6858 = vsyncpa [#allocation3], 1
    %6859 = vsyncpa [#allocation5], 1
    %6860 = vsyncpa [#allocation8], 1
    %6861 = vsyncpa [#allocation11], 1
    %6862 = vsyncpa [#allocation14], 1
    %6863 = vsyncpa [#allocation17], 1
    %6864 = vsyncpa [#allocation20], 1
    %6865 = vsyncpa [#allocation23], 1

</llo_original>
